<compile_context>
chip_gen: v6e
topology: v6e:2x2x1
jax: 0.10.0
libtpu: 0.0.40
codegen_flags: <defaults>
</compile_context>

<pallas_src>
import functools
import math

import jax
import jax.numpy as jnp
from jax.experimental import pallas as pl
from jax.experimental.pallas import tpu as pltpu


# ----------------------------- the fused kernel -----------------------------

def _fused_nli_kernel(n_layers, T, *refs):
    """Entire forward pass: all BiLSTM layers + FC head, one invocation.

    Ref layout (positional):
      x0,
      [wih_f (D,4H) bf16, wih_b (D,4H) bf16, whh_blk (2H,8H) bf16,
       b_f (1,4H) f32, b_b (1,4H) f32]  * n_layers,
      w1 (2H,B) bf16, w2 (B,2H) bf16, w3 (2H,O) bf16,
      out (B,O) f32,
      gxf (T*2B,4H) f32, gxb (T*2B,4H) f32, seqf (T*2B,H) bf16, seqb (T*2B,H) bf16
    """
    idx = 0
    x0_ref = refs[idx]; idx += 1
    layers = []
    for _ in range(n_layers):
        layers.append(refs[idx:idx + 5]); idx += 5
    w1_ref, w2_ref, w3_ref = refs[idx:idx + 3]; idx += 3
    out_ref = refs[idx]; idx += 1
    gxf_ref, gxb_ref, seqf_ref, seqb_ref = refs[idx:idx + 4]

    TS2, G = gxf_ref.shape            # (T*2B, 4H)
    H = G // 4
    S2 = TS2 // T                     # 2B rows: [premise | hypothesis]
    B = S2 // 2

    h = None
    for li, (wihf_ref, wihb_ref, whh_ref, bf_ref, bb_ref) in enumerate(layers):
        # ---- layer input (bf16); for li > 0 it is the previous layer's sequence ----
        if li == 0:
            x = x0_ref[...]                                           # (T*S2, E)
        else:
            x = jnp.concatenate([seqf_ref[...], seqb_ref[...]], axis=-1)   # (T*S2, 2H)

        # ---- hoisted input-to-hidden projection for ALL T steps (one dot per dir) ----
        gxf_ref[...] = (jnp.dot(x, wihf_ref[...],
                                preferred_element_type=jnp.float32) + bf_ref[...])
        gxb_ref[...] = (jnp.dot(x, wihb_ref[...],
                                preferred_element_type=jnp.float32) + bb_ref[...])

        whh = whh_ref[...]            # (2H, 8H) block-diagonal [fwd | bwd] columns
        last = (li == n_layers - 1)

        # ---- recurrence: fully unrolled static loop (T small & static) ----
        h = jnp.zeros((S2, 2 * H), jnp.bfloat16)   # lane-packed [h_fwd | h_bwd]
        c_f = jnp.zeros((S2, H), jnp.float32)
        c_b = jnp.zeros((S2, H), jnp.float32)
        for s in range(T):
            rf = s * S2                 # forward direction: input time s
            rb = (T - 1 - s) * S2       # backward direction: input time T-1-s
            # single full-width MXU pass: (S2, 2H) @ (2H, 8H)
            gates = jnp.dot(h, whh, preferred_element_type=jnp.float32)   # (S2, 8H)
            g_f = gates[:, :G] + gxf_ref[rf:rf + S2, :]                   # (S2, 4H)
            g_b = gates[:, G:] + gxb_ref[rb:rb + S2, :]                   # (S2, 4H)
            # full-lane-width nonlinearities, then column selection
            sf, tf = jax.nn.sigmoid(g_f), jnp.tanh(g_f)
            sb, tb = jax.nn.sigmoid(g_b), jnp.tanh(g_b)
            c_f = sf[:, H:2 * H] * c_f + sf[:, :H] * tf[:, 2 * H:3 * H]
            c_b = sb[:, H:2 * H] * c_b + sb[:, :H] * tb[:, 2 * H:3 * H]
            h_f = sf[:, 3 * H:] * jnp.tanh(c_f)
            h_b = sb[:, 3 * H:] * jnp.tanh(c_b)
            h = jnp.concatenate([h_f, h_b], axis=-1).astype(jnp.bfloat16)
            if not last:
                # emit the input-time-aligned sequence for the next layer
                seqf_ref[rf:rf + S2, :] = h_f.astype(jnp.bfloat16)
                seqb_ref[rb:rb + S2, :] = h_b.astype(jnp.bfloat16)

    # ---- fused FC head: relu(fc1(prem)) - relu(fc1(hypo)) -> relu(fc2) -> relu(fc3) ----
    # h rows: [premise (B) | hypothesis (B)], columns: [fwd final | bwd final] = ht[-2:].
    prem = h[:B, :]
    hypo = h[B:, :]
    relu = lambda v: jnp.maximum(v, 0.0)
    p = relu(jnp.dot(prem, w1_ref[...], preferred_element_type=jnp.float32))
    q = relu(jnp.dot(hypo, w1_ref[...], preferred_element_type=jnp.float32))
    e = relu(jnp.dot((p - q).astype(jnp.bfloat16), w2_ref[...],
                     preferred_element_type=jnp.float32))
    out_ref[...] = relu(jnp.dot(e.astype(jnp.bfloat16), w3_ref[...],
                                preferred_element_type=jnp.float32))


# ----------------------------- pallas_call wrapper -----------------------------

def nli_forward_call(x0, layer_params, head_weights, *, T):
    """x0: (T*2B, E) bf16 embedded rows [premise | hypothesis] per time step."""
    TS2 = x0.shape[0]
    S2 = TS2 // T
    B = S2 // 2
    G = layer_params[0][0].shape[1]           # wih_f: (D, 4H)
    H = G // 4
    out_size = head_weights[2].shape[1]
    n_layers = len(layer_params)

    in_arrays = [x0]
    for lp in layer_params:
        in_arrays.extend(lp)
    in_arrays.extend(head_weights)

    kernel = functools.partial(_fused_nli_kernel, n_layers, T)
    return pl.pallas_call(
        kernel,
        out_shape=jax.ShapeDtypeStruct((B, out_size), jnp.float32),
        scratch_shapes=[
            pltpu.VMEM((TS2, G), jnp.float32),       # hoisted fwd input gates
            pltpu.VMEM((TS2, G), jnp.float32),       # hoisted bwd input gates
            pltpu.VMEM((TS2, H), jnp.bfloat16),      # inter-layer sequence (fwd)
            pltpu.VMEM((TS2, H), jnp.bfloat16),      # inter-layer sequence (bwd)
        ],
        compiler_params=pltpu.CompilerParams(vmem_limit_bytes=32 * 1024 * 1024),
    )(*in_arrays)


# ----------------------------- model wrapper -----------------------------

def model_forward(premise, hypothesis, params):
    T, B = premise.shape
    emb = params["embed"]
    prem_e = jnp.take(emb, premise, axis=0)                # (T, B, E)
    hypo_e = jnp.take(emb, hypothesis, axis=0)             # (T, B, E)
    x = jnp.concatenate([prem_e, hypo_e], axis=1)          # (T, 2B, E): [prem | hypo]
    S2 = 2 * B
    x0 = x.reshape(T * S2, -1).astype(jnp.bfloat16)

    H = params["lstm"][0]["w_hh_f"].shape[1]

    layer_params = []
    for p in params["lstm"]:
        # block-diagonal recurrent weight: [h_f | h_b] @ blk -> [gates_f (4H) | gates_b (4H)]
        whh_blk = jnp.zeros((2 * H, 8 * H), jnp.float32)
        whh_blk = whh_blk.at[:H, :4 * H].set(p["w_hh_f"].T)
        whh_blk = whh_blk.at[H:, 4 * H:].set(p["w_hh_b"].T)
        layer_params.append((
            p["w_ih_f"].T.astype(jnp.bfloat16),            # (D, 4H)
            p["w_ih_b"].T.astype(jnp.bfloat16),            # (D, 4H)
            whh_blk.astype(jnp.bfloat16),                  # (2H, 8H)
            p["b_f"],                                      # (1, 4H) f32
            p["b_b"],                                      # (1, 4H) f32
        ))

    head = (params["fc1"].T.astype(jnp.bfloat16),          # (2H, B)
            params["fc2"].T.astype(jnp.bfloat16),          # (B, 2H)
            params["fc3"].T.astype(jnp.bfloat16))          # (2H, O)

    return nli_forward_call(x0, layer_params, head, T=T)


# ----------------------------- deterministic params -----------------------------

def init_params(key, *, input_size, output_size, embed_size, hidden_size,
                batch_size, n_layers):
    keys = iter(jax.random.split(key, 8 + 8 * n_layers))
    params = {}
    params["embed"] = jax.random.normal(next(keys), (input_size, embed_size),
                                        jnp.float32)
    k = 1.0 / math.sqrt(hidden_size)
    lstm = []
    for layer in range(n_layers):
        d_in = embed_size if layer == 0 else 2 * hidden_size
        def u(shape):
            return jax.random.uniform(next(keys), shape, jnp.float32, -k, k)
        layer_p = {
            "w_ih_f": u((4 * hidden_size, d_in)),
            "w_hh_f": u((4 * hidden_size, hidden_size)),
            "b_f": u((1, 4 * hidden_size)) + u((1, 4 * hidden_size)),  # b_ih + b_hh
            "w_ih_b": u((4 * hidden_size, d_in)),
            "w_hh_b": u((4 * hidden_size, hidden_size)),
            "b_b": u((1, 4 * hidden_size)) + u((1, 4 * hidden_size)),
        }
        lstm.append(layer_p)
    params["lstm"] = lstm
    k1 = 1.0 / math.sqrt(2 * hidden_size)
    k2 = 1.0 / math.sqrt(batch_size)
    params["fc1"] = jax.random.uniform(next(keys), (batch_size, 2 * hidden_size),
                                       jnp.float32, -k1, k1)
    params["fc2"] = jax.random.uniform(next(keys), (2 * hidden_size, batch_size),
                                       jnp.float32, -k2, k2)
    params["fc3"] = jax.random.uniform(next(keys), (output_size, 2 * hidden_size),
                                       jnp.float32, -k1, k1)
    return params


# ----------------------------- pure-JAX reference -----------------------------

def _ref_lstm_direction(x, w_ih, w_hh, b, reverse):
    T, B, _ = x.shape
    H = w_hh.shape[1]

    def step(carry, x_t):
        h, c = carry
        gates = jnp.dot(x_t, w_ih.T) + jnp.dot(h, w_hh.T) + b[0]
        i, f, g, o = jnp.split(gates, 4, axis=-1)
        i, f, o = jax.nn.sigmoid(i), jax.nn.sigmoid(f), jax.nn.sigmoid(o)
        g = jnp.tanh(g)
        c = f * c + i * g
        h = o * jnp.tanh(c)
        return (h, c), h

    xs = x[::-1] if reverse else x
    init = (jnp.zeros((B, H), jnp.float32), jnp.zeros((B, H), jnp.float32))
    _, outs = jax.lax.scan(step, init, xs)
    return outs[::-1] if reverse else outs


def _ref_forward(premise, hypothesis, params):
    def encode(tokens):
        inp = jnp.take(params["embed"], tokens, axis=0)
        out_f = out_b = None
        for p in params["lstm"]:
            out_f = _ref_lstm_direction(inp, p["w_ih_f"], p["w_hh_f"], p["b_f"], False)
            out_b = _ref_lstm_direction(inp, p["w_ih_b"], p["w_hh_b"], p["b_b"], True)
            inp = jnp.concatenate([out_f, out_b], axis=-1)
        return jnp.concatenate([out_f[-1], out_b[0]], axis=-1)

    prem = encode(premise)
    hypo = encode(hypothesis)
    relu = lambda v: jnp.maximum(v, 0.0)
    p = relu(jnp.dot(prem, params["fc1"].T))
    h = relu(jnp.dot(hypo, params["fc1"].T))
    d = p - h
    e = relu(jnp.dot(d, params["fc2"].T))
    return relu(jnp.dot(e, params["fc3"].T))


# ----------------------------- main -----------------------------

if __name__ == "__main__":
    # Small shapes consistent with the module's forward.
    VOCAB = 100        # input_size
    OUTPUT = 3         # output_size
    EMBED = 16         # embed_size
    HIDDEN = 32        # hidden_size  (4H = 128 -> lane-dense gate axis, 8H = 256)
    BATCH = 8          # batch_size
    SEQ = 8            # sequence length
    N_LAYERS = 2       # n_layers  (n_cells only sizes the zero h0/c0)

    key = jax.random.PRNGKey(0)
    kp, kh, kw = jax.random.split(key, 3)
    premise = jax.random.randint(kp, (SEQ, BATCH), 0, VOCAB, dtype=jnp.int32)
    hypothesis = jax.random.randint(kh, (SEQ, BATCH), 0, VOCAB, dtype=jnp.int32)

    params = init_params(kw, input_size=VOCAB, output_size=OUTPUT,
                         embed_size=EMBED, hidden_size=HIDDEN,
                         batch_size=BATCH, n_layers=N_LAYERS)

    fwd = jax.jit(model_forward)
    out = jax.block_until_ready(fwd(premise, hypothesis, params))
    assert out.shape == (BATCH, OUTPUT), out.shape

    ref = jax.block_until_ready(_ref_forward(premise, hypothesis, params))
    assert jnp.allclose(out, ref, atol=2e-2, rtol=2e-2), (
        "mismatch vs reference", float(jnp.max(jnp.abs(out - ref))))

    print("KERNEL_OK")
</pallas_src>

<mosaic_0001>
module attributes {stable_mosaic.version = 11 : i64} {
  func.func @_fused_nli_kernel(%arg0: memref<128x16xbf16, #tpu.memory_space<vmem>>, %arg1: memref<16x128xbf16, #tpu.memory_space<vmem>>, %arg2: memref<16x128xbf16, #tpu.memory_space<vmem>>, %arg3: memref<64x256xbf16, #tpu.memory_space<vmem>>, %arg4: memref<1x128xf32, #tpu.memory_space<vmem>>, %arg5: memref<1x128xf32, #tpu.memory_space<vmem>>, %arg6: memref<64x128xbf16, #tpu.memory_space<vmem>>, %arg7: memref<64x128xbf16, #tpu.memory_space<vmem>>, %arg8: memref<64x256xbf16, #tpu.memory_space<vmem>>, %arg9: memref<1x128xf32, #tpu.memory_space<vmem>>, %arg10: memref<1x128xf32, #tpu.memory_space<vmem>>, %arg11: memref<64x8xbf16, #tpu.memory_space<vmem>>, %arg12: memref<8x64xbf16, #tpu.memory_space<vmem>>, %arg13: memref<64x3xbf16, #tpu.memory_space<vmem>>, %arg14: memref<8x3xf32, #tpu.memory_space<vmem>>, %arg15: memref<128x128xf32, #tpu.memory_space<vmem>>, %arg16: memref<128x128xf32, #tpu.memory_space<vmem>>, %arg17: memref<128x32xbf16, #tpu.memory_space<vmem>>, %arg18: memref<128x32xbf16, #tpu.memory_space<vmem>>) attributes {dimension_semantics = [], scalar_prefetch = 0 : i64, scratch_operands = 4 : i64, tpu.core_type = #tpu.core_type<tc>} {
    %c0 = arith.constant 0 : index
    %c0_0 = arith.constant 0 : index
    %0 = vector.load %arg0[%c0, %c0_0] : memref<128x16xbf16, #tpu.memory_space<vmem>>, vector<128x16xbf16>
    %c0_1 = arith.constant 0 : index
    %c0_2 = arith.constant 0 : index
    %1 = vector.load %arg1[%c0_1, %c0_2] : memref<16x128xbf16, #tpu.memory_space<vmem>>, vector<16x128xbf16>
    %cst = arith.constant dense<0.000000e+00> : vector<128x128xf32>
    %2 = tpu.matmul %0, %1, %cst {dimension_numbers = #tpu.dot_dimension_numbers<[1], [0], [0], [1], [0, 0, 1, 1], [], []>} : vector<128x16xbf16>, vector<16x128xbf16>, vector<128x128xf32> -> vector<128x128xf32>
    %c0_3 = arith.constant 0 : index
    %c0_4 = arith.constant 0 : index
    %3 = vector.load %arg4[%c0_3, %c0_4] : memref<1x128xf32, #tpu.memory_space<vmem>>, vector<1x128xf32>
    %4 = vector.broadcast %3 : vector<1x128xf32> to vector<128x128xf32>
    %5 = arith.addf %2, %4 : vector<128x128xf32>
    %c0_5 = arith.constant 0 : index
    %c0_6 = arith.constant 0 : index
    %6 = vector.load %arg15[%c0_5, %c0_6] : memref<128x128xf32, #tpu.memory_space<vmem>>, vector<128x128xf32>
    tpu.vector_store %arg15[%c0_5, %c0_6], %5 {strides = array<i32>} : memref<128x128xf32, #tpu.memory_space<vmem>>, vector<128x128xf32>,
    %c0_7 = arith.constant 0 : index
    %c0_8 = arith.constant 0 : index
    %7 = vector.load %arg2[%c0_7, %c0_8] : memref<16x128xbf16, #tpu.memory_space<vmem>>, vector<16x128xbf16>
    %cst_9 = arith.constant dense<0.000000e+00> : vector<128x128xf32>
    %8 = tpu.matmul %0, %7, %cst_9 {dimension_numbers = #tpu.dot_dimension_numbers<[1], [0], [0], [1], [0, 0, 1, 1], [], []>} : vector<128x16xbf16>, vector<16x128xbf16>, vector<128x128xf32> -> vector<128x128xf32>
    %c0_10 = arith.constant 0 : index
    %c0_11 = arith.constant 0 : index
    %9 = vector.load %arg5[%c0_10, %c0_11] : memref<1x128xf32, #tpu.memory_space<vmem>>, vector<1x128xf32>
    %10 = vector.broadcast %9 : vector<1x128xf32> to vector<128x128xf32>
    %11 = arith.addf %8, %10 : vector<128x128xf32>
    %c0_12 = arith.constant 0 : index
    %c0_13 = arith.constant 0 : index
    %12 = vector.load %arg16[%c0_12, %c0_13] : memref<128x128xf32, #tpu.memory_space<vmem>>, vector<128x128xf32>
    tpu.vector_store %arg16[%c0_12, %c0_13], %11 {strides = array<i32>} : memref<128x128xf32, #tpu.memory_space<vmem>>, vector<128x128xf32>,
    %c0_14 = arith.constant 0 : index
    %c0_15 = arith.constant 0 : index
    %13 = vector.load %arg3[%c0_14, %c0_15] : memref<64x256xbf16, #tpu.memory_space<vmem>>, vector<64x256xbf16>
    %cst_16 = arith.constant 0.000000e+00 : bf16
    %14 = vector.broadcast %cst_16 : bf16 to vector<16x64xbf16>
    %cst_17 = arith.constant 0.000000e+00 : f32
    %15 = vector.broadcast %cst_17 : f32 to vector<16x32xf32>
    %cst_18 = arith.constant 0.000000e+00 : f32
    %16 = vector.broadcast %cst_18 : f32 to vector<16x32xf32>
    %cst_19 = arith.constant dense<0.000000e+00> : vector<16x256xf32>
    %17 = tpu.matmul %14, %13, %cst_19 {dimension_numbers = #tpu.dot_dimension_numbers<[1], [0], [0], [1], [0, 0, 1, 1], [], []>} : vector<16x64xbf16>, vector<64x256xbf16>, vector<16x256xf32> -> vector<16x256xf32>
    %18 = vector.extract_strided_slice %17 {offsets = [0, 0], sizes = [16, 128], strides = [1, 1]} : vector<16x256xf32> to vector<16x128xf32>
    %c0_20 = arith.constant 0 : index
    %c0_21 = arith.constant 0 : index
    %19 = vector.load %arg15[%c0_20, %c0_21] : memref<128x128xf32, #tpu.memory_space<vmem>>, vector<16x128xf32>
    %20 = arith.addf %18, %19 : vector<16x128xf32>
    %21 = vector.extract_strided_slice %17 {offsets = [0, 128], sizes = [16, 128], strides = [1, 1]} : vector<16x256xf32> to vector<16x128xf32>
    %c112 = arith.constant 112 : index
    %c0_22 = arith.constant 0 : index
    %22 = vector.load %arg16[%c112, %c0_22] : memref<128x128xf32, #tpu.memory_space<vmem>>, vector<16x128xf32>
    %23 = arith.addf %21, %22 : vector<16x128xf32>
    %24 = arith.negf %20 : vector<16x128xf32>
    %25 = math.exp %24 : vector<16x128xf32>
    %cst_23 = arith.constant 1.000000e+00 : f32
    %26 = vector.broadcast %cst_23 : f32 to vector<16x128xf32>
    %27 = arith.addf %26, %25 : vector<16x128xf32>
    %28 = arith.divf %26, %27 : vector<16x128xf32>
    %29 = math.tanh %20 : vector<16x128xf32>
    %30 = arith.negf %23 : vector<16x128xf32>
    %31 = math.exp %30 : vector<16x128xf32>
    %cst_24 = arith.constant 1.000000e+00 : f32
    %32 = vector.broadcast %cst_24 : f32 to vector<16x128xf32>
    %33 = arith.addf %32, %31 : vector<16x128xf32>
    %34 = arith.divf %32, %33 : vector<16x128xf32>
    %35 = math.tanh %23 : vector<16x128xf32>
    %36 = vector.extract_strided_slice %28 {offsets = [0, 32], sizes = [16, 32], strides = [1, 1]} : vector<16x128xf32> to vector<16x32xf32>
    %37 = arith.mulf %36, %15 : vector<16x32xf32>
    %38 = vector.extract_strided_slice %28 {offsets = [0, 0], sizes = [16, 32], strides = [1, 1]} : vector<16x128xf32> to vector<16x32xf32>
    %39 = vector.extract_strided_slice %29 {offsets = [0, 64], sizes = [16, 32], strides = [1, 1]} : vector<16x128xf32> to vector<16x32xf32>
    %40 = arith.mulf %38, %39 : vector<16x32xf32>
    %41 = arith.addf %37, %40 : vector<16x32xf32>
    %42 = vector.extract_strided_slice %34 {offsets = [0, 32], sizes = [16, 32], strides = [1, 1]} : vector<16x128xf32> to vector<16x32xf32>
    %43 = arith.mulf %42, %16 : vector<16x32xf32>
    %44 = vector.extract_strided_slice %34 {offsets = [0, 0], sizes = [16, 32], strides = [1, 1]} : vector<16x128xf32> to vector<16x32xf32>
    %45 = vector.extract_strided_slice %35 {offsets = [0, 64], sizes = [16, 32], strides = [1, 1]} : vector<16x128xf32> to vector<16x32xf32>
    %46 = arith.mulf %44, %45 : vector<16x32xf32>
    %47 = arith.addf %43, %46 : vector<16x32xf32>
    %48 = vector.extract_strided_slice %28 {offsets = [0, 96], sizes = [16, 32], strides = [1, 1]} : vector<16x128xf32> to vector<16x32xf32>
    %49 = math.tanh %41 : vector<16x32xf32>
    %50 = arith.mulf %48, %49 : vector<16x32xf32>
    %51 = vector.extract_strided_slice %34 {offsets = [0, 96], sizes = [16, 32], strides = [1, 1]} : vector<16x128xf32> to vector<16x32xf32>
    %52 = math.tanh %47 : vector<16x32xf32>
    %53 = arith.mulf %51, %52 : vector<16x32xf32>
    %54 = tpu.concatenate %50, %53 in 1 : vector<16x32xf32>, vector<16x32xf32> -> vector<16x64xf32>
    %55 = arith.truncf %54 : vector<16x64xf32> to vector<16x64xbf16>
    %56 = arith.truncf %50 : vector<16x32xf32> to vector<16x32xbf16>
    %c0_25 = arith.constant 0 : index
    %c0_26 = arith.constant 0 : index
    %57 = vector.load %arg17[%c0_25, %c0_26] : memref<128x32xbf16, #tpu.memory_space<vmem>>, vector<16x32xbf16>
    tpu.vector_store %arg17[%c0_25, %c0_26], %56 {strides = array<i32>} : memref<128x32xbf16, #tpu.memory_space<vmem>>, vector<16x32xbf16>,
    %58 = arith.truncf %53 : vector<16x32xf32> to vector<16x32xbf16>
    %c112_27 = arith.constant 112 : index
    %c0_28 = arith.constant 0 : index
    %59 = vector.load %arg18[%c112_27, %c0_28] : memref<128x32xbf16, #tpu.memory_space<vmem>>, vector<16x32xbf16>
    tpu.vector_store %arg18[%c112_27, %c0_28], %58 {strides = array<i32>} : memref<128x32xbf16, #tpu.memory_space<vmem>>, vector<16x32xbf16>,
    %cst_29 = arith.constant dense<0.000000e+00> : vector<16x256xf32>
    %60 = tpu.matmul %55, %13, %cst_29 {dimension_numbers = #tpu.dot_dimension_numbers<[1], [0], [0], [1], [0, 0, 1, 1], [], []>} : vector<16x64xbf16>, vector<64x256xbf16>, vector<16x256xf32> -> vector<16x256xf32>
    %61 = vector.extract_strided_slice %60 {offsets = [0, 0], sizes = [16, 128], strides = [1, 1]} : vector<16x256xf32> to vector<16x128xf32>
    %c16 = arith.constant 16 : index
    %c0_30 = arith.constant 0 : index
    %62 = vector.load %arg15[%c16, %c0_30] : memref<128x128xf32, #tpu.memory_space<vmem>>, vector<16x128xf32>
    %63 = arith.addf %61, %62 : vector<16x128xf32>
    %64 = vector.extract_strided_slice %60 {offsets = [0, 128], sizes = [16, 128], strides = [1, 1]} : vector<16x256xf32> to vector<16x128xf32>
    %c96 = arith.constant 96 : index
    %c0_31 = arith.constant 0 : index
    %65 = vector.load %arg16[%c96, %c0_31] : memref<128x128xf32, #tpu.memory_space<vmem>>, vector<16x128xf32>
    %66 = arith.addf %64, %65 : vector<16x128xf32>
    %67 = arith.negf %63 : vector<16x128xf32>
    %68 = math.exp %67 : vector<16x128xf32>
    %cst_32 = arith.constant 1.000000e+00 : f32
    %69 = vector.broadcast %cst_32 : f32 to vector<16x128xf32>
    %70 = arith.addf %69, %68 : vector<16x128xf32>
    %71 = arith.divf %69, %70 : vector<16x128xf32>
    %72 = math.tanh %63 : vector<16x128xf32>
    %73 = arith.negf %66 : vector<16x128xf32>
    %74 = math.exp %73 : vector<16x128xf32>
    %cst_33 = arith.constant 1.000000e+00 : f32
    %75 = vector.broadcast %cst_33 : f32 to vector<16x128xf32>
    %76 = arith.addf %75, %74 : vector<16x128xf32>
    %77 = arith.divf %75, %76 : vector<16x128xf32>
    %78 = math.tanh %66 : vector<16x128xf32>
    %79 = vector.extract_strided_slice %71 {offsets = [0, 32], sizes = [16, 32], strides = [1, 1]} : vector<16x128xf32> to vector<16x32xf32>
    %80 = arith.mulf %79, %41 : vector<16x32xf32>
    %81 = vector.extract_strided_slice %71 {offsets = [0, 0], sizes = [16, 32], strides = [1, 1]} : vector<16x128xf32> to vector<16x32xf32>
    %82 = vector.extract_strided_slice %72 {offsets = [0, 64], sizes = [16, 32], strides = [1, 1]} : vector<16x128xf32> to vector<16x32xf32>
    %83 = arith.mulf %81, %82 : vector<16x32xf32>
    %84 = arith.addf %80, %83 : vector<16x32xf32>
    %85 = vector.extract_strided_slice %77 {offsets = [0, 32], sizes = [16, 32], strides = [1, 1]} : vector<16x128xf32> to vector<16x32xf32>
    %86 = arith.mulf %85, %47 : vector<16x32xf32>
    %87 = vector.extract_strided_slice %77 {offsets = [0, 0], sizes = [16, 32], strides = [1, 1]} : vector<16x128xf32> to vector<16x32xf32>
    %88 = vector.extract_strided_slice %78 {offsets = [0, 64], sizes = [16, 32], strides = [1, 1]} : vector<16x128xf32> to vector<16x32xf32>
    %89 = arith.mulf %87, %88 : vector<16x32xf32>
    %90 = arith.addf %86, %89 : vector<16x32xf32>
    %91 = vector.extract_strided_slice %71 {offsets = [0, 96], sizes = [16, 32], strides = [1, 1]} : vector<16x128xf32> to vector<16x32xf32>
    %92 = math.tanh %84 : vector<16x32xf32>
    %93 = arith.mulf %91, %92 : vector<16x32xf32>
    %94 = vector.extract_strided_slice %77 {offsets = [0, 96], sizes = [16, 32], strides = [1, 1]} : vector<16x128xf32> to vector<16x32xf32>
    %95 = math.tanh %90 : vector<16x32xf32>
    %96 = arith.mulf %94, %95 : vector<16x32xf32>
    %97 = tpu.concatenate %93, %96 in 1 : vector<16x32xf32>, vector<16x32xf32> -> vector<16x64xf32>
    %98 = arith.truncf %97 : vector<16x64xf32> to vector<16x64xbf16>
    %99 = arith.truncf %93 : vector<16x32xf32> to vector<16x32xbf16>
    %c16_34 = arith.constant 16 : index
    %c0_35 = arith.constant 0 : index
    %100 = vector.load %arg17[%c16_34, %c0_35] : memref<128x32xbf16, #tpu.memory_space<vmem>>, vector<16x32xbf16>
    tpu.vector_store %arg17[%c16_34, %c0_35], %99 {strides = array<i32>} : memref<128x32xbf16, #tpu.memory_space<vmem>>, vector<16x32xbf16>,
    %101 = arith.truncf %96 : vector<16x32xf32> to vector<16x32xbf16>
    %c96_36 = arith.constant 96 : index
    %c0_37 = arith.constant 0 : index
    %102 = vector.load %arg18[%c96_36, %c0_37] : memref<128x32xbf16, #tpu.memory_space<vmem>>, vector<16x32xbf16>
    tpu.vector_store %arg18[%c96_36, %c0_37], %101 {strides = array<i32>} : memref<128x32xbf16, #tpu.memory_space<vmem>>, vector<16x32xbf16>,
    %cst_38 = arith.constant dense<0.000000e+00> : vector<16x256xf32>
    %103 = tpu.matmul %98, %13, %cst_38 {dimension_numbers = #tpu.dot_dimension_numbers<[1], [0], [0], [1], [0, 0, 1, 1], [], []>} : vector<16x64xbf16>, vector<64x256xbf16>, vector<16x256xf32> -> vector<16x256xf32>
    %104 = vector.extract_strided_slice %103 {offsets = [0, 0], sizes = [16, 128], strides = [1, 1]} : vector<16x256xf32> to vector<16x128xf32>
    %c32 = arith.constant 32 : index
    %c0_39 = arith.constant 0 : index
    %105 = vector.load %arg15[%c32, %c0_39] : memref<128x128xf32, #tpu.memory_space<vmem>>, vector<16x128xf32>
    %106 = arith.addf %104, %105 : vector<16x128xf32>
    %107 = vector.extract_strided_slice %103 {offsets = [0, 128], sizes = [16, 128], strides = [1, 1]} : vector<16x256xf32> to vector<16x128xf32>
    %c80 = arith.constant 80 : index
    %c0_40 = arith.constant 0 : index
    %108 = vector.load %arg16[%c80, %c0_40] : memref<128x128xf32, #tpu.memory_space<vmem>>, vector<16x128xf32>
    %109 = arith.addf %107, %108 : vector<16x128xf32>
    %110 = arith.negf %106 : vector<16x128xf32>
    %111 = math.exp %110 : vector<16x128xf32>
    %cst_41 = arith.constant 1.000000e+00 : f32
    %112 = vector.broadcast %cst_41 : f32 to vector<16x128xf32>
    %113 = arith.addf %112, %111 : vector<16x128xf32>
    %114 = arith.divf %112, %113 : vector<16x128xf32>
    %115 = math.tanh %106 : vector<16x128xf32>
    %116 = arith.negf %109 : vector<16x128xf32>
    %117 = math.exp %116 : vector<16x128xf32>
    %cst_42 = arith.constant 1.000000e+00 : f32
    %118 = vector.broadcast %cst_42 : f32 to vector<16x128xf32>
    %119 = arith.addf %118, %117 : vector<16x128xf32>
    %120 = arith.divf %118, %119 : vector<16x128xf32>
    %121 = math.tanh %109 : vector<16x128xf32>
    %122 = vector.extract_strided_slice %114 {offsets = [0, 32], sizes = [16, 32], strides = [1, 1]} : vector<16x128xf32> to vector<16x32xf32>
    %123 = arith.mulf %122, %84 : vector<16x32xf32>
    %124 = vector.extract_strided_slice %114 {offsets = [0, 0], sizes = [16, 32], strides = [1, 1]} : vector<16x128xf32> to vector<16x32xf32>
    %125 = vector.extract_strided_slice %115 {offsets = [0, 64], sizes = [16, 32], strides = [1, 1]} : vector<16x128xf32> to vector<16x32xf32>
    %126 = arith.mulf %124, %125 : vector<16x32xf32>
    %127 = arith.addf %123, %126 : vector<16x32xf32>
    %128 = vector.extract_strided_slice %120 {offsets = [0, 32], sizes = [16, 32], strides = [1, 1]} : vector<16x128xf32> to vector<16x32xf32>
    %129 = arith.mulf %128, %90 : vector<16x32xf32>
    %130 = vector.extract_strided_slice %120 {offsets = [0, 0], sizes = [16, 32], strides = [1, 1]} : vector<16x128xf32> to vector<16x32xf32>
    %131 = vector.extract_strided_slice %121 {offsets = [0, 64], sizes = [16, 32], strides = [1, 1]} : vector<16x128xf32> to vector<16x32xf32>
    %132 = arith.mulf %130, %131 : vector<16x32xf32>
    %133 = arith.addf %129, %132 : vector<16x32xf32>
    %134 = vector.extract_strided_slice %114 {offsets = [0, 96], sizes = [16, 32], strides = [1, 1]} : vector<16x128xf32> to vector<16x32xf32>
    %135 = math.tanh %127 : vector<16x32xf32>
    %136 = arith.mulf %134, %135 : vector<16x32xf32>
    %137 = vector.extract_strided_slice %120 {offsets = [0, 96], sizes = [16, 32], strides = [1, 1]} : vector<16x128xf32> to vector<16x32xf32>
    %138 = math.tanh %133 : vector<16x32xf32>
    %139 = arith.mulf %137, %138 : vector<16x32xf32>
    %140 = tpu.concatenate %136, %139 in 1 : vector<16x32xf32>, vector<16x32xf32> -> vector<16x64xf32>
    %141 = arith.truncf %140 : vector<16x64xf32> to vector<16x64xbf16>
    %142 = arith.truncf %136 : vector<16x32xf32> to vector<16x32xbf16>
    %c32_43 = arith.constant 32 : index
    %c0_44 = arith.constant 0 : index
    %143 = vector.load %arg17[%c32_43, %c0_44] : memref<128x32xbf16, #tpu.memory_space<vmem>>, vector<16x32xbf16>
    tpu.vector_store %arg17[%c32_43, %c0_44], %142 {strides = array<i32>} : memref<128x32xbf16, #tpu.memory_space<vmem>>, vector<16x32xbf16>,
    %144 = arith.truncf %139 : vector<16x32xf32> to vector<16x32xbf16>
    %c80_45 = arith.constant 80 : index
    %c0_46 = arith.constant 0 : index
    %145 = vector.load %arg18[%c80_45, %c0_46] : memref<128x32xbf16, #tpu.memory_space<vmem>>, vector<16x32xbf16>
    tpu.vector_store %arg18[%c80_45, %c0_46], %144 {strides = array<i32>} : memref<128x32xbf16, #tpu.memory_space<vmem>>, vector<16x32xbf16>,
    %cst_47 = arith.constant dense<0.000000e+00> : vector<16x256xf32>
    %146 = tpu.matmul %141, %13, %cst_47 {dimension_numbers = #tpu.dot_dimension_numbers<[1], [0], [0], [1], [0, 0, 1, 1], [], []>} : vector<16x64xbf16>, vector<64x256xbf16>, vector<16x256xf32> -> vector<16x256xf32>
    %147 = vector.extract_strided_slice %146 {offsets = [0, 0], sizes = [16, 128], strides = [1, 1]} : vector<16x256xf32> to vector<16x128xf32>
    %c48 = arith.constant 48 : index
    %c0_48 = arith.constant 0 : index
    %148 = vector.load %arg15[%c48, %c0_48] : memref<128x128xf32, #tpu.memory_space<vmem>>, vector<16x128xf32>
    %149 = arith.addf %147, %148 : vector<16x128xf32>
    %150 = vector.extract_strided_slice %146 {offsets = [0, 128], sizes = [16, 128], strides = [1, 1]} : vector<16x256xf32> to vector<16x128xf32>
    %c64 = arith.constant 64 : index
    %c0_49 = arith.constant 0 : index
    %151 = vector.load %arg16[%c64, %c0_49] : memref<128x128xf32, #tpu.memory_space<vmem>>, vector<16x128xf32>
    %152 = arith.addf %150, %151 : vector<16x128xf32>
    %153 = arith.negf %149 : vector<16x128xf32>
    %154 = math.exp %153 : vector<16x128xf32>
    %cst_50 = arith.constant 1.000000e+00 : f32
    %155 = vector.broadcast %cst_50 : f32 to vector<16x128xf32>
    %156 = arith.addf %155, %154 : vector<16x128xf32>
    %157 = arith.divf %155, %156 : vector<16x128xf32>
    %158 = math.tanh %149 : vector<16x128xf32>
    %159 = arith.negf %152 : vector<16x128xf32>
    %160 = math.exp %159 : vector<16x128xf32>
    %cst_51 = arith.constant 1.000000e+00 : f32
    %161 = vector.broadcast %cst_51 : f32 to vector<16x128xf32>
    %162 = arith.addf %161, %160 : vector<16x128xf32>
    %163 = arith.divf %161, %162 : vector<16x128xf32>
    %164 = math.tanh %152 : vector<16x128xf32>
    %165 = vector.extract_strided_slice %157 {offsets = [0, 32], sizes = [16, 32], strides = [1, 1]} : vector<16x128xf32> to vector<16x32xf32>
    %166 = arith.mulf %165, %127 : vector<16x32xf32>
    %167 = vector.extract_strided_slice %157 {offsets = [0, 0], sizes = [16, 32], strides = [1, 1]} : vector<16x128xf32> to vector<16x32xf32>
    %168 = vector.extract_strided_slice %158 {offsets = [0, 64], sizes = [16, 32], strides = [1, 1]} : vector<16x128xf32> to vector<16x32xf32>
    %169 = arith.mulf %167, %168 : vector<16x32xf32>
    %170 = arith.addf %166, %169 : vector<16x32xf32>
    %171 = vector.extract_strided_slice %163 {offsets = [0, 32], sizes = [16, 32], strides = [1, 1]} : vector<16x128xf32> to vector<16x32xf32>
    %172 = arith.mulf %171, %133 : vector<16x32xf32>
    %173 = vector.extract_strided_slice %163 {offsets = [0, 0], sizes = [16, 32], strides = [1, 1]} : vector<16x128xf32> to vector<16x32xf32>
    %174 = vector.extract_strided_slice %164 {offsets = [0, 64], sizes = [16, 32], strides = [1, 1]} : vector<16x128xf32> to vector<16x32xf32>
    %175 = arith.mulf %173, %174 : vector<16x32xf32>
    %176 = arith.addf %172, %175 : vector<16x32xf32>
    %177 = vector.extract_strided_slice %157 {offsets = [0, 96], sizes = [16, 32], strides = [1, 1]} : vector<16x128xf32> to vector<16x32xf32>
    %178 = math.tanh %170 : vector<16x32xf32>
    %179 = arith.mulf %177, %178 : vector<16x32xf32>
    %180 = vector.extract_strided_slice %163 {offsets = [0, 96], sizes = [16, 32], strides = [1, 1]} : vector<16x128xf32> to vector<16x32xf32>
    %181 = math.tanh %176 : vector<16x32xf32>
    %182 = arith.mulf %180, %181 : vector<16x32xf32>
    %183 = tpu.concatenate %179, %182 in 1 : vector<16x32xf32>, vector<16x32xf32> -> vector<16x64xf32>
    %184 = arith.truncf %183 : vector<16x64xf32> to vector<16x64xbf16>
    %185 = arith.truncf %179 : vector<16x32xf32> to vector<16x32xbf16>
    %c48_52 = arith.constant 48 : index
    %c0_53 = arith.constant 0 : index
    %186 = vector.load %arg17[%c48_52, %c0_53] : memref<128x32xbf16, #tpu.memory_space<vmem>>, vector<16x32xbf16>
    tpu.vector_store %arg17[%c48_52, %c0_53], %185 {strides = array<i32>} : memref<128x32xbf16, #tpu.memory_space<vmem>>, vector<16x32xbf16>,
    %187 = arith.truncf %182 : vector<16x32xf32> to vector<16x32xbf16>
    %c64_54 = arith.constant 64 : index
    %c0_55 = arith.constant 0 : index
    %188 = vector.load %arg18[%c64_54, %c0_55] : memref<128x32xbf16, #tpu.memory_space<vmem>>, vector<16x32xbf16>
    tpu.vector_store %arg18[%c64_54, %c0_55], %187 {strides = array<i32>} : memref<128x32xbf16, #tpu.memory_space<vmem>>, vector<16x32xbf16>,
    %cst_56 = arith.constant dense<0.000000e+00> : vector<16x256xf32>
    %189 = tpu.matmul %184, %13, %cst_56 {dimension_numbers = #tpu.dot_dimension_numbers<[1], [0], [0], [1], [0, 0, 1, 1], [], []>} : vector<16x64xbf16>, vector<64x256xbf16>, vector<16x256xf32> -> vector<16x256xf32>
    %190 = vector.extract_strided_slice %189 {offsets = [0, 0], sizes = [16, 128], strides = [1, 1]} : vector<16x256xf32> to vector<16x128xf32>
    %c64_57 = arith.constant 64 : index
    %c0_58 = arith.constant 0 : index
    %191 = vector.load %arg15[%c64_57, %c0_58] : memref<128x128xf32, #tpu.memory_space<vmem>>, vector<16x128xf32>
    %192 = arith.addf %190, %191 : vector<16x128xf32>
    %193 = vector.extract_strided_slice %189 {offsets = [0, 128], sizes = [16, 128], strides = [1, 1]} : vector<16x256xf32> to vector<16x128xf32>
    %c48_59 = arith.constant 48 : index
    %c0_60 = arith.constant 0 : index
    %194 = vector.load %arg16[%c48_59, %c0_60] : memref<128x128xf32, #tpu.memory_space<vmem>>, vector<16x128xf32>
    %195 = arith.addf %193, %194 : vector<16x128xf32>
    %196 = arith.negf %192 : vector<16x128xf32>
    %197 = math.exp %196 : vector<16x128xf32>
    %cst_61 = arith.constant 1.000000e+00 : f32
    %198 = vector.broadcast %cst_61 : f32 to vector<16x128xf32>
    %199 = arith.addf %198, %197 : vector<16x128xf32>
    %200 = arith.divf %198, %199 : vector<16x128xf32>
    %201 = math.tanh %192 : vector<16x128xf32>
    %202 = arith.negf %195 : vector<16x128xf32>
    %203 = math.exp %202 : vector<16x128xf32>
    %cst_62 = arith.constant 1.000000e+00 : f32
    %204 = vector.broadcast %cst_62 : f32 to vector<16x128xf32>
    %205 = arith.addf %204, %203 : vector<16x128xf32>
    %206 = arith.divf %204, %205 : vector<16x128xf32>
    %207 = math.tanh %195 : vector<16x128xf32>
    %208 = vector.extract_strided_slice %200 {offsets = [0, 32], sizes = [16, 32], strides = [1, 1]} : vector<16x128xf32> to vector<16x32xf32>
    %209 = arith.mulf %208, %170 : vector<16x32xf32>
    %210 = vector.extract_strided_slice %200 {offsets = [0, 0], sizes = [16, 32], strides = [1, 1]} : vector<16x128xf32> to vector<16x32xf32>
    %211 = vector.extract_strided_slice %201 {offsets = [0, 64], sizes = [16, 32], strides = [1, 1]} : vector<16x128xf32> to vector<16x32xf32>
    %212 = arith.mulf %210, %211 : vector<16x32xf32>
    %213 = arith.addf %209, %212 : vector<16x32xf32>
    %214 = vector.extract_strided_slice %206 {offsets = [0, 32], sizes = [16, 32], strides = [1, 1]} : vector<16x128xf32> to vector<16x32xf32>
    %215 = arith.mulf %214, %176 : vector<16x32xf32>
    %216 = vector.extract_strided_slice %206 {offsets = [0, 0], sizes = [16, 32], strides = [1, 1]} : vector<16x128xf32> to vector<16x32xf32>
    %217 = vector.extract_strided_slice %207 {offsets = [0, 64], sizes = [16, 32], strides = [1, 1]} : vector<16x128xf32> to vector<16x32xf32>
    %218 = arith.mulf %216, %217 : vector<16x32xf32>
    %219 = arith.addf %215, %218 : vector<16x32xf32>
    %220 = vector.extract_strided_slice %200 {offsets = [0, 96], sizes = [16, 32], strides = [1, 1]} : vector<16x128xf32> to vector<16x32xf32>
    %221 = math.tanh %213 : vector<16x32xf32>
    %222 = arith.mulf %220, %221 : vector<16x32xf32>
    %223 = vector.extract_strided_slice %206 {offsets = [0, 96], sizes = [16, 32], strides = [1, 1]} : vector<16x128xf32> to vector<16x32xf32>
    %224 = math.tanh %219 : vector<16x32xf32>
    %225 = arith.mulf %223, %224 : vector<16x32xf32>
    %226 = tpu.concatenate %222, %225 in 1 : vector<16x32xf32>, vector<16x32xf32> -> vector<16x64xf32>
    %227 = arith.truncf %226 : vector<16x64xf32> to vector<16x64xbf16>
    %228 = arith.truncf %222 : vector<16x32xf32> to vector<16x32xbf16>
    %c64_63 = arith.constant 64 : index
    %c0_64 = arith.constant 0 : index
    %229 = vector.load %arg17[%c64_63, %c0_64] : memref<128x32xbf16, #tpu.memory_space<vmem>>, vector<16x32xbf16>
    tpu.vector_store %arg17[%c64_63, %c0_64], %228 {strides = array<i32>} : memref<128x32xbf16, #tpu.memory_space<vmem>>, vector<16x32xbf16>,
    %230 = arith.truncf %225 : vector<16x32xf32> to vector<16x32xbf16>
    %c48_65 = arith.constant 48 : index
    %c0_66 = arith.constant 0 : index
    %231 = vector.load %arg18[%c48_65, %c0_66] : memref<128x32xbf16, #tpu.memory_space<vmem>>, vector<16x32xbf16>
    tpu.vector_store %arg18[%c48_65, %c0_66], %230 {strides = array<i32>} : memref<128x32xbf16, #tpu.memory_space<vmem>>, vector<16x32xbf16>,
    %cst_67 = arith.constant dense<0.000000e+00> : vector<16x256xf32>
    %232 = tpu.matmul %227, %13, %cst_67 {dimension_numbers = #tpu.dot_dimension_numbers<[1], [0], [0], [1], [0, 0, 1, 1], [], []>} : vector<16x64xbf16>, vector<64x256xbf16>, vector<16x256xf32> -> vector<16x256xf32>
    %233 = vector.extract_strided_slice %232 {offsets = [0, 0], sizes = [16, 128], strides = [1, 1]} : vector<16x256xf32> to vector<16x128xf32>
    %c80_68 = arith.constant 80 : index
    %c0_69 = arith.constant 0 : index
    %234 = vector.load %arg15[%c80_68, %c0_69] : memref<128x128xf32, #tpu.memory_space<vmem>>, vector<16x128xf32>
    %235 = arith.addf %233, %234 : vector<16x128xf32>
    %236 = vector.extract_strided_slice %232 {offsets = [0, 128], sizes = [16, 128], strides = [1, 1]} : vector<16x256xf32> to vector<16x128xf32>
    %c32_70 = arith.constant 32 : index
    %c0_71 = arith.constant 0 : index
    %237 = vector.load %arg16[%c32_70, %c0_71] : memref<128x128xf32, #tpu.memory_space<vmem>>, vector<16x128xf32>
    %238 = arith.addf %236, %237 : vector<16x128xf32>
    %239 = arith.negf %235 : vector<16x128xf32>
    %240 = math.exp %239 : vector<16x128xf32>
    %cst_72 = arith.constant 1.000000e+00 : f32
    %241 = vector.broadcast %cst_72 : f32 to vector<16x128xf32>
    %242 = arith.addf %241, %240 : vector<16x128xf32>
    %243 = arith.divf %241, %242 : vector<16x128xf32>
    %244 = math.tanh %235 : vector<16x128xf32>
    %245 = arith.negf %238 : vector<16x128xf32>
    %246 = math.exp %245 : vector<16x128xf32>
    %cst_73 = arith.constant 1.000000e+00 : f32
    %247 = vector.broadcast %cst_73 : f32 to vector<16x128xf32>
    %248 = arith.addf %247, %246 : vector<16x128xf32>
    %249 = arith.divf %247, %248 : vector<16x128xf32>
    %250 = math.tanh %238 : vector<16x128xf32>
    %251 = vector.extract_strided_slice %243 {offsets = [0, 32], sizes = [16, 32], strides = [1, 1]} : vector<16x128xf32> to vector<16x32xf32>
    %252 = arith.mulf %251, %213 : vector<16x32xf32>
    %253 = vector.extract_strided_slice %243 {offsets = [0, 0], sizes = [16, 32], strides = [1, 1]} : vector<16x128xf32> to vector<16x32xf32>
    %254 = vector.extract_strided_slice %244 {offsets = [0, 64], sizes = [16, 32], strides = [1, 1]} : vector<16x128xf32> to vector<16x32xf32>
    %255 = arith.mulf %253, %254 : vector<16x32xf32>
    %256 = arith.addf %252, %255 : vector<16x32xf32>
    %257 = vector.extract_strided_slice %249 {offsets = [0, 32], sizes = [16, 32], strides = [1, 1]} : vector<16x128xf32> to vector<16x32xf32>
    %258 = arith.mulf %257, %219 : vector<16x32xf32>
    %259 = vector.extract_strided_slice %249 {offsets = [0, 0], sizes = [16, 32], strides = [1, 1]} : vector<16x128xf32> to vector<16x32xf32>
    %260 = vector.extract_strided_slice %250 {offsets = [0, 64], sizes = [16, 32], strides = [1, 1]} : vector<16x128xf32> to vector<16x32xf32>
    %261 = arith.mulf %259, %260 : vector<16x32xf32>
    %262 = arith.addf %258, %261 : vector<16x32xf32>
    %263 = vector.extract_strided_slice %243 {offsets = [0, 96], sizes = [16, 32], strides = [1, 1]} : vector<16x128xf32> to vector<16x32xf32>
    %264 = math.tanh %256 : vector<16x32xf32>
    %265 = arith.mulf %263, %264 : vector<16x32xf32>
    %266 = vector.extract_strided_slice %249 {offsets = [0, 96], sizes = [16, 32], strides = [1, 1]} : vector<16x128xf32> to vector<16x32xf32>
    %267 = math.tanh %262 : vector<16x32xf32>
    %268 = arith.mulf %266, %267 : vector<16x32xf32>
    %269 = tpu.concatenate %265, %268 in 1 : vector<16x32xf32>, vector<16x32xf32> -> vector<16x64xf32>
    %270 = arith.truncf %269 : vector<16x64xf32> to vector<16x64xbf16>
    %271 = arith.truncf %265 : vector<16x32xf32> to vector<16x32xbf16>
    %c80_74 = arith.constant 80 : index
    %c0_75 = arith.constant 0 : index
    %272 = vector.load %arg17[%c80_74, %c0_75] : memref<128x32xbf16, #tpu.memory_space<vmem>>, vector<16x32xbf16>
    tpu.vector_store %arg17[%c80_74, %c0_75], %271 {strides = array<i32>} : memref<128x32xbf16, #tpu.memory_space<vmem>>, vector<16x32xbf16>,
    %273 = arith.truncf %268 : vector<16x32xf32> to vector<16x32xbf16>
    %c32_76 = arith.constant 32 : index
    %c0_77 = arith.constant 0 : index
    %274 = vector.load %arg18[%c32_76, %c0_77] : memref<128x32xbf16, #tpu.memory_space<vmem>>, vector<16x32xbf16>
    tpu.vector_store %arg18[%c32_76, %c0_77], %273 {strides = array<i32>} : memref<128x32xbf16, #tpu.memory_space<vmem>>, vector<16x32xbf16>,
    %cst_78 = arith.constant dense<0.000000e+00> : vector<16x256xf32>
    %275 = tpu.matmul %270, %13, %cst_78 {dimension_numbers = #tpu.dot_dimension_numbers<[1], [0], [0], [1], [0, 0, 1, 1], [], []>} : vector<16x64xbf16>, vector<64x256xbf16>, vector<16x256xf32> -> vector<16x256xf32>
    %276 = vector.extract_strided_slice %275 {offsets = [0, 0], sizes = [16, 128], strides = [1, 1]} : vector<16x256xf32> to vector<16x128xf32>
    %c96_79 = arith.constant 96 : index
    %c0_80 = arith.constant 0 : index
    %277 = vector.load %arg15[%c96_79, %c0_80] : memref<128x128xf32, #tpu.memory_space<vmem>>, vector<16x128xf32>
    %278 = arith.addf %276, %277 : vector<16x128xf32>
    %279 = vector.extract_strided_slice %275 {offsets = [0, 128], sizes = [16, 128], strides = [1, 1]} : vector<16x256xf32> to vector<16x128xf32>
    %c16_81 = arith.constant 16 : index
    %c0_82 = arith.constant 0 : index
    %280 = vector.load %arg16[%c16_81, %c0_82] : memref<128x128xf32, #tpu.memory_space<vmem>>, vector<16x128xf32>
    %281 = arith.addf %279, %280 : vector<16x128xf32>
    %282 = arith.negf %278 : vector<16x128xf32>
    %283 = math.exp %282 : vector<16x128xf32>
    %cst_83 = arith.constant 1.000000e+00 : f32
    %284 = vector.broadcast %cst_83 : f32 to vector<16x128xf32>
    %285 = arith.addf %284, %283 : vector<16x128xf32>
    %286 = arith.divf %284, %285 : vector<16x128xf32>
    %287 = math.tanh %278 : vector<16x128xf32>
    %288 = arith.negf %281 : vector<16x128xf32>
    %289 = math.exp %288 : vector<16x128xf32>
    %cst_84 = arith.constant 1.000000e+00 : f32
    %290 = vector.broadcast %cst_84 : f32 to vector<16x128xf32>
    %291 = arith.addf %290, %289 : vector<16x128xf32>
    %292 = arith.divf %290, %291 : vector<16x128xf32>
    %293 = math.tanh %281 : vector<16x128xf32>
    %294 = vector.extract_strided_slice %286 {offsets = [0, 32], sizes = [16, 32], strides = [1, 1]} : vector<16x128xf32> to vector<16x32xf32>
    %295 = arith.mulf %294, %256 : vector<16x32xf32>
    %296 = vector.extract_strided_slice %286 {offsets = [0, 0], sizes = [16, 32], strides = [1, 1]} : vector<16x128xf32> to vector<16x32xf32>
    %297 = vector.extract_strided_slice %287 {offsets = [0, 64], sizes = [16, 32], strides = [1, 1]} : vector<16x128xf32> to vector<16x32xf32>
    %298 = arith.mulf %296, %297 : vector<16x32xf32>
    %299 = arith.addf %295, %298 : vector<16x32xf32>
    %300 = vector.extract_strided_slice %292 {offsets = [0, 32], sizes = [16, 32], strides = [1, 1]} : vector<16x128xf32> to vector<16x32xf32>
    %301 = arith.mulf %300, %262 : vector<16x32xf32>
    %302 = vector.extract_strided_slice %292 {offsets = [0, 0], sizes = [16, 32], strides = [1, 1]} : vector<16x128xf32> to vector<16x32xf32>
    %303 = vector.extract_strided_slice %293 {offsets = [0, 64], sizes = [16, 32], strides = [1, 1]} : vector<16x128xf32> to vector<16x32xf32>
    %304 = arith.mulf %302, %303 : vector<16x32xf32>
    %305 = arith.addf %301, %304 : vector<16x32xf32>
    %306 = vector.extract_strided_slice %286 {offsets = [0, 96], sizes = [16, 32], strides = [1, 1]} : vector<16x128xf32> to vector<16x32xf32>
    %307 = math.tanh %299 : vector<16x32xf32>
    %308 = arith.mulf %306, %307 : vector<16x32xf32>
    %309 = vector.extract_strided_slice %292 {offsets = [0, 96], sizes = [16, 32], strides = [1, 1]} : vector<16x128xf32> to vector<16x32xf32>
    %310 = math.tanh %305 : vector<16x32xf32>
    %311 = arith.mulf %309, %310 : vector<16x32xf32>
    %312 = tpu.concatenate %308, %311 in 1 : vector<16x32xf32>, vector<16x32xf32> -> vector<16x64xf32>
    %313 = arith.truncf %312 : vector<16x64xf32> to vector<16x64xbf16>
    %314 = arith.truncf %308 : vector<16x32xf32> to vector<16x32xbf16>
    %c96_85 = arith.constant 96 : index
    %c0_86 = arith.constant 0 : index
    %315 = vector.load %arg17[%c96_85, %c0_86] : memref<128x32xbf16, #tpu.memory_space<vmem>>, vector<16x32xbf16>
    tpu.vector_store %arg17[%c96_85, %c0_86], %314 {strides = array<i32>} : memref<128x32xbf16, #tpu.memory_space<vmem>>, vector<16x32xbf16>,
    %316 = arith.truncf %311 : vector<16x32xf32> to vector<16x32xbf16>
    %c16_87 = arith.constant 16 : index
    %c0_88 = arith.constant 0 : index
    %317 = vector.load %arg18[%c16_87, %c0_88] : memref<128x32xbf16, #tpu.memory_space<vmem>>, vector<16x32xbf16>
    tpu.vector_store %arg18[%c16_87, %c0_88], %316 {strides = array<i32>} : memref<128x32xbf16, #tpu.memory_space<vmem>>, vector<16x32xbf16>,
    %cst_89 = arith.constant dense<0.000000e+00> : vector<16x256xf32>
    %318 = tpu.matmul %313, %13, %cst_89 {dimension_numbers = #tpu.dot_dimension_numbers<[1], [0], [0], [1], [0, 0, 1, 1], [], []>} : vector<16x64xbf16>, vector<64x256xbf16>, vector<16x256xf32> -> vector<16x256xf32>
    %319 = vector.extract_strided_slice %318 {offsets = [0, 0], sizes = [16, 128], strides = [1, 1]} : vector<16x256xf32> to vector<16x128xf32>
    %c112_90 = arith.constant 112 : index
    %c0_91 = arith.constant 0 : index
    %320 = vector.load %arg15[%c112_90, %c0_91] : memref<128x128xf32, #tpu.memory_space<vmem>>, vector<16x128xf32>
    %321 = arith.addf %319, %320 : vector<16x128xf32>
    %322 = vector.extract_strided_slice %318 {offsets = [0, 128], sizes = [16, 128], strides = [1, 1]} : vector<16x256xf32> to vector<16x128xf32>
    %c0_92 = arith.constant 0 : index
    %c0_93 = arith.constant 0 : index
    %323 = vector.load %arg16[%c0_92, %c0_93] : memref<128x128xf32, #tpu.memory_space<vmem>>, vector<16x128xf32>
    %324 = arith.addf %322, %323 : vector<16x128xf32>
    %325 = arith.negf %321 : vector<16x128xf32>
    %326 = math.exp %325 : vector<16x128xf32>
    %cst_94 = arith.constant 1.000000e+00 : f32
    %327 = vector.broadcast %cst_94 : f32 to vector<16x128xf32>
    %328 = arith.addf %327, %326 : vector<16x128xf32>
    %329 = arith.divf %327, %328 : vector<16x128xf32>
    %330 = math.tanh %321 : vector<16x128xf32>
    %331 = arith.negf %324 : vector<16x128xf32>
    %332 = math.exp %331 : vector<16x128xf32>
    %cst_95 = arith.constant 1.000000e+00 : f32
    %333 = vector.broadcast %cst_95 : f32 to vector<16x128xf32>
    %334 = arith.addf %333, %332 : vector<16x128xf32>
    %335 = arith.divf %333, %334 : vector<16x128xf32>
    %336 = math.tanh %324 : vector<16x128xf32>
    %337 = vector.extract_strided_slice %329 {offsets = [0, 32], sizes = [16, 32], strides = [1, 1]} : vector<16x128xf32> to vector<16x32xf32>
    %338 = arith.mulf %337, %299 : vector<16x32xf32>
    %339 = vector.extract_strided_slice %329 {offsets = [0, 0], sizes = [16, 32], strides = [1, 1]} : vector<16x128xf32> to vector<16x32xf32>
    %340 = vector.extract_strided_slice %330 {offsets = [0, 64], sizes = [16, 32], strides = [1, 1]} : vector<16x128xf32> to vector<16x32xf32>
    %341 = arith.mulf %339, %340 : vector<16x32xf32>
    %342 = arith.addf %338, %341 : vector<16x32xf32>
    %343 = vector.extract_strided_slice %335 {offsets = [0, 32], sizes = [16, 32], strides = [1, 1]} : vector<16x128xf32> to vector<16x32xf32>
    %344 = arith.mulf %343, %305 : vector<16x32xf32>
    %345 = vector.extract_strided_slice %335 {offsets = [0, 0], sizes = [16, 32], strides = [1, 1]} : vector<16x128xf32> to vector<16x32xf32>
    %346 = vector.extract_strided_slice %336 {offsets = [0, 64], sizes = [16, 32], strides = [1, 1]} : vector<16x128xf32> to vector<16x32xf32>
    %347 = arith.mulf %345, %346 : vector<16x32xf32>
    %348 = arith.addf %344, %347 : vector<16x32xf32>
    %349 = vector.extract_strided_slice %329 {offsets = [0, 96], sizes = [16, 32], strides = [1, 1]} : vector<16x128xf32> to vector<16x32xf32>
    %350 = math.tanh %342 : vector<16x32xf32>
    %351 = arith.mulf %349, %350 : vector<16x32xf32>
    %352 = vector.extract_strided_slice %335 {offsets = [0, 96], sizes = [16, 32], strides = [1, 1]} : vector<16x128xf32> to vector<16x32xf32>
    %353 = math.tanh %348 : vector<16x32xf32>
    %354 = arith.mulf %352, %353 : vector<16x32xf32>
    %355 = arith.truncf %351 : vector<16x32xf32> to vector<16x32xbf16>
    %c112_96 = arith.constant 112 : index
    %c0_97 = arith.constant 0 : index
    %356 = vector.load %arg17[%c112_96, %c0_97] : memref<128x32xbf16, #tpu.memory_space<vmem>>, vector<16x32xbf16>
    tpu.vector_store %arg17[%c112_96, %c0_97], %355 {strides = array<i32>} : memref<128x32xbf16, #tpu.memory_space<vmem>>, vector<16x32xbf16>,
    %357 = arith.truncf %354 : vector<16x32xf32> to vector<16x32xbf16>
    %c0_98 = arith.constant 0 : index
    %c0_99 = arith.constant 0 : index
    %358 = vector.load %arg18[%c0_98, %c0_99] : memref<128x32xbf16, #tpu.memory_space<vmem>>, vector<16x32xbf16>
    tpu.vector_store %arg18[%c0_98, %c0_99], %357 {strides = array<i32>} : memref<128x32xbf16, #tpu.memory_space<vmem>>, vector<16x32xbf16>,
    %c0_100 = arith.constant 0 : index
    %c0_101 = arith.constant 0 : index
    %359 = vector.load %arg17[%c0_100, %c0_101] : memref<128x32xbf16, #tpu.memory_space<vmem>>, vector<128x32xbf16>
    %c0_102 = arith.constant 0 : index
    %c0_103 = arith.constant 0 : index
    %360 = vector.load %arg18[%c0_102, %c0_103] : memref<128x32xbf16, #tpu.memory_space<vmem>>, vector<128x32xbf16>
    %361 = tpu.concatenate %359, %360 in 1 : vector<128x32xbf16>, vector<128x32xbf16> -> vector<128x64xbf16>
    %c0_104 = arith.constant 0 : index
    %c0_105 = arith.constant 0 : index
    %362 = vector.load %arg6[%c0_104, %c0_105] : memref<64x128xbf16, #tpu.memory_space<vmem>>, vector<64x128xbf16>
    %cst_106 = arith.constant dense<0.000000e+00> : vector<128x128xf32>
    %363 = tpu.matmul %361, %362, %cst_106 {dimension_numbers = #tpu.dot_dimension_numbers<[1], [0], [0], [1], [0, 0, 1, 1], [], []>} : vector<128x64xbf16>, vector<64x128xbf16>, vector<128x128xf32> -> vector<128x128xf32>
    %c0_107 = arith.constant 0 : index
    %c0_108 = arith.constant 0 : index
    %364 = vector.load %arg9[%c0_107, %c0_108] : memref<1x128xf32, #tpu.memory_space<vmem>>, vector<1x128xf32>
    %365 = vector.broadcast %364 : vector<1x128xf32> to vector<128x128xf32>
    %366 = arith.addf %363, %365 : vector<128x128xf32>
    %c0_109 = arith.constant 0 : index
    %c0_110 = arith.constant 0 : index
    %367 = vector.load %arg15[%c0_109, %c0_110] : memref<128x128xf32, #tpu.memory_space<vmem>>, vector<128x128xf32>
    tpu.vector_store %arg15[%c0_109, %c0_110], %366 {strides = array<i32>} : memref<128x128xf32, #tpu.memory_space<vmem>>, vector<128x128xf32>,
    %c0_111 = arith.constant 0 : index
    %c0_112 = arith.constant 0 : index
    %368 = vector.load %arg7[%c0_111, %c0_112] : memref<64x128xbf16, #tpu.memory_space<vmem>>, vector<64x128xbf16>
    %cst_113 = arith.constant dense<0.000000e+00> : vector<128x128xf32>
    %369 = tpu.matmul %361, %368, %cst_113 {dimension_numbers = #tpu.dot_dimension_numbers<[1], [0], [0], [1], [0, 0, 1, 1], [], []>} : vector<128x64xbf16>, vector<64x128xbf16>, vector<128x128xf32> -> vector<128x128xf32>
    %c0_114 = arith.constant 0 : index
    %c0_115 = arith.constant 0 : index
    %370 = vector.load %arg10[%c0_114, %c0_115] : memref<1x128xf32, #tpu.memory_space<vmem>>, vector<1x128xf32>
    %371 = vector.broadcast %370 : vector<1x128xf32> to vector<128x128xf32>
    %372 = arith.addf %369, %371 : vector<128x128xf32>
    %c0_116 = arith.constant 0 : index
    %c0_117 = arith.constant 0 : index
    %373 = vector.load %arg16[%c0_116, %c0_117] : memref<128x128xf32, #tpu.memory_space<vmem>>, vector<128x128xf32>
    tpu.vector_store %arg16[%c0_116, %c0_117], %372 {strides = array<i32>} : memref<128x128xf32, #tpu.memory_space<vmem>>, vector<128x128xf32>,
    %c0_118 = arith.constant 0 : index
    %c0_119 = arith.constant 0 : index
    %374 = vector.load %arg8[%c0_118, %c0_119] : memref<64x256xbf16, #tpu.memory_space<vmem>>, vector<64x256xbf16>
    %cst_120 = arith.constant 0.000000e+00 : bf16
    %375 = vector.broadcast %cst_120 : bf16 to vector<16x64xbf16>
    %cst_121 = arith.constant 0.000000e+00 : f32
    %376 = vector.broadcast %cst_121 : f32 to vector<16x32xf32>
    %cst_122 = arith.constant 0.000000e+00 : f32
    %377 = vector.broadcast %cst_122 : f32 to vector<16x32xf32>
    %cst_123 = arith.constant dense<0.000000e+00> : vector<16x256xf32>
    %378 = tpu.matmul %375, %374, %cst_123 {dimension_numbers = #tpu.dot_dimension_numbers<[1], [0], [0], [1], [0, 0, 1, 1], [], []>} : vector<16x64xbf16>, vector<64x256xbf16>, vector<16x256xf32> -> vector<16x256xf32>
    %379 = vector.extract_strided_slice %378 {offsets = [0, 0], sizes = [16, 128], strides = [1, 1]} : vector<16x256xf32> to vector<16x128xf32>
    %c0_124 = arith.constant 0 : index
    %c0_125 = arith.constant 0 : index
    %380 = vector.load %arg15[%c0_124, %c0_125] : memref<128x128xf32, #tpu.memory_space<vmem>>, vector<16x128xf32>
    %381 = arith.addf %379, %380 : vector<16x128xf32>
    %382 = vector.extract_strided_slice %378 {offsets = [0, 128], sizes = [16, 128], strides = [1, 1]} : vector<16x256xf32> to vector<16x128xf32>
    %c112_126 = arith.constant 112 : index
    %c0_127 = arith.constant 0 : index
    %383 = vector.load %arg16[%c112_126, %c0_127] : memref<128x128xf32, #tpu.memory_space<vmem>>, vector<16x128xf32>
    %384 = arith.addf %382, %383 : vector<16x128xf32>
    %385 = arith.negf %381 : vector<16x128xf32>
    %386 = math.exp %385 : vector<16x128xf32>
    %cst_128 = arith.constant 1.000000e+00 : f32
    %387 = vector.broadcast %cst_128 : f32 to vector<16x128xf32>
    %388 = arith.addf %387, %386 : vector<16x128xf32>
    %389 = arith.divf %387, %388 : vector<16x128xf32>
    %390 = math.tanh %381 : vector<16x128xf32>
    %391 = arith.negf %384 : vector<16x128xf32>
    %392 = math.exp %391 : vector<16x128xf32>
    %cst_129 = arith.constant 1.000000e+00 : f32
    %393 = vector.broadcast %cst_129 : f32 to vector<16x128xf32>
    %394 = arith.addf %393, %392 : vector<16x128xf32>
    %395 = arith.divf %393, %394 : vector<16x128xf32>
    %396 = math.tanh %384 : vector<16x128xf32>
    %397 = vector.extract_strided_slice %389 {offsets = [0, 32], sizes = [16, 32], strides = [1, 1]} : vector<16x128xf32> to vector<16x32xf32>
    %398 = arith.mulf %397, %376 : vector<16x32xf32>
    %399 = vector.extract_strided_slice %389 {offsets = [0, 0], sizes = [16, 32], strides = [1, 1]} : vector<16x128xf32> to vector<16x32xf32>
    %400 = vector.extract_strided_slice %390 {offsets = [0, 64], sizes = [16, 32], strides = [1, 1]} : vector<16x128xf32> to vector<16x32xf32>
    %401 = arith.mulf %399, %400 : vector<16x32xf32>
    %402 = arith.addf %398, %401 : vector<16x32xf32>
    %403 = vector.extract_strided_slice %395 {offsets = [0, 32], sizes = [16, 32], strides = [1, 1]} : vector<16x128xf32> to vector<16x32xf32>
    %404 = arith.mulf %403, %377 : vector<16x32xf32>
    %405 = vector.extract_strided_slice %395 {offsets = [0, 0], sizes = [16, 32], strides = [1, 1]} : vector<16x128xf32> to vector<16x32xf32>
    %406 = vector.extract_strided_slice %396 {offsets = [0, 64], sizes = [16, 32], strides = [1, 1]} : vector<16x128xf32> to vector<16x32xf32>
    %407 = arith.mulf %405, %406 : vector<16x32xf32>
    %408 = arith.addf %404, %407 : vector<16x32xf32>
    %409 = vector.extract_strided_slice %389 {offsets = [0, 96], sizes = [16, 32], strides = [1, 1]} : vector<16x128xf32> to vector<16x32xf32>
    %410 = math.tanh %402 : vector<16x32xf32>
    %411 = arith.mulf %409, %410 : vector<16x32xf32>
    %412 = vector.extract_strided_slice %395 {offsets = [0, 96], sizes = [16, 32], strides = [1, 1]} : vector<16x128xf32> to vector<16x32xf32>
    %413 = math.tanh %408 : vector<16x32xf32>
    %414 = arith.mulf %412, %413 : vector<16x32xf32>
    %415 = tpu.concatenate %411, %414 in 1 : vector<16x32xf32>, vector<16x32xf32> -> vector<16x64xf32>
    %416 = arith.truncf %415 : vector<16x64xf32> to vector<16x64xbf16>
    %cst_130 = arith.constant dense<0.000000e+00> : vector<16x256xf32>
    %417 = tpu.matmul %416, %374, %cst_130 {dimension_numbers = #tpu.dot_dimension_numbers<[1], [0], [0], [1], [0, 0, 1, 1], [], []>} : vector<16x64xbf16>, vector<64x256xbf16>, vector<16x256xf32> -> vector<16x256xf32>
    %418 = vector.extract_strided_slice %417 {offsets = [0, 0], sizes = [16, 128], strides = [1, 1]} : vector<16x256xf32> to vector<16x128xf32>
    %c16_131 = arith.constant 16 : index
    %c0_132 = arith.constant 0 : index
    %419 = vector.load %arg15[%c16_131, %c0_132] : memref<128x128xf32, #tpu.memory_space<vmem>>, vector<16x128xf32>
    %420 = arith.addf %418, %419 : vector<16x128xf32>
    %421 = vector.extract_strided_slice %417 {offsets = [0, 128], sizes = [16, 128], strides = [1, 1]} : vector<16x256xf32> to vector<16x128xf32>
    %c96_133 = arith.constant 96 : index
    %c0_134 = arith.constant 0 : index
    %422 = vector.load %arg16[%c96_133, %c0_134] : memref<128x128xf32, #tpu.memory_space<vmem>>, vector<16x128xf32>
    %423 = arith.addf %421, %422 : vector<16x128xf32>
    %424 = arith.negf %420 : vector<16x128xf32>
    %425 = math.exp %424 : vector<16x128xf32>
    %cst_135 = arith.constant 1.000000e+00 : f32
    %426 = vector.broadcast %cst_135 : f32 to vector<16x128xf32>
    %427 = arith.addf %426, %425 : vector<16x128xf32>
    %428 = arith.divf %426, %427 : vector<16x128xf32>
    %429 = math.tanh %420 : vector<16x128xf32>
    %430 = arith.negf %423 : vector<16x128xf32>
    %431 = math.exp %430 : vector<16x128xf32>
    %cst_136 = arith.constant 1.000000e+00 : f32
    %432 = vector.broadcast %cst_136 : f32 to vector<16x128xf32>
    %433 = arith.addf %432, %431 : vector<16x128xf32>
    %434 = arith.divf %432, %433 : vector<16x128xf32>
    %435 = math.tanh %423 : vector<16x128xf32>
    %436 = vector.extract_strided_slice %428 {offsets = [0, 32], sizes = [16, 32], strides = [1, 1]} : vector<16x128xf32> to vector<16x32xf32>
    %437 = arith.mulf %436, %402 : vector<16x32xf32>
    %438 = vector.extract_strided_slice %428 {offsets = [0, 0], sizes = [16, 32], strides = [1, 1]} : vector<16x128xf32> to vector<16x32xf32>
    %439 = vector.extract_strided_slice %429 {offsets = [0, 64], sizes = [16, 32], strides = [1, 1]} : vector<16x128xf32> to vector<16x32xf32>
    %440 = arith.mulf %438, %439 : vector<16x32xf32>
    %441 = arith.addf %437, %440 : vector<16x32xf32>
    %442 = vector.extract_strided_slice %434 {offsets = [0, 32], sizes = [16, 32], strides = [1, 1]} : vector<16x128xf32> to vector<16x32xf32>
    %443 = arith.mulf %442, %408 : vector<16x32xf32>
    %444 = vector.extract_strided_slice %434 {offsets = [0, 0], sizes = [16, 32], strides = [1, 1]} : vector<16x128xf32> to vector<16x32xf32>
    %445 = vector.extract_strided_slice %435 {offsets = [0, 64], sizes = [16, 32], strides = [1, 1]} : vector<16x128xf32> to vector<16x32xf32>
    %446 = arith.mulf %444, %445 : vector<16x32xf32>
    %447 = arith.addf %443, %446 : vector<16x32xf32>
    %448 = vector.extract_strided_slice %428 {offsets = [0, 96], sizes = [16, 32], strides = [1, 1]} : vector<16x128xf32> to vector<16x32xf32>
    %449 = math.tanh %441 : vector<16x32xf32>
    %450 = arith.mulf %448, %449 : vector<16x32xf32>
    %451 = vector.extract_strided_slice %434 {offsets = [0, 96], sizes = [16, 32], strides = [1, 1]} : vector<16x128xf32> to vector<16x32xf32>
    %452 = math.tanh %447 : vector<16x32xf32>
    %453 = arith.mulf %451, %452 : vector<16x32xf32>
    %454 = tpu.concatenate %450, %453 in 1 : vector<16x32xf32>, vector<16x32xf32> -> vector<16x64xf32>
    %455 = arith.truncf %454 : vector<16x64xf32> to vector<16x64xbf16>
    %cst_137 = arith.constant dense<0.000000e+00> : vector<16x256xf32>
    %456 = tpu.matmul %455, %374, %cst_137 {dimension_numbers = #tpu.dot_dimension_numbers<[1], [0], [0], [1], [0, 0, 1, 1], [], []>} : vector<16x64xbf16>, vector<64x256xbf16>, vector<16x256xf32> -> vector<16x256xf32>
    %457 = vector.extract_strided_slice %456 {offsets = [0, 0], sizes = [16, 128], strides = [1, 1]} : vector<16x256xf32> to vector<16x128xf32>
    %c32_138 = arith.constant 32 : index
    %c0_139 = arith.constant 0 : index
    %458 = vector.load %arg15[%c32_138, %c0_139] : memref<128x128xf32, #tpu.memory_space<vmem>>, vector<16x128xf32>
    %459 = arith.addf %457, %458 : vector<16x128xf32>
    %460 = vector.extract_strided_slice %456 {offsets = [0, 128], sizes = [16, 128], strides = [1, 1]} : vector<16x256xf32> to vector<16x128xf32>
    %c80_140 = arith.constant 80 : index
    %c0_141 = arith.constant 0 : index
    %461 = vector.load %arg16[%c80_140, %c0_141] : memref<128x128xf32, #tpu.memory_space<vmem>>, vector<16x128xf32>
    %462 = arith.addf %460, %461 : vector<16x128xf32>
    %463 = arith.negf %459 : vector<16x128xf32>
    %464 = math.exp %463 : vector<16x128xf32>
    %cst_142 = arith.constant 1.000000e+00 : f32
    %465 = vector.broadcast %cst_142 : f32 to vector<16x128xf32>
    %466 = arith.addf %465, %464 : vector<16x128xf32>
    %467 = arith.divf %465, %466 : vector<16x128xf32>
    %468 = math.tanh %459 : vector<16x128xf32>
    %469 = arith.negf %462 : vector<16x128xf32>
    %470 = math.exp %469 : vector<16x128xf32>
    %cst_143 = arith.constant 1.000000e+00 : f32
    %471 = vector.broadcast %cst_143 : f32 to vector<16x128xf32>
    %472 = arith.addf %471, %470 : vector<16x128xf32>
    %473 = arith.divf %471, %472 : vector<16x128xf32>
    %474 = math.tanh %462 : vector<16x128xf32>
    %475 = vector.extract_strided_slice %467 {offsets = [0, 32], sizes = [16, 32], strides = [1, 1]} : vector<16x128xf32> to vector<16x32xf32>
    %476 = arith.mulf %475, %441 : vector<16x32xf32>
    %477 = vector.extract_strided_slice %467 {offsets = [0, 0], sizes = [16, 32], strides = [1, 1]} : vector<16x128xf32> to vector<16x32xf32>
    %478 = vector.extract_strided_slice %468 {offsets = [0, 64], sizes = [16, 32], strides = [1, 1]} : vector<16x128xf32> to vector<16x32xf32>
    %479 = arith.mulf %477, %478 : vector<16x32xf32>
    %480 = arith.addf %476, %479 : vector<16x32xf32>
    %481 = vector.extract_strided_slice %473 {offsets = [0, 32], sizes = [16, 32], strides = [1, 1]} : vector<16x128xf32> to vector<16x32xf32>
    %482 = arith.mulf %481, %447 : vector<16x32xf32>
    %483 = vector.extract_strided_slice %473 {offsets = [0, 0], sizes = [16, 32], strides = [1, 1]} : vector<16x128xf32> to vector<16x32xf32>
    %484 = vector.extract_strided_slice %474 {offsets = [0, 64], sizes = [16, 32], strides = [1, 1]} : vector<16x128xf32> to vector<16x32xf32>
    %485 = arith.mulf %483, %484 : vector<16x32xf32>
    %486 = arith.addf %482, %485 : vector<16x32xf32>
    %487 = vector.extract_strided_slice %467 {offsets = [0, 96], sizes = [16, 32], strides = [1, 1]} : vector<16x128xf32> to vector<16x32xf32>
    %488 = math.tanh %480 : vector<16x32xf32>
    %489 = arith.mulf %487, %488 : vector<16x32xf32>
    %490 = vector.extract_strided_slice %473 {offsets = [0, 96], sizes = [16, 32], strides = [1, 1]} : vector<16x128xf32> to vector<16x32xf32>
    %491 = math.tanh %486 : vector<16x32xf32>
    %492 = arith.mulf %490, %491 : vector<16x32xf32>
    %493 = tpu.concatenate %489, %492 in 1 : vector<16x32xf32>, vector<16x32xf32> -> vector<16x64xf32>
    %494 = arith.truncf %493 : vector<16x64xf32> to vector<16x64xbf16>
    %cst_144 = arith.constant dense<0.000000e+00> : vector<16x256xf32>
    %495 = tpu.matmul %494, %374, %cst_144 {dimension_numbers = #tpu.dot_dimension_numbers<[1], [0], [0], [1], [0, 0, 1, 1], [], []>} : vector<16x64xbf16>, vector<64x256xbf16>, vector<16x256xf32> -> vector<16x256xf32>
    %496 = vector.extract_strided_slice %495 {offsets = [0, 0], sizes = [16, 128], strides = [1, 1]} : vector<16x256xf32> to vector<16x128xf32>
    %c48_145 = arith.constant 48 : index
    %c0_146 = arith.constant 0 : index
    %497 = vector.load %arg15[%c48_145, %c0_146] : memref<128x128xf32, #tpu.memory_space<vmem>>, vector<16x128xf32>
    %498 = arith.addf %496, %497 : vector<16x128xf32>
    %499 = vector.extract_strided_slice %495 {offsets = [0, 128], sizes = [16, 128], strides = [1, 1]} : vector<16x256xf32> to vector<16x128xf32>
    %c64_147 = arith.constant 64 : index
    %c0_148 = arith.constant 0 : index
    %500 = vector.load %arg16[%c64_147, %c0_148] : memref<128x128xf32, #tpu.memory_space<vmem>>, vector<16x128xf32>
    %501 = arith.addf %499, %500 : vector<16x128xf32>
    %502 = arith.negf %498 : vector<16x128xf32>
    %503 = math.exp %502 : vector<16x128xf32>
    %cst_149 = arith.constant 1.000000e+00 : f32
    %504 = vector.broadcast %cst_149 : f32 to vector<16x128xf32>
    %505 = arith.addf %504, %503 : vector<16x128xf32>
    %506 = arith.divf %504, %505 : vector<16x128xf32>
    %507 = math.tanh %498 : vector<16x128xf32>
    %508 = arith.negf %501 : vector<16x128xf32>
    %509 = math.exp %508 : vector<16x128xf32>
    %cst_150 = arith.constant 1.000000e+00 : f32
    %510 = vector.broadcast %cst_150 : f32 to vector<16x128xf32>
    %511 = arith.addf %510, %509 : vector<16x128xf32>
    %512 = arith.divf %510, %511 : vector<16x128xf32>
    %513 = math.tanh %501 : vector<16x128xf32>
    %514 = vector.extract_strided_slice %506 {offsets = [0, 32], sizes = [16, 32], strides = [1, 1]} : vector<16x128xf32> to vector<16x32xf32>
    %515 = arith.mulf %514, %480 : vector<16x32xf32>
    %516 = vector.extract_strided_slice %506 {offsets = [0, 0], sizes = [16, 32], strides = [1, 1]} : vector<16x128xf32> to vector<16x32xf32>
    %517 = vector.extract_strided_slice %507 {offsets = [0, 64], sizes = [16, 32], strides = [1, 1]} : vector<16x128xf32> to vector<16x32xf32>
    %518 = arith.mulf %516, %517 : vector<16x32xf32>
    %519 = arith.addf %515, %518 : vector<16x32xf32>
    %520 = vector.extract_strided_slice %512 {offsets = [0, 32], sizes = [16, 32], strides = [1, 1]} : vector<16x128xf32> to vector<16x32xf32>
    %521 = arith.mulf %520, %486 : vector<16x32xf32>
    %522 = vector.extract_strided_slice %512 {offsets = [0, 0], sizes = [16, 32], strides = [1, 1]} : vector<16x128xf32> to vector<16x32xf32>
    %523 = vector.extract_strided_slice %513 {offsets = [0, 64], sizes = [16, 32], strides = [1, 1]} : vector<16x128xf32> to vector<16x32xf32>
    %524 = arith.mulf %522, %523 : vector<16x32xf32>
    %525 = arith.addf %521, %524 : vector<16x32xf32>
    %526 = vector.extract_strided_slice %506 {offsets = [0, 96], sizes = [16, 32], strides = [1, 1]} : vector<16x128xf32> to vector<16x32xf32>
    %527 = math.tanh %519 : vector<16x32xf32>
    %528 = arith.mulf %526, %527 : vector<16x32xf32>
    %529 = vector.extract_strided_slice %512 {offsets = [0, 96], sizes = [16, 32], strides = [1, 1]} : vector<16x128xf32> to vector<16x32xf32>
    %530 = math.tanh %525 : vector<16x32xf32>
    %531 = arith.mulf %529, %530 : vector<16x32xf32>
    %532 = tpu.concatenate %528, %531 in 1 : vector<16x32xf32>, vector<16x32xf32> -> vector<16x64xf32>
    %533 = arith.truncf %532 : vector<16x64xf32> to vector<16x64xbf16>
    %cst_151 = arith.constant dense<0.000000e+00> : vector<16x256xf32>
    %534 = tpu.matmul %533, %374, %cst_151 {dimension_numbers = #tpu.dot_dimension_numbers<[1], [0], [0], [1], [0, 0, 1, 1], [], []>} : vector<16x64xbf16>, vector<64x256xbf16>, vector<16x256xf32> -> vector<16x256xf32>
    %535 = vector.extract_strided_slice %534 {offsets = [0, 0], sizes = [16, 128], strides = [1, 1]} : vector<16x256xf32> to vector<16x128xf32>
    %c64_152 = arith.constant 64 : index
    %c0_153 = arith.constant 0 : index
    %536 = vector.load %arg15[%c64_152, %c0_153] : memref<128x128xf32, #tpu.memory_space<vmem>>, vector<16x128xf32>
    %537 = arith.addf %535, %536 : vector<16x128xf32>
    %538 = vector.extract_strided_slice %534 {offsets = [0, 128], sizes = [16, 128], strides = [1, 1]} : vector<16x256xf32> to vector<16x128xf32>
    %c48_154 = arith.constant 48 : index
    %c0_155 = arith.constant 0 : index
    %539 = vector.load %arg16[%c48_154, %c0_155] : memref<128x128xf32, #tpu.memory_space<vmem>>, vector<16x128xf32>
    %540 = arith.addf %538, %539 : vector<16x128xf32>
    %541 = arith.negf %537 : vector<16x128xf32>
    %542 = math.exp %541 : vector<16x128xf32>
    %cst_156 = arith.constant 1.000000e+00 : f32
    %543 = vector.broadcast %cst_156 : f32 to vector<16x128xf32>
    %544 = arith.addf %543, %542 : vector<16x128xf32>
    %545 = arith.divf %543, %544 : vector<16x128xf32>
    %546 = math.tanh %537 : vector<16x128xf32>
    %547 = arith.negf %540 : vector<16x128xf32>
    %548 = math.exp %547 : vector<16x128xf32>
    %cst_157 = arith.constant 1.000000e+00 : f32
    %549 = vector.broadcast %cst_157 : f32 to vector<16x128xf32>
    %550 = arith.addf %549, %548 : vector<16x128xf32>
    %551 = arith.divf %549, %550 : vector<16x128xf32>
    %552 = math.tanh %540 : vector<16x128xf32>
    %553 = vector.extract_strided_slice %545 {offsets = [0, 32], sizes = [16, 32], strides = [1, 1]} : vector<16x128xf32> to vector<16x32xf32>
    %554 = arith.mulf %553, %519 : vector<16x32xf32>
    %555 = vector.extract_strided_slice %545 {offsets = [0, 0], sizes = [16, 32], strides = [1, 1]} : vector<16x128xf32> to vector<16x32xf32>
    %556 = vector.extract_strided_slice %546 {offsets = [0, 64], sizes = [16, 32], strides = [1, 1]} : vector<16x128xf32> to vector<16x32xf32>
    %557 = arith.mulf %555, %556 : vector<16x32xf32>
    %558 = arith.addf %554, %557 : vector<16x32xf32>
    %559 = vector.extract_strided_slice %551 {offsets = [0, 32], sizes = [16, 32], strides = [1, 1]} : vector<16x128xf32> to vector<16x32xf32>
    %560 = arith.mulf %559, %525 : vector<16x32xf32>
    %561 = vector.extract_strided_slice %551 {offsets = [0, 0], sizes = [16, 32], strides = [1, 1]} : vector<16x128xf32> to vector<16x32xf32>
    %562 = vector.extract_strided_slice %552 {offsets = [0, 64], sizes = [16, 32], strides = [1, 1]} : vector<16x128xf32> to vector<16x32xf32>
    %563 = arith.mulf %561, %562 : vector<16x32xf32>
    %564 = arith.addf %560, %563 : vector<16x32xf32>
    %565 = vector.extract_strided_slice %545 {offsets = [0, 96], sizes = [16, 32], strides = [1, 1]} : vector<16x128xf32> to vector<16x32xf32>
    %566 = math.tanh %558 : vector<16x32xf32>
    %567 = arith.mulf %565, %566 : vector<16x32xf32>
    %568 = vector.extract_strided_slice %551 {offsets = [0, 96], sizes = [16, 32], strides = [1, 1]} : vector<16x128xf32> to vector<16x32xf32>
    %569 = math.tanh %564 : vector<16x32xf32>
    %570 = arith.mulf %568, %569 : vector<16x32xf32>
    %571 = tpu.concatenate %567, %570 in 1 : vector<16x32xf32>, vector<16x32xf32> -> vector<16x64xf32>
    %572 = arith.truncf %571 : vector<16x64xf32> to vector<16x64xbf16>
    %cst_158 = arith.constant dense<0.000000e+00> : vector<16x256xf32>
    %573 = tpu.matmul %572, %374, %cst_158 {dimension_numbers = #tpu.dot_dimension_numbers<[1], [0], [0], [1], [0, 0, 1, 1], [], []>} : vector<16x64xbf16>, vector<64x256xbf16>, vector<16x256xf32> -> vector<16x256xf32>
    %574 = vector.extract_strided_slice %573 {offsets = [0, 0], sizes = [16, 128], strides = [1, 1]} : vector<16x256xf32> to vector<16x128xf32>
    %c80_159 = arith.constant 80 : index
    %c0_160 = arith.constant 0 : index
    %575 = vector.load %arg15[%c80_159, %c0_160] : memref<128x128xf32, #tpu.memory_space<vmem>>, vector<16x128xf32>
    %576 = arith.addf %574, %575 : vector<16x128xf32>
    %577 = vector.extract_strided_slice %573 {offsets = [0, 128], sizes = [16, 128], strides = [1, 1]} : vector<16x256xf32> to vector<16x128xf32>
    %c32_161 = arith.constant 32 : index
    %c0_162 = arith.constant 0 : index
    %578 = vector.load %arg16[%c32_161, %c0_162] : memref<128x128xf32, #tpu.memory_space<vmem>>, vector<16x128xf32>
    %579 = arith.addf %577, %578 : vector<16x128xf32>
    %580 = arith.negf %576 : vector<16x128xf32>
    %581 = math.exp %580 : vector<16x128xf32>
    %cst_163 = arith.constant 1.000000e+00 : f32
    %582 = vector.broadcast %cst_163 : f32 to vector<16x128xf32>
    %583 = arith.addf %582, %581 : vector<16x128xf32>
    %584 = arith.divf %582, %583 : vector<16x128xf32>
    %585 = math.tanh %576 : vector<16x128xf32>
    %586 = arith.negf %579 : vector<16x128xf32>
    %587 = math.exp %586 : vector<16x128xf32>
    %cst_164 = arith.constant 1.000000e+00 : f32
    %588 = vector.broadcast %cst_164 : f32 to vector<16x128xf32>
    %589 = arith.addf %588, %587 : vector<16x128xf32>
    %590 = arith.divf %588, %589 : vector<16x128xf32>
    %591 = math.tanh %579 : vector<16x128xf32>
    %592 = vector.extract_strided_slice %584 {offsets = [0, 32], sizes = [16, 32], strides = [1, 1]} : vector<16x128xf32> to vector<16x32xf32>
    %593 = arith.mulf %592, %558 : vector<16x32xf32>
    %594 = vector.extract_strided_slice %584 {offsets = [0, 0], sizes = [16, 32], strides = [1, 1]} : vector<16x128xf32> to vector<16x32xf32>
    %595 = vector.extract_strided_slice %585 {offsets = [0, 64], sizes = [16, 32], strides = [1, 1]} : vector<16x128xf32> to vector<16x32xf32>
    %596 = arith.mulf %594, %595 : vector<16x32xf32>
    %597 = arith.addf %593, %596 : vector<16x32xf32>
    %598 = vector.extract_strided_slice %590 {offsets = [0, 32], sizes = [16, 32], strides = [1, 1]} : vector<16x128xf32> to vector<16x32xf32>
    %599 = arith.mulf %598, %564 : vector<16x32xf32>
    %600 = vector.extract_strided_slice %590 {offsets = [0, 0], sizes = [16, 32], strides = [1, 1]} : vector<16x128xf32> to vector<16x32xf32>
    %601 = vector.extract_strided_slice %591 {offsets = [0, 64], sizes = [16, 32], strides = [1, 1]} : vector<16x128xf32> to vector<16x32xf32>
    %602 = arith.mulf %600, %601 : vector<16x32xf32>
    %603 = arith.addf %599, %602 : vector<16x32xf32>
    %604 = vector.extract_strided_slice %584 {offsets = [0, 96], sizes = [16, 32], strides = [1, 1]} : vector<16x128xf32> to vector<16x32xf32>
    %605 = math.tanh %597 : vector<16x32xf32>
    %606 = arith.mulf %604, %605 : vector<16x32xf32>
    %607 = vector.extract_strided_slice %590 {offsets = [0, 96], sizes = [16, 32], strides = [1, 1]} : vector<16x128xf32> to vector<16x32xf32>
    %608 = math.tanh %603 : vector<16x32xf32>
    %609 = arith.mulf %607, %608 : vector<16x32xf32>
    %610 = tpu.concatenate %606, %609 in 1 : vector<16x32xf32>, vector<16x32xf32> -> vector<16x64xf32>
    %611 = arith.truncf %610 : vector<16x64xf32> to vector<16x64xbf16>
    %cst_165 = arith.constant dense<0.000000e+00> : vector<16x256xf32>
    %612 = tpu.matmul %611, %374, %cst_165 {dimension_numbers = #tpu.dot_dimension_numbers<[1], [0], [0], [1], [0, 0, 1, 1], [], []>} : vector<16x64xbf16>, vector<64x256xbf16>, vector<16x256xf32> -> vector<16x256xf32>
    %613 = vector.extract_strided_slice %612 {offsets = [0, 0], sizes = [16, 128], strides = [1, 1]} : vector<16x256xf32> to vector<16x128xf32>
    %c96_166 = arith.constant 96 : index
    %c0_167 = arith.constant 0 : index
    %614 = vector.load %arg15[%c96_166, %c0_167] : memref<128x128xf32, #tpu.memory_space<vmem>>, vector<16x128xf32>
    %615 = arith.addf %613, %614 : vector<16x128xf32>
    %616 = vector.extract_strided_slice %612 {offsets = [0, 128], sizes = [16, 128], strides = [1, 1]} : vector<16x256xf32> to vector<16x128xf32>
    %c16_168 = arith.constant 16 : index
    %c0_169 = arith.constant 0 : index
    %617 = vector.load %arg16[%c16_168, %c0_169] : memref<128x128xf32, #tpu.memory_space<vmem>>, vector<16x128xf32>
    %618 = arith.addf %616, %617 : vector<16x128xf32>
    %619 = arith.negf %615 : vector<16x128xf32>
    %620 = math.exp %619 : vector<16x128xf32>
    %cst_170 = arith.constant 1.000000e+00 : f32
    %621 = vector.broadcast %cst_170 : f32 to vector<16x128xf32>
    %622 = arith.addf %621, %620 : vector<16x128xf32>
    %623 = arith.divf %621, %622 : vector<16x128xf32>
    %624 = math.tanh %615 : vector<16x128xf32>
    %625 = arith.negf %618 : vector<16x128xf32>
    %626 = math.exp %625 : vector<16x128xf32>
    %cst_171 = arith.constant 1.000000e+00 : f32
    %627 = vector.broadcast %cst_171 : f32 to vector<16x128xf32>
    %628 = arith.addf %627, %626 : vector<16x128xf32>
    %629 = arith.divf %627, %628 : vector<16x128xf32>
    %630 = math.tanh %618 : vector<16x128xf32>
    %631 = vector.extract_strided_slice %623 {offsets = [0, 32], sizes = [16, 32], strides = [1, 1]} : vector<16x128xf32> to vector<16x32xf32>
    %632 = arith.mulf %631, %597 : vector<16x32xf32>
    %633 = vector.extract_strided_slice %623 {offsets = [0, 0], sizes = [16, 32], strides = [1, 1]} : vector<16x128xf32> to vector<16x32xf32>
    %634 = vector.extract_strided_slice %624 {offsets = [0, 64], sizes = [16, 32], strides = [1, 1]} : vector<16x128xf32> to vector<16x32xf32>
    %635 = arith.mulf %633, %634 : vector<16x32xf32>
    %636 = arith.addf %632, %635 : vector<16x32xf32>
    %637 = vector.extract_strided_slice %629 {offsets = [0, 32], sizes = [16, 32], strides = [1, 1]} : vector<16x128xf32> to vector<16x32xf32>
    %638 = arith.mulf %637, %603 : vector<16x32xf32>
    %639 = vector.extract_strided_slice %629 {offsets = [0, 0], sizes = [16, 32], strides = [1, 1]} : vector<16x128xf32> to vector<16x32xf32>
    %640 = vector.extract_strided_slice %630 {offsets = [0, 64], sizes = [16, 32], strides = [1, 1]} : vector<16x128xf32> to vector<16x32xf32>
    %641 = arith.mulf %639, %640 : vector<16x32xf32>
    %642 = arith.addf %638, %641 : vector<16x32xf32>
    %643 = vector.extract_strided_slice %623 {offsets = [0, 96], sizes = [16, 32], strides = [1, 1]} : vector<16x128xf32> to vector<16x32xf32>
    %644 = math.tanh %636 : vector<16x32xf32>
    %645 = arith.mulf %643, %644 : vector<16x32xf32>
    %646 = vector.extract_strided_slice %629 {offsets = [0, 96], sizes = [16, 32], strides = [1, 1]} : vector<16x128xf32> to vector<16x32xf32>
    %647 = math.tanh %642 : vector<16x32xf32>
    %648 = arith.mulf %646, %647 : vector<16x32xf32>
    %649 = tpu.concatenate %645, %648 in 1 : vector<16x32xf32>, vector<16x32xf32> -> vector<16x64xf32>
    %650 = arith.truncf %649 : vector<16x64xf32> to vector<16x64xbf16>
    %cst_172 = arith.constant dense<0.000000e+00> : vector<16x256xf32>
    %651 = tpu.matmul %650, %374, %cst_172 {dimension_numbers = #tpu.dot_dimension_numbers<[1], [0], [0], [1], [0, 0, 1, 1], [], []>} : vector<16x64xbf16>, vector<64x256xbf16>, vector<16x256xf32> -> vector<16x256xf32>
    %652 = vector.extract_strided_slice %651 {offsets = [0, 0], sizes = [16, 128], strides = [1, 1]} : vector<16x256xf32> to vector<16x128xf32>
    %c112_173 = arith.constant 112 : index
    %c0_174 = arith.constant 0 : index
    %653 = vector.load %arg15[%c112_173, %c0_174] : memref<128x128xf32, #tpu.memory_space<vmem>>, vector<16x128xf32>
    %654 = arith.addf %652, %653 : vector<16x128xf32>
    %655 = vector.extract_strided_slice %651 {offsets = [0, 128], sizes = [16, 128], strides = [1, 1]} : vector<16x256xf32> to vector<16x128xf32>
    %c0_175 = arith.constant 0 : index
    %c0_176 = arith.constant 0 : index
    %656 = vector.load %arg16[%c0_175, %c0_176] : memref<128x128xf32, #tpu.memory_space<vmem>>, vector<16x128xf32>
    %657 = arith.addf %655, %656 : vector<16x128xf32>
    %658 = arith.negf %654 : vector<16x128xf32>
    %659 = math.exp %658 : vector<16x128xf32>
    %cst_177 = arith.constant 1.000000e+00 : f32
    %660 = vector.broadcast %cst_177 : f32 to vector<16x128xf32>
    %661 = arith.addf %660, %659 : vector<16x128xf32>
    %662 = arith.divf %660, %661 : vector<16x128xf32>
    %663 = math.tanh %654 : vector<16x128xf32>
    %664 = arith.negf %657 : vector<16x128xf32>
    %665 = math.exp %664 : vector<16x128xf32>
    %cst_178 = arith.constant 1.000000e+00 : f32
    %666 = vector.broadcast %cst_178 : f32 to vector<16x128xf32>
    %667 = arith.addf %666, %665 : vector<16x128xf32>
    %668 = arith.divf %666, %667 : vector<16x128xf32>
    %669 = math.tanh %657 : vector<16x128xf32>
    %670 = vector.extract_strided_slice %662 {offsets = [0, 32], sizes = [16, 32], strides = [1, 1]} : vector<16x128xf32> to vector<16x32xf32>
    %671 = arith.mulf %670, %636 : vector<16x32xf32>
    %672 = vector.extract_strided_slice %662 {offsets = [0, 0], sizes = [16, 32], strides = [1, 1]} : vector<16x128xf32> to vector<16x32xf32>
    %673 = vector.extract_strided_slice %663 {offsets = [0, 64], sizes = [16, 32], strides = [1, 1]} : vector<16x128xf32> to vector<16x32xf32>
    %674 = arith.mulf %672, %673 : vector<16x32xf32>
    %675 = arith.addf %671, %674 : vector<16x32xf32>
    %676 = vector.extract_strided_slice %668 {offsets = [0, 32], sizes = [16, 32], strides = [1, 1]} : vector<16x128xf32> to vector<16x32xf32>
    %677 = arith.mulf %676, %642 : vector<16x32xf32>
    %678 = vector.extract_strided_slice %668 {offsets = [0, 0], sizes = [16, 32], strides = [1, 1]} : vector<16x128xf32> to vector<16x32xf32>
    %679 = vector.extract_strided_slice %669 {offsets = [0, 64], sizes = [16, 32], strides = [1, 1]} : vector<16x128xf32> to vector<16x32xf32>
    %680 = arith.mulf %678, %679 : vector<16x32xf32>
    %681 = arith.addf %677, %680 : vector<16x32xf32>
    %682 = vector.extract_strided_slice %662 {offsets = [0, 96], sizes = [16, 32], strides = [1, 1]} : vector<16x128xf32> to vector<16x32xf32>
    %683 = math.tanh %675 : vector<16x32xf32>
    %684 = arith.mulf %682, %683 : vector<16x32xf32>
    %685 = vector.extract_strided_slice %668 {offsets = [0, 96], sizes = [16, 32], strides = [1, 1]} : vector<16x128xf32> to vector<16x32xf32>
    %686 = math.tanh %681 : vector<16x32xf32>
    %687 = arith.mulf %685, %686 : vector<16x32xf32>
    %688 = tpu.concatenate %684, %687 in 1 : vector<16x32xf32>, vector<16x32xf32> -> vector<16x64xf32>
    %689 = arith.truncf %688 : vector<16x64xf32> to vector<16x64xbf16>
    %690 = vector.extract_strided_slice %689 {offsets = [0, 0], sizes = [8, 64], strides = [1, 1]} : vector<16x64xbf16> to vector<8x64xbf16>
    %691 = vector.extract_strided_slice %689 {offsets = [8, 0], sizes = [8, 64], strides = [1, 1]} : vector<16x64xbf16> to vector<8x64xbf16>
    %c0_179 = arith.constant 0 : index
    %c0_180 = arith.constant 0 : index
    %692 = vector.load %arg11[%c0_179, %c0_180] : memref<64x8xbf16, #tpu.memory_space<vmem>>, vector<64x8xbf16>
    %cst_181 = arith.constant dense<0.000000e+00> : vector<8x8xf32>
    %693 = tpu.matmul %690, %692, %cst_181 {dimension_numbers = #tpu.dot_dimension_numbers<[1], [0], [0], [1], [0, 0, 1, 1], [], []>} : vector<8x64xbf16>, vector<64x8xbf16>, vector<8x8xf32> -> vector<8x8xf32>
    %cst_182 = arith.constant 0.000000e+00 : f32
    %694 = vector.broadcast %cst_182 : f32 to vector<8x8xf32>
    %695 = arith.maximumf %693, %694 : vector<8x8xf32>
    %c0_183 = arith.constant 0 : index
    %c0_184 = arith.constant 0 : index
    %696 = vector.load %arg11[%c0_183, %c0_184] : memref<64x8xbf16, #tpu.memory_space<vmem>>, vector<64x8xbf16>
    %cst_185 = arith.constant dense<0.000000e+00> : vector<8x8xf32>
    %697 = tpu.matmul %691, %696, %cst_185 {dimension_numbers = #tpu.dot_dimension_numbers<[1], [0], [0], [1], [0, 0, 1, 1], [], []>} : vector<8x64xbf16>, vector<64x8xbf16>, vector<8x8xf32> -> vector<8x8xf32>
    %cst_186 = arith.constant 0.000000e+00 : f32
    %698 = vector.broadcast %cst_186 : f32 to vector<8x8xf32>
    %699 = arith.maximumf %697, %698 : vector<8x8xf32>
    %700 = arith.subf %695, %699 : vector<8x8xf32>
    %701 = arith.truncf %700 : vector<8x8xf32> to vector<8x8xbf16>
    %c0_187 = arith.constant 0 : index
    %c0_188 = arith.constant 0 : index
    %702 = vector.load %arg12[%c0_187, %c0_188] : memref<8x64xbf16, #tpu.memory_space<vmem>>, vector<8x64xbf16>
    %cst_189 = arith.constant dense<0.000000e+00> : vector<8x64xf32>
    %703 = tpu.matmul %701, %702, %cst_189 {dimension_numbers = #tpu.dot_dimension_numbers<[1], [0], [0], [1], [0, 0, 1, 1], [], []>} : vector<8x8xbf16>, vector<8x64xbf16>, vector<8x64xf32> -> vector<8x64xf32>
    %cst_190 = arith.constant 0.000000e+00 : f32
    %704 = vector.broadcast %cst_190 : f32 to vector<8x64xf32>
    %705 = arith.maximumf %703, %704 : vector<8x64xf32>
    %706 = arith.truncf %705 : vector<8x64xf32> to vector<8x64xbf16>
    %c0_191 = arith.constant 0 : index
    %c0_192 = arith.constant 0 : index
    %707 = vector.load %arg13[%c0_191, %c0_192] : memref<64x3xbf16, #tpu.memory_space<vmem>>, vector<64x3xbf16>
    %cst_193 = arith.constant dense<0.000000e+00> : vector<8x3xf32>
    %708 = tpu.matmul %706, %707, %cst_193 {dimension_numbers = #tpu.dot_dimension_numbers<[1], [0], [0], [1], [0, 0, 1, 1], [], []>} : vector<8x64xbf16>, vector<64x3xbf16>, vector<8x3xf32> -> vector<8x3xf32>
    %cst_194 = arith.constant 0.000000e+00 : f32
    %709 = vector.broadcast %cst_194 : f32 to vector<8x3xf32>
    %710 = arith.maximumf %708, %709 : vector<8x3xf32>
    %c0_195 = arith.constant 0 : index
    %c0_196 = arith.constant 0 : index
    %711 = vector.load %arg14[%c0_195, %c0_196] : memref<8x3xf32, #tpu.memory_space<vmem>>, vector<8x3xf32>
    tpu.vector_store %arg14[%c0_195, %c0_196], %710 {strides = array<i32>} : memref<8x3xf32, #tpu.memory_space<vmem>>, vector<8x3xf32>,
    return
  }
}

</mosaic_0001>

<llo_original>
// kernel: model_forward.1
$region0: #{model_forward.1}
  #allocation0 [shape = 'u32[]', space=smem, size = 0x4, offset = 0x4, fixed_abs, tag = 'smem constant byte address 0x4 - core index']
  #allocation1 [shape = 'u32[144,128]{1,0:T(1,128)}', space=vmem, size = 0x12000, scoped, tag = 'internal scratch']
  #allocation2 [shape = 'f32[128,128]{1,0:T(8,128)}', space=vmem, size = 0x10000, scoped, tag = 'scratch operand']
  #allocation3 [shape = 'f32[128,128]{1,0:T(8,128)}', space=vmem, size = 0x10000, scoped, tag = 'scratch operand']
  #allocation4 [shape = 'bf16[128,32]{1,0:T(8,128)(2,1)}', space=vmem, size = 0x8000, scoped, tag = 'scratch operand']
  #allocation5 [shape = 'bf16[128,32]{1,0:T(8,128)(2,1)}', space=vmem, size = 0x8000, scoped, tag = 'scratch operand']
  %s0 = inlined_call_operand.vmem [shape: bf16[128,16], index: 0, kind: input, shape index: {}]
  %s1 = inlined_call_operand.vmem [shape: bf16[16,128], index: 1, kind: input, shape index: {}]
  %s2 = inlined_call_operand.vmem [shape: bf16[16,128], index: 2, kind: input, shape index: {}]
  %s3 = inlined_call_operand.vmem [shape: bf16[64,256], index: 3, kind: input, shape index: {}]
  %s4 = inlined_call_operand.vmem [shape: f32[1,128], index: 4, kind: input, shape index: {}]
  %s5 = inlined_call_operand.vmem [shape: f32[1,128], index: 5, kind: input, shape index: {}]
  %s6 = inlined_call_operand.vmem [shape: bf16[64,128], index: 6, kind: input, shape index: {}]
  %s7 = inlined_call_operand.vmem [shape: bf16[64,128], index: 7, kind: input, shape index: {}]
  %s8 = inlined_call_operand.vmem [shape: bf16[64,256], index: 8, kind: input, shape index: {}]
  %s9 = inlined_call_operand.vmem [shape: f32[1,128], index: 9, kind: input, shape index: {}]
  %s10 = inlined_call_operand.vmem [shape: f32[1,128], index: 10, kind: input, shape index: {}]
  %s11 = inlined_call_operand.vmem [shape: bf16[64,8], index: 11, kind: input, shape index: {}]
  %s12 = inlined_call_operand.vmem [shape: bf16[8,64], index: 12, kind: input, shape index: {}]
  %s13 = inlined_call_operand.vmem [shape: bf16[64,3], index: 13, kind: input, shape index: {}]
  %s14 = inlined_call_operand.vmem [shape: f32[8,3], index: 14, kind: output, shape index: {}]
  %s15 = sld [smem:[#allocation0]]
  $region66: #{model_forward.1} parent=0
    _
  %s17 = ssub.s32 1, %s15
  %s18 = scalar_select 0, %s17, %s15
  // Predicated region
  $region2: #{model_forward.1} parent=0 // pred_check
    _
  $region3: #{model_forward.1} parent=0 // pred_check_branch
    %20 = sbr.rel (0) target = $region5
  $region4: #{model_forward.1} parent=0 // pred_region
    _
  $region5: #{model_forward.1} parent=0 // pred_fallthru
    _
  // Predicated region
  $region6: #{model_forward.1} parent=0 // pred_check
    _
  $region7: #{model_forward.1} parent=0 // pred_check_branch
    %22 = sbr.rel (0) target = $region9
  $region8: #{model_forward.1} parent=0 // pred_region
    _
  $region9: #{model_forward.1} parent=0 // pred_fallthru
    _
  // Predicated region
  $region10: #{model_forward.1} parent=0 // pred_check
    _
  $region11: #{model_forward.1} parent=0 // pred_check_branch
    %24 = sbr.rel (0) target = $region13
  $region12: #{model_forward.1} parent=0 // pred_region
    _
  $region13: #{model_forward.1} parent=0 // pred_fallthru
    _
  // Predicated region
  $region14: #{model_forward.1} parent=0 // pred_check
    _
  $region15: #{model_forward.1} parent=0 // pred_check_branch
    %26 = sbr.rel (0) target = $region17
  $region16: #{model_forward.1} parent=0 // pred_region
    _
  $region17: #{model_forward.1} parent=0 // pred_fallthru
    _
  // Predicated region
  $region18: #{model_forward.1} parent=0 // pred_check
    _
  $region19: #{model_forward.1} parent=0 // pred_check_branch
    %28 = sbr.rel (0) target = $region21
  $region20: #{model_forward.1} parent=0 // pred_region
    _
  $region21: #{model_forward.1} parent=0 // pred_fallthru
    _
  // Predicated region
  $region22: #{model_forward.1} parent=0 // pred_check
    _
  $region23: #{model_forward.1} parent=0 // pred_check_branch
    %30 = sbr.rel (0) target = $region25
  $region24: #{model_forward.1} parent=0 // pred_region
    _
  $region25: #{model_forward.1} parent=0 // pred_fallthru
    _
  // Predicated region
  $region26: #{model_forward.1} parent=0 // pred_check
    _
  $region27: #{model_forward.1} parent=0 // pred_check_branch
    %32 = sbr.rel (0) target = $region29
  $region28: #{model_forward.1} parent=0 // pred_region
    _
  $region29: #{model_forward.1} parent=0 // pred_fallthru
    _
  // Predicated region
  $region30: #{model_forward.1} parent=0 // pred_check
    _
  $region31: #{model_forward.1} parent=0 // pred_check_branch
    %34 = sbr.rel (0) target = $region33
  $region32: #{model_forward.1} parent=0 // pred_region
    _
  $region33: #{model_forward.1} parent=0 // pred_fallthru
    _
  // Predicated region
  $region34: #{model_forward.1} parent=0 // pred_check
    _
  $region35: #{model_forward.1} parent=0 // pred_check_branch
    %36 = sbr.rel (0) target = $region37
  $region36: #{model_forward.1} parent=0 // pred_region
    _
  $region37: #{model_forward.1} parent=0 // pred_fallthru
    _
  // Predicated region
  $region38: #{model_forward.1} parent=0 // pred_check
    _
  $region39: #{model_forward.1} parent=0 // pred_check_branch
    %38 = sbr.rel (0) target = $region41
  $region40: #{model_forward.1} parent=0 // pred_region
    _
  $region41: #{model_forward.1} parent=0 // pred_fallthru
    _
  // Predicated region
  $region42: #{model_forward.1} parent=0 // pred_check
    _
  $region43: #{model_forward.1} parent=0 // pred_check_branch
    %40 = sbr.rel (0) target = $region45
  $region44: #{model_forward.1} parent=0 // pred_region
    _
  $region45: #{model_forward.1} parent=0 // pred_fallthru
    _
  // Predicated region
  $region46: #{model_forward.1} parent=0 // pred_check
    _
  $region47: #{model_forward.1} parent=0 // pred_check_branch
    %42 = sbr.rel (0) target = $region49
  $region48: #{model_forward.1} parent=0 // pred_region
    _
  $region49: #{model_forward.1} parent=0 // pred_fallthru
    _
  // Predicated region
  $region50: #{model_forward.1} parent=0 // pred_check
    _
  $region51: #{model_forward.1} parent=0 // pred_check_branch
    %44 = sbr.rel (0) target = $region53
  $region52: #{model_forward.1} parent=0 // pred_region
    _
  $region53: #{model_forward.1} parent=0 // pred_fallthru
    _
  // Predicated region
  $region54: #{model_forward.1} parent=0 // pred_check
    _
  $region55: #{model_forward.1} parent=0 // pred_check_branch
    %46 = sbr.rel (0) target = $region57
  $region56: #{model_forward.1} parent=0 // pred_region
    _
  $region57: #{model_forward.1} parent=0 // pred_fallthru
    _
  %v48 = vld [vmem:[%s0] sm:$0xf]
  %v49 = vld [vmem:[%s0 + $0x4] sm:$0xf]
  %v50 = vld [vmem:[%s0 + $0x8] sm:$0xf]
  %v51 = vld [vmem:[%s0 + $0xc] sm:$0xf]
  %v52 = vld [vmem:[%s0 + $0x10] sm:$0xf]
  %v53 = vld [vmem:[%s0 + $0x14] sm:$0xf]
  %v54 = vld [vmem:[%s0 + $0x18] sm:$0xf]
  %v55 = vld [vmem:[%s0 + $0x1c] sm:$0xf]
  %v56 = vld [vmem:[%s0 + $0x20] sm:$0xf]
  %v57 = vld [vmem:[%s0 + $0x24] sm:$0xf]
  %v58 = vld [vmem:[%s0 + $0x28] sm:$0xf]
  %v59 = vld [vmem:[%s0 + $0x2c] sm:$0xf]
  %v60 = vld [vmem:[%s0 + $0x30] sm:$0xf]
  %v61 = vld [vmem:[%s0 + $0x34] sm:$0xf]
  %v62 = vld [vmem:[%s0 + $0x38] sm:$0xf]
  %v63 = vld [vmem:[%s0 + $0x3c] sm:$0xf]
  %v64 = vld [vmem:[%s1] sm:$0xf]
  %v65 = vld [vmem:[%s1 + $0x4] sm:$0xf]
  %v66 = vld [vmem:[%s4] sm:$0x1]
  %v68 = vlaneseq
  %v69 = vshrl.u32 %v68, 7
  %v70 = vsub.s32 0, %v69
  %v71 = vrot.slane %v66, %v70
  %v89 = vunpack.c.l.b16 %v48
  %v90 = vunpack.c.l.b16 %v49
  %v91 = vunpack.c.l.b16 %v50
  %v92 = vunpack.c.l.b16 %v51
  %v93 = vunpack.c.l.b16 %v52
  %v94 = vunpack.c.l.b16 %v53
  %v95 = vunpack.c.l.b16 %v54
  %v96 = vunpack.c.l.b16 %v55
  %v97 = vunpack.c.l.b16 %v56
  %v98 = vunpack.c.l.b16 %v57
  %v99 = vunpack.c.l.b16 %v58
  %v100 = vunpack.c.l.b16 %v59
  %v101 = vunpack.c.l.b16 %v60
  %v102 = vunpack.c.l.b16 %v61
  %v103 = vunpack.c.l.b16 %v62
  %v104 = vunpack.c.l.b16 %v63
  %v105 = vpack.c.b16 %v90, %v89
  %v106 = vpack.c.b16 %v92, %v91
  %v107 = vpack.c.b16 %v94, %v93
  %v108 = vpack.c.b16 %v96, %v95
  %v109 = vpack.c.b16 %v98, %v97
  %v110 = vpack.c.b16 %v100, %v99
  %v111 = vpack.c.b16 %v102, %v101
  %v112 = vpack.c.b16 %v104, %v103
  %v115 = vunpack.c.l.b16 %v64
  %v116 = vunpack.c.l.b16 %v65
  %v117 = vpack.c.b16 %v116, %v115
  %vm119 = vcmask 130048
  %v121 = vsel %vm119, %v105, 0
  %v124 = vsel %vm119, %v106, 0
  %v127 = vsel %vm119, %v107, 0
  %v130 = vsel %vm119, %v108, 0
  %v133 = vsel %vm119, %v109, 0
  %v136 = vsel %vm119, %v110, 0
  %v139 = vsel %vm119, %v111, 0
  %v142 = vsel %vm119, %v112, 0
  %144 = vmatprep.subr.bf16.mxu0 0
  %145 = vmatpush1.bf16.msra.mxu0 0
  %146 = vmatprep.subr.bf16.mxu0 0
  %147 = vmatpush1.bf16.msra.mxu0 0
  %148 = vmatprep.subr.bf16.mxu0 0
  %149 = vmatpush1.bf16.msra.mxu0 0
  %150 = vmatprep.subr.bf16.mxu0 0
  %151 = vmatpush1.bf16.msra.mxu0 0
  %152 = vmatprep.subr.bf16.mxu0 0
  %153 = vmatpush1.bf16.msra.mxu0 0
  %154 = vmatprep.subr.bf16.mxu0 0
  %155 = vmatpush1.bf16.msra.mxu0 0
  %156 = vmatprep.subr.bf16.mxu0 0
  %157 = vmatpush1.bf16.msra.mxu0 0
  %158 = vmatprep.subr.bf16.mxu0 0
  %159 = vmatpush1.bf16.msra.mxu0 %v117
  %160 = vmatprep.subr.bf16.mxu0 0
  %161 = vmatpush2.bf16.msra.mxu0 0
  %162 = vmatprep.subr.bf16.mxu0 0
  %163 = vmatpush2.bf16.msra.mxu0 0
  %164 = vmatprep.subr.bf16.mxu0 0
  %165 = vmatpush2.bf16.msra.mxu0 0
  %166 = vmatprep.subr.bf16.mxu0 0
  %167 = vmatpush2.bf16.msra.mxu0 0
  %168 = vmatprep.subr.bf16.mxu0 0
  %169 = vmatpush2.bf16.msra.mxu0 0
  %170 = vmatprep.subr.bf16.mxu0 0
  %171 = vmatpush2.bf16.msra.mxu0 0
  %172 = vmatprep.subr.bf16.mxu0 0
  %173 = vmatpush2.bf16.msra.mxu0 0
  %174 = vmatprep.subr.bf16.mxu0 0
  %175 = vmatpush2.bf16.msra.mxu0 0
  %176 = vmatprep.mubr.bf16.mxu0 0
  %177 = vmatmul.mubr.bf16.gmra.mxu0 %v121
  %v178 = vpop.f32.mrf.mxu0
  %v179 = vadd.f32 %v71, %v178
  %v180 = vpop.f32.mrf.mxu0
  %v181 = vpop.f32.mrf.mxu0
  %v182 = vadd.f32 %v71, %v181
  %v183 = vpop.f32.mrf.mxu0
  %184 = vmatprep.mubr.bf16.mxu0 0
  %185 = vmatmul.mubr.bf16.gmra.mxu0 %v124
  %v186 = vpop.f32.mrf.mxu0
  %v187 = vadd.f32 %v71, %v186
  %v188 = vpop.f32.mrf.mxu0
  %v189 = vpop.f32.mrf.mxu0
  %v190 = vadd.f32 %v71, %v189
  %v191 = vpop.f32.mrf.mxu0
  %192 = vmatprep.mubr.bf16.mxu0 0
  %193 = vmatmul.mubr.bf16.gmra.mxu0 %v127
  %v194 = vpop.f32.mrf.mxu0
  %v195 = vadd.f32 %v71, %v194
  %v196 = vpop.f32.mrf.mxu0
  %v197 = vpop.f32.mrf.mxu0
  %v198 = vadd.f32 %v71, %v197
  %v199 = vpop.f32.mrf.mxu0
  %200 = vmatprep.mubr.bf16.mxu0 0
  %201 = vmatmul.mubr.bf16.gmra.mxu0 %v130
  %v202 = vpop.f32.mrf.mxu0
  %v203 = vadd.f32 %v71, %v202
  %v204 = vpop.f32.mrf.mxu0
  %v205 = vpop.f32.mrf.mxu0
  %v206 = vadd.f32 %v71, %v205
  %v207 = vpop.f32.mrf.mxu0
  %208 = vmatprep.mubr.bf16.mxu0 0
  %209 = vmatmul.mubr.bf16.gmra.mxu0 %v133
  %v210 = vpop.f32.mrf.mxu0
  %v211 = vadd.f32 %v71, %v210
  %v212 = vpop.f32.mrf.mxu0
  %v213 = vpop.f32.mrf.mxu0
  %v214 = vadd.f32 %v71, %v213
  %v215 = vpop.f32.mrf.mxu0
  %216 = vmatprep.mubr.bf16.mxu0 0
  %217 = vmatmul.mubr.bf16.gmra.mxu0 %v136
  %v218 = vpop.f32.mrf.mxu0
  %v219 = vadd.f32 %v71, %v218
  %v220 = vpop.f32.mrf.mxu0
  %v221 = vpop.f32.mrf.mxu0
  %v222 = vadd.f32 %v71, %v221
  %v223 = vpop.f32.mrf.mxu0
  %224 = vmatprep.mubr.bf16.mxu0 0
  %225 = vmatmul.mubr.bf16.gmra.mxu0 %v139
  %v226 = vpop.f32.mrf.mxu0
  %v227 = vadd.f32 %v71, %v226
  %v228 = vpop.f32.mrf.mxu0
  %v229 = vpop.f32.mrf.mxu0
  %v230 = vadd.f32 %v71, %v229
  %v231 = vpop.f32.mrf.mxu0
  %232 = vmatprep.mubr.bf16.mxu0 0
  %233 = vmatmul.mubr.bf16.gmra.mxu0 %v142
  %v234 = vpop.f32.mrf.mxu0
  %v235 = vadd.f32 %v71, %v234
  %v236 = vpop.f32.mrf.mxu0
  %v237 = vpop.f32.mrf.mxu0
  %v238 = vadd.f32 %v71, %v237
  %v239 = vpop.f32.mrf.mxu0
  %240 = vdwg.mxu0
  %241 = vst [vmem:[#allocation2] sm:$0xff] %v179
  %242 = vst [vmem:[#allocation2 + $0x8] sm:$0xff] %v182
  %243 = vst [vmem:[#allocation2 + $0x10] sm:$0xff] %v187
  %244 = vst [vmem:[#allocation2 + $0x18] sm:$0xff] %v190
  %245 = vst [vmem:[#allocation2 + $0x20] sm:$0xff] %v195
  %246 = vst [vmem:[#allocation2 + $0x28] sm:$0xff] %v198
  %247 = vst [vmem:[#allocation2 + $0x30] sm:$0xff] %v203
  %248 = vst [vmem:[#allocation2 + $0x38] sm:$0xff] %v206
  %249 = vst [vmem:[#allocation2 + $0x40] sm:$0xff] %v211
  %250 = vst [vmem:[#allocation2 + $0x48] sm:$0xff] %v214
  %251 = vst [vmem:[#allocation2 + $0x50] sm:$0xff] %v219
  %252 = vst [vmem:[#allocation2 + $0x58] sm:$0xff] %v222
  %253 = vst [vmem:[#allocation2 + $0x60] sm:$0xff] %v227
  %254 = vst [vmem:[#allocation2 + $0x68] sm:$0xff] %v230
  %255 = vst [vmem:[#allocation2 + $0x70] sm:$0xff] %v235
  %256 = vst [vmem:[#allocation2 + $0x78] sm:$0xff] %v238
  %v257 = vld [vmem:[%s2] sm:$0xf]
  %v258 = vld [vmem:[%s2 + $0x4] sm:$0xf]
  %v259 = vld [vmem:[%s5] sm:$0x1]
  %v261 = vlaneseq
  %v262 = vshrl.u32 %v261, 7
  %v263 = vsub.s32 0, %v262
  %v264 = vrot.slane %v259, %v263
  %v268 = vunpack.c.l.b16 %v257
  %v269 = vunpack.c.l.b16 %v258
  %v270 = vpack.c.b16 %v269, %v268
  %272 = vmatprep.subr.bf16.mxu0 0
  %273 = vmatpush1.bf16.msra.mxu0 0
  %274 = vmatprep.subr.bf16.mxu0 0
  %275 = vmatpush1.bf16.msra.mxu0 0
  %276 = vmatprep.subr.bf16.mxu0 0
  %277 = vmatpush1.bf16.msra.mxu0 0
  %278 = vmatprep.subr.bf16.mxu0 0
  %279 = vmatpush1.bf16.msra.mxu0 0
  %280 = vmatprep.subr.bf16.mxu0 0
  %281 = vmatpush1.bf16.msra.mxu0 0
  %282 = vmatprep.subr.bf16.mxu0 0
  %283 = vmatpush1.bf16.msra.mxu0 0
  %284 = vmatprep.subr.bf16.mxu0 0
  %285 = vmatpush1.bf16.msra.mxu0 0
  %286 = vmatprep.subr.bf16.mxu0 0
  %287 = vmatpush1.bf16.msra.mxu0 %v270
  %288 = vmatprep.subr.bf16.mxu0 0
  %289 = vmatpush2.bf16.msra.mxu0 0
  %290 = vmatprep.subr.bf16.mxu0 0
  %291 = vmatpush2.bf16.msra.mxu0 0
  %292 = vmatprep.subr.bf16.mxu0 0
  %293 = vmatpush2.bf16.msra.mxu0 0
  %294 = vmatprep.subr.bf16.mxu0 0
  %295 = vmatpush2.bf16.msra.mxu0 0
  %296 = vmatprep.subr.bf16.mxu0 0
  %297 = vmatpush2.bf16.msra.mxu0 0
  %298 = vmatprep.subr.bf16.mxu0 0
  %299 = vmatpush2.bf16.msra.mxu0 0
  %300 = vmatprep.subr.bf16.mxu0 0
  %301 = vmatpush2.bf16.msra.mxu0 0
  %302 = vmatprep.subr.bf16.mxu0 0
  %303 = vmatpush2.bf16.msra.mxu0 0
  %304 = vmatprep.mubr.bf16.mxu0 0
  %305 = vmatmul.mubr.bf16.gmra.mxu0 %v121
  %v306 = vpop.f32.mrf.mxu0
  %v307 = vadd.f32 %v264, %v306
  %v308 = vpop.f32.mrf.mxu0
  %v309 = vpop.f32.mrf.mxu0
  %v310 = vadd.f32 %v264, %v309
  %v311 = vpop.f32.mrf.mxu0
  %312 = vmatprep.mubr.bf16.mxu0 0
  %313 = vmatmul.mubr.bf16.gmra.mxu0 %v124
  %v314 = vpop.f32.mrf.mxu0
  %v315 = vadd.f32 %v264, %v314
  %v316 = vpop.f32.mrf.mxu0
  %v317 = vpop.f32.mrf.mxu0
  %v318 = vadd.f32 %v264, %v317
  %v319 = vpop.f32.mrf.mxu0
  %320 = vmatprep.mubr.bf16.mxu0 0
  %321 = vmatmul.mubr.bf16.gmra.mxu0 %v127
  %v322 = vpop.f32.mrf.mxu0
  %v323 = vadd.f32 %v264, %v322
  %v324 = vpop.f32.mrf.mxu0
  %v325 = vpop.f32.mrf.mxu0
  %v326 = vadd.f32 %v264, %v325
  %v327 = vpop.f32.mrf.mxu0
  %328 = vmatprep.mubr.bf16.mxu0 0
  %329 = vmatmul.mubr.bf16.gmra.mxu0 %v130
  %v330 = vpop.f32.mrf.mxu0
  %v331 = vadd.f32 %v264, %v330
  %v332 = vpop.f32.mrf.mxu0
  %v333 = vpop.f32.mrf.mxu0
  %v334 = vadd.f32 %v264, %v333
  %v335 = vpop.f32.mrf.mxu0
  %336 = vmatprep.mubr.bf16.mxu0 0
  %337 = vmatmul.mubr.bf16.gmra.mxu0 %v133
  %v338 = vpop.f32.mrf.mxu0
  %v339 = vadd.f32 %v264, %v338
  %v340 = vpop.f32.mrf.mxu0
  %v341 = vpop.f32.mrf.mxu0
  %v342 = vadd.f32 %v264, %v341
  %v343 = vpop.f32.mrf.mxu0
  %344 = vmatprep.mubr.bf16.mxu0 0
  %345 = vmatmul.mubr.bf16.gmra.mxu0 %v136
  %v346 = vpop.f32.mrf.mxu0
  %v347 = vadd.f32 %v264, %v346
  %v348 = vpop.f32.mrf.mxu0
  %v349 = vpop.f32.mrf.mxu0
  %v350 = vadd.f32 %v264, %v349
  %v351 = vpop.f32.mrf.mxu0
  %352 = vmatprep.mubr.bf16.mxu0 0
  %353 = vmatmul.mubr.bf16.gmra.mxu0 %v139
  %v354 = vpop.f32.mrf.mxu0
  %v355 = vadd.f32 %v264, %v354
  %v356 = vpop.f32.mrf.mxu0
  %v357 = vpop.f32.mrf.mxu0
  %v358 = vadd.f32 %v264, %v357
  %v359 = vpop.f32.mrf.mxu0
  %360 = vmatprep.mubr.bf16.mxu0 0
  %361 = vmatmul.mubr.bf16.gmra.mxu0 %v142
  %v362 = vpop.f32.mrf.mxu0
  %v363 = vadd.f32 %v264, %v362
  %v364 = vpop.f32.mrf.mxu0
  %v365 = vpop.f32.mrf.mxu0
  %v366 = vadd.f32 %v264, %v365
  %v367 = vpop.f32.mrf.mxu0
  %368 = vdwg.mxu0
  %369 = vst [vmem:[#allocation3] sm:$0xff] %v307
  %370 = vst [vmem:[#allocation3 + $0x8] sm:$0xff] %v310
  %371 = vst [vmem:[#allocation3 + $0x10] sm:$0xff] %v315
  %372 = vst [vmem:[#allocation3 + $0x18] sm:$0xff] %v318
  %373 = vst [vmem:[#allocation3 + $0x20] sm:$0xff] %v323
  %374 = vst [vmem:[#allocation3 + $0x28] sm:$0xff] %v326
  %375 = vst [vmem:[#allocation3 + $0x30] sm:$0xff] %v331
  %376 = vst [vmem:[#allocation3 + $0x38] sm:$0xff] %v334
  %377 = vst [vmem:[#allocation3 + $0x40] sm:$0xff] %v339
  %378 = vst [vmem:[#allocation3 + $0x48] sm:$0xff] %v342
  %379 = vst [vmem:[#allocation3 + $0x50] sm:$0xff] %v347
  %380 = vst [vmem:[#allocation3 + $0x58] sm:$0xff] %v350
  %381 = vst [vmem:[#allocation3 + $0x60] sm:$0xff] %v355
  %382 = vst [vmem:[#allocation3 + $0x68] sm:$0xff] %v358
  %383 = vst [vmem:[#allocation3 + $0x70] sm:$0xff] %v363
  %384 = vst [vmem:[#allocation3 + $0x78] sm:$0xff] %v366
  %v385 = vld [vmem:[%s3] sm:$0xff]
  %v386 = vld [vmem:[%s3 + $0x8] sm:$0xff]
  %v387 = vld [vmem:[%s3 + $0x10] sm:$0xff]
  %v388 = vld [vmem:[%s3 + $0x18] sm:$0xff]
  %v389 = vld [vmem:[%s3 + $0x20] sm:$0xff]
  %v390 = vld [vmem:[%s3 + $0x28] sm:$0xff]
  %v391 = vld [vmem:[%s3 + $0x30] sm:$0xff]
  %v392 = vld [vmem:[%s3 + $0x38] sm:$0xff]
  %v401 = vunpack.c.l.b16 %v385
  %v402 = vunpack.c.h.b16 %v385
  %v403 = vunpack.c.l.b16 %v386
  %v404 = vunpack.c.h.b16 %v386
  %v405 = vunpack.c.l.b16 %v387
  %v406 = vunpack.c.h.b16 %v387
  %v407 = vunpack.c.l.b16 %v388
  %v408 = vunpack.c.h.b16 %v388
  %v409 = vunpack.c.l.b16 %v389
  %v410 = vunpack.c.h.b16 %v389
  %v411 = vunpack.c.l.b16 %v390
  %v412 = vunpack.c.h.b16 %v390
  %v413 = vunpack.c.l.b16 %v391
  %v414 = vunpack.c.h.b16 %v391
  %v415 = vunpack.c.l.b16 %v392
  %v416 = vunpack.c.h.b16 %v392
  %v417 = vpack.c.b16 %v403, %v401
  %v418 = vpack.c.b16 %v404, %v402
  %v419 = vpack.c.b16 %v407, %v405
  %v420 = vpack.c.b16 %v408, %v406
  %v421 = vpack.c.b16 %v411, %v409
  %v422 = vpack.c.b16 %v412, %v410
  %v423 = vpack.c.b16 %v415, %v413
  %v424 = vpack.c.b16 %v416, %v414
  %vm433 = vcmask 523264
  %v435 = vsel %vm433, 0, 0
  %437 = vmatprep.subr.bf16.mxu0 0
  %438 = vmatpush1.bf16.msra.mxu0 0
  %439 = vmatprep.subr.bf16.mxu0 0
  %440 = vmatpush1.bf16.msra.mxu0 0
  %441 = vmatprep.subr.bf16.mxu0 0
  %442 = vmatpush1.bf16.msra.mxu0 0
  %443 = vmatprep.subr.bf16.mxu0 0
  %444 = vmatpush1.bf16.msra.mxu0 0
  %445 = vmatprep.subr.bf16.mxu0 %v424
  %446 = vmatpush1.bf16.msra.mxu0 %v423
  %447 = vmatprep.subr.bf16.mxu0 %v422
  %448 = vmatpush1.bf16.msra.mxu0 %v421
  %449 = vmatprep.subr.bf16.mxu0 %v420
  %450 = vmatpush1.bf16.msra.mxu0 %v419
  %451 = vmatprep.subr.bf16.mxu0 %v418
  %452 = vmatpush1.bf16.msra.mxu0 %v417
  %453 = vmatprep.subr.bf16.mxu0 0
  %454 = vmatpush2.bf16.msra.mxu0 0
  %455 = vmatprep.subr.bf16.mxu0 0
  %456 = vmatpush2.bf16.msra.mxu0 0
  %457 = vmatprep.subr.bf16.mxu0 0
  %458 = vmatpush2.bf16.msra.mxu0 0
  %459 = vmatprep.subr.bf16.mxu0 0
  %460 = vmatpush2.bf16.msra.mxu0 0
  %461 = vmatprep.subr.bf16.mxu0 0
  %462 = vmatpush2.bf16.msra.mxu0 0
  %463 = vmatprep.subr.bf16.mxu0 0
  %464 = vmatpush2.bf16.msra.mxu0 0
  %465 = vmatprep.subr.bf16.mxu0 0
  %466 = vmatpush2.bf16.msra.mxu0 0
  %467 = vmatprep.subr.bf16.mxu0 0
  %468 = vmatpush2.bf16.msra.mxu0 0
  %469 = vmatprep.mubr.bf16.mxu0 0
  %470 = vmatmul.mubr.bf16.gmra.mxu0 %v435
  %v471 = vpop.f32.mrf.mxu0
  %v472 = vadd.f32 0.0, %v471
  %v473 = vpop.f32.mrf.mxu0
  %v474 = vadd.f32 0.0, %v473
  %v475 = vpop.f32.mrf.mxu0
  %v476 = vadd.f32 0.0, %v475
  %v477 = vpop.f32.mrf.mxu0
  %v478 = vadd.f32 0.0, %v477
  %479 = vdwg.mxu0
  %v480 = vld [vmem:[#allocation2] sm:$0xff]
  %v481 = vld [vmem:[#allocation2 + $0x8] sm:$0xff]
  %v482 = vadd.f32 %v472, %v480
  %v483 = vadd.f32 %v476, %v481
  %v484 = vld [vmem:[#allocation3 + $0x70] sm:$0xff]
  %v485 = vld [vmem:[#allocation3 + $0x78] sm:$0xff]
  %v486 = vadd.f32 %v474, %v484
  %v487 = vadd.f32 %v478, %v485
  %v488 = vxor.u32 %v482, 2147483648
  %v489 = vxor.u32 %v483, 2147483648
  %v490 = vmul.f32 %v488, 1.442695
  %v491 = vpow.pop %v490
  %v492 = vmul.f32 %v489, 1.442695
  %v493 = vpow.pop %v492
  %v494 = vadd.f32 %v491, 1.0
  %v495 = vadd.f32 %v493, 1.0
  %v496 = vrcp.pop %v494
  %v497 = vmul.f32 1.0, %v496
  %v498 = vrcp.pop %v495
  %v499 = vmul.f32 1.0, %v498
  %v500 = vtanh.pop %v482
  %v501 = vtanh.pop %v483
  %v502 = vxor.u32 %v486, 2147483648
  %v503 = vxor.u32 %v487, 2147483648
  %v504 = vmul.f32 %v502, 1.442695
  %v505 = vpow.pop %v504
  %v506 = vmul.f32 %v503, 1.442695
  %v507 = vpow.pop %v506
  %v508 = vadd.f32 %v505, 1.0
  %v509 = vadd.f32 %v507, 1.0
  %v510 = vrcp.pop %v508
  %v511 = vmul.f32 1.0, %v510
  %v512 = vrcp.pop %v509
  %v513 = vmul.f32 1.0, %v512
  %v514 = vtanh.pop %v486
  %v515 = vtanh.pop %v487
  %v516 = vmul.f32 %v497, 0.0
  %v517 = vmul.f32 %v499, 0.0
  %520 = vrot.lane.b32.xlu0 %v500, 64
  %v521 = vpop.permute.xlu0 %520
  %522 = vrot.lane.b32.xlu0 %v501, 64
  %v523 = vpop.permute.xlu0 %522
  %v526 = vmul.f32 %v497, %v521
  %v527 = vmul.f32 %v499, %v523
  %530 = vrot.lane.b32.xlu0 %v526, 32
  %v531 = vpop.permute.xlu0 %530
  %532 = vrot.lane.b32.xlu0 %v527, 32
  %v533 = vpop.permute.xlu0 %532
  %v536 = vadd.f32 %v516, %v531
  %v537 = vadd.f32 %v517, %v533
  %v538 = vmul.f32 %v511, 0.0
  %v539 = vmul.f32 %v513, 0.0
  %542 = vrot.lane.b32.xlu0 %v514, 64
  %v543 = vpop.permute.xlu0 %542
  %544 = vrot.lane.b32.xlu0 %v515, 64
  %v545 = vpop.permute.xlu0 %544
  %v548 = vmul.f32 %v511, %v543
  %v549 = vmul.f32 %v513, %v545
  %552 = vrot.lane.b32.xlu0 %v548, 32
  %v553 = vpop.permute.xlu0 %552
  %554 = vrot.lane.b32.xlu0 %v549, 32
  %v555 = vpop.permute.xlu0 %554
  %v558 = vadd.f32 %v538, %v553
  %v559 = vadd.f32 %v539, %v555
  %v560 = vtanh.pop %v536
  %v561 = vtanh.pop %v537
  %564 = vrot.lane.b32.xlu0 %v560, 64
  %v565 = vpop.permute.xlu0 %564
  %566 = vrot.lane.b32.xlu0 %v561, 64
  %v567 = vpop.permute.xlu0 %566
  %v570 = vmul.f32 %v497, %v565
  %v571 = vmul.f32 %v499, %v567
  %v572 = vtanh.pop %v558
  %v573 = vtanh.pop %v559
  %576 = vrot.lane.b32.xlu0 %v572, 64
  %v577 = vpop.permute.xlu0 %576
  %578 = vrot.lane.b32.xlu0 %v573, 64
  %v579 = vpop.permute.xlu0 %578
  %v582 = vmul.f32 %v511, %v577
  %v583 = vmul.f32 %v513, %v579
  %586 = vrot.lane.b32.xlu0 %v570, 32
  %v587 = vpop.permute.xlu0 %586
  %588 = vrot.lane.b32.xlu0 %v571, 32
  %v589 = vpop.permute.xlu0 %588
  %594 = vrot.lane.b32.xlu0 %v582, 64
  %v595 = vpop.permute.xlu0 %594
  %596 = vrot.lane.b32.xlu0 %v583, 64
  %v597 = vpop.permute.xlu0 %596
  %vm600 = vcmask 261120
  %v601 = vsel %vm600, %v587, %v595
  %v602 = vsel %vm600, %v589, %v597
  %v603 = vpack.c.bf16 %v602, %v601
  %v604 = vpack.c.bf16 %v571, %v570
  %v606 = vunpack.c.l.b16 %v604
  %v607 = vunpack.c.h.b16 %v604
  %v608 = vpack.c.b16 %v606, %v606
  %v609 = vpack.c.b16 %v607, %v607
  %610 = vrot.lane.b32.xlu0 %v608, 32
  %v611 = vpop.permute.xlu0 %610
  %612 = vrot.lane.b32.xlu0 %v609, 32
  %v613 = vpop.permute.xlu0 %612
  %vm616 = vcmask 257024
  %617 = vst.msk [vmem:[#allocation4] sm:$0xf] %vm616, %v611
  %618 = vst.msk [vmem:[#allocation4 + $0x4] sm:$0xf] %vm616, %v613
  %v619 = vpack.c.bf16 %v583, %v582
  %v621 = vunpack.c.l.b16 %v619
  %v622 = vunpack.c.h.b16 %v619
  %v623 = vpack.c.b16 %v621, %v621
  %v624 = vpack.c.b16 %v622, %v622
  %625 = vrot.lane.b32.xlu0 %v623, 32
  %v626 = vpop.permute.xlu0 %625
  %627 = vrot.lane.b32.xlu0 %v624, 32
  %v628 = vpop.permute.xlu0 %627
  %631 = vst.msk [vmem:[#allocation5 + $0x38] sm:$0xf] %vm616, %v626
  %632 = vst.msk [vmem:[#allocation5 + $0x3c] sm:$0xf] %vm616, %v628
  %v634 = vsel %vm433, %v603, 0
  %636 = vmatprep.subr.bf16.mxu0 0
  %637 = vmatpush1.bf16.msra.mxu0 0
  %638 = vmatprep.subr.bf16.mxu0 0
  %639 = vmatpush1.bf16.msra.mxu0 0
  %640 = vmatprep.subr.bf16.mxu0 0
  %641 = vmatpush1.bf16.msra.mxu0 0
  %642 = vmatprep.subr.bf16.mxu0 0
  %643 = vmatpush1.bf16.msra.mxu0 0
  %644 = vmatprep.subr.bf16.mxu0 %v424
  %645 = vmatpush1.bf16.msra.mxu0 %v423
  %646 = vmatprep.subr.bf16.mxu0 %v422
  %647 = vmatpush1.bf16.msra.mxu0 %v421
  %648 = vmatprep.subr.bf16.mxu0 %v420
  %649 = vmatpush1.bf16.msra.mxu0 %v419
  %650 = vmatprep.subr.bf16.mxu0 %v418
  %651 = vmatpush1.bf16.msra.mxu0 %v417
  %652 = vmatprep.subr.bf16.mxu0 0
  %653 = vmatpush2.bf16.msra.mxu0 0
  %654 = vmatprep.subr.bf16.mxu0 0
  %655 = vmatpush2.bf16.msra.mxu0 0
  %656 = vmatprep.subr.bf16.mxu0 0
  %657 = vmatpush2.bf16.msra.mxu0 0
  %658 = vmatprep.subr.bf16.mxu0 0
  %659 = vmatpush2.bf16.msra.mxu0 0
  %660 = vmatprep.subr.bf16.mxu0 0
  %661 = vmatpush2.bf16.msra.mxu0 0
  %662 = vmatprep.subr.bf16.mxu0 0
  %663 = vmatpush2.bf16.msra.mxu0 0
  %664 = vmatprep.subr.bf16.mxu0 0
  %665 = vmatpush2.bf16.msra.mxu0 0
  %666 = vmatprep.subr.bf16.mxu0 0
  %667 = vmatpush2.bf16.msra.mxu0 0
  %668 = vmatprep.mubr.bf16.mxu0 0
  %669 = vmatmul.mubr.bf16.gmra.mxu0 %v634
  %v670 = vpop.f32.mrf.mxu0
  %v671 = vadd.f32 0.0, %v670
  %v672 = vpop.f32.mrf.mxu0
  %v673 = vadd.f32 0.0, %v672
  %v674 = vpop.f32.mrf.mxu0
  %v675 = vadd.f32 0.0, %v674
  %v676 = vpop.f32.mrf.mxu0
  %v677 = vadd.f32 0.0, %v676
  %678 = vdwg.mxu0
  %v679 = vld [vmem:[#allocation2 + $0x10] sm:$0xff]
  %v680 = vld [vmem:[#allocation2 + $0x18] sm:$0xff]
  %v681 = vadd.f32 %v671, %v679
  %v682 = vadd.f32 %v675, %v680
  %v683 = vld [vmem:[#allocation3 + $0x60] sm:$0xff]
  %v684 = vld [vmem:[#allocation3 + $0x68] sm:$0xff]
  %v685 = vadd.f32 %v673, %v683
  %v686 = vadd.f32 %v677, %v684
  %v687 = vxor.u32 %v681, 2147483648
  %v688 = vxor.u32 %v682, 2147483648
  %v689 = vmul.f32 %v687, 1.442695
  %v690 = vpow.pop %v689
  %v691 = vmul.f32 %v688, 1.442695
  %v692 = vpow.pop %v691
  %v693 = vadd.f32 %v690, 1.0
  %v694 = vadd.f32 %v692, 1.0
  %v695 = vrcp.pop %v693
  %v696 = vmul.f32 1.0, %v695
  %v697 = vrcp.pop %v694
  %v698 = vmul.f32 1.0, %v697
  %v699 = vtanh.pop %v681
  %v700 = vtanh.pop %v682
  %v701 = vxor.u32 %v685, 2147483648
  %v702 = vxor.u32 %v686, 2147483648
  %v703 = vmul.f32 %v701, 1.442695
  %v704 = vpow.pop %v703
  %v705 = vmul.f32 %v702, 1.442695
  %v706 = vpow.pop %v705
  %v707 = vadd.f32 %v704, 1.0
  %v708 = vadd.f32 %v706, 1.0
  %v709 = vrcp.pop %v707
  %v710 = vmul.f32 1.0, %v709
  %v711 = vrcp.pop %v708
  %v712 = vmul.f32 1.0, %v711
  %v713 = vtanh.pop %v685
  %v714 = vtanh.pop %v686
  %v715 = vmul.f32 %v696, %v536
  %v716 = vmul.f32 %v698, %v537
  %719 = vrot.lane.b32.xlu0 %v699, 64
  %v720 = vpop.permute.xlu0 %719
  %721 = vrot.lane.b32.xlu0 %v700, 64
  %v722 = vpop.permute.xlu0 %721
  %v725 = vmul.f32 %v696, %v720
  %v726 = vmul.f32 %v698, %v722
  %729 = vrot.lane.b32.xlu0 %v725, 32
  %v730 = vpop.permute.xlu0 %729
  %731 = vrot.lane.b32.xlu0 %v726, 32
  %v732 = vpop.permute.xlu0 %731
  %v735 = vadd.f32 %v715, %v730
  %v736 = vadd.f32 %v716, %v732
  %v737 = vmul.f32 %v710, %v558
  %v738 = vmul.f32 %v712, %v559
  %741 = vrot.lane.b32.xlu0 %v713, 64
  %v742 = vpop.permute.xlu0 %741
  %743 = vrot.lane.b32.xlu0 %v714, 64
  %v744 = vpop.permute.xlu0 %743
  %v747 = vmul.f32 %v710, %v742
  %v748 = vmul.f32 %v712, %v744
  %751 = vrot.lane.b32.xlu0 %v747, 32
  %v752 = vpop.permute.xlu0 %751
  %753 = vrot.lane.b32.xlu0 %v748, 32
  %v754 = vpop.permute.xlu0 %753
  %v757 = vadd.f32 %v737, %v752
  %v758 = vadd.f32 %v738, %v754
  %v759 = vtanh.pop %v735
  %v760 = vtanh.pop %v736
  %763 = vrot.lane.b32.xlu0 %v759, 64
  %v764 = vpop.permute.xlu0 %763
  %765 = vrot.lane.b32.xlu0 %v760, 64
  %v766 = vpop.permute.xlu0 %765
  %v769 = vmul.f32 %v696, %v764
  %v770 = vmul.f32 %v698, %v766
  %v771 = vtanh.pop %v757
  %v772 = vtanh.pop %v758
  %775 = vrot.lane.b32.xlu0 %v771, 64
  %v776 = vpop.permute.xlu0 %775
  %777 = vrot.lane.b32.xlu0 %v772, 64
  %v778 = vpop.permute.xlu0 %777
  %v781 = vmul.f32 %v710, %v776
  %v782 = vmul.f32 %v712, %v778
  %785 = vrot.lane.b32.xlu0 %v769, 32
  %v786 = vpop.permute.xlu0 %785
  %787 = vrot.lane.b32.xlu0 %v770, 32
  %v788 = vpop.permute.xlu0 %787
  %793 = vrot.lane.b32.xlu0 %v781, 64
  %v794 = vpop.permute.xlu0 %793
  %795 = vrot.lane.b32.xlu0 %v782, 64
  %v796 = vpop.permute.xlu0 %795
  %v799 = vsel %vm600, %v786, %v794
  %v800 = vsel %vm600, %v788, %v796
  %v801 = vpack.c.bf16 %v800, %v799
  %v802 = vpack.c.bf16 %v770, %v769
  %v804 = vunpack.c.l.b16 %v802
  %v805 = vunpack.c.h.b16 %v802
  %v806 = vpack.c.b16 %v804, %v804
  %v807 = vpack.c.b16 %v805, %v805
  %808 = vrot.lane.b32.xlu0 %v806, 32
  %v809 = vpop.permute.xlu0 %808
  %810 = vrot.lane.b32.xlu0 %v807, 32
  %v811 = vpop.permute.xlu0 %810
  %814 = vst.msk [vmem:[#allocation4 + $0x8] sm:$0xf] %vm616, %v809
  %815 = vst.msk [vmem:[#allocation4 + $0xc] sm:$0xf] %vm616, %v811
  %v816 = vpack.c.bf16 %v782, %v781
  %v818 = vunpack.c.l.b16 %v816
  %v819 = vunpack.c.h.b16 %v816
  %v820 = vpack.c.b16 %v818, %v818
  %v821 = vpack.c.b16 %v819, %v819
  %822 = vrot.lane.b32.xlu0 %v820, 32
  %v823 = vpop.permute.xlu0 %822
  %824 = vrot.lane.b32.xlu0 %v821, 32
  %v825 = vpop.permute.xlu0 %824
  %828 = vst.msk [vmem:[#allocation5 + $0x30] sm:$0xf] %vm616, %v823
  %829 = vst.msk [vmem:[#allocation5 + $0x34] sm:$0xf] %vm616, %v825
  %v831 = vsel %vm433, %v801, 0
  %833 = vmatprep.subr.bf16.mxu0 0
  %834 = vmatpush1.bf16.msra.mxu0 0
  %835 = vmatprep.subr.bf16.mxu0 0
  %836 = vmatpush1.bf16.msra.mxu0 0
  %837 = vmatprep.subr.bf16.mxu0 0
  %838 = vmatpush1.bf16.msra.mxu0 0
  %839 = vmatprep.subr.bf16.mxu0 0
  %840 = vmatpush1.bf16.msra.mxu0 0
  %841 = vmatprep.subr.bf16.mxu0 %v424
  %842 = vmatpush1.bf16.msra.mxu0 %v423
  %843 = vmatprep.subr.bf16.mxu0 %v422
  %844 = vmatpush1.bf16.msra.mxu0 %v421
  %845 = vmatprep.subr.bf16.mxu0 %v420
  %846 = vmatpush1.bf16.msra.mxu0 %v419
  %847 = vmatprep.subr.bf16.mxu0 %v418
  %848 = vmatpush1.bf16.msra.mxu0 %v417
  %849 = vmatprep.subr.bf16.mxu0 0
  %850 = vmatpush2.bf16.msra.mxu0 0
  %851 = vmatprep.subr.bf16.mxu0 0
  %852 = vmatpush2.bf16.msra.mxu0 0
  %853 = vmatprep.subr.bf16.mxu0 0
  %854 = vmatpush2.bf16.msra.mxu0 0
  %855 = vmatprep.subr.bf16.mxu0 0
  %856 = vmatpush2.bf16.msra.mxu0 0
  %857 = vmatprep.subr.bf16.mxu0 0
  %858 = vmatpush2.bf16.msra.mxu0 0
  %859 = vmatprep.subr.bf16.mxu0 0
  %860 = vmatpush2.bf16.msra.mxu0 0
  %861 = vmatprep.subr.bf16.mxu0 0
  %862 = vmatpush2.bf16.msra.mxu0 0
  %863 = vmatprep.subr.bf16.mxu0 0
  %864 = vmatpush2.bf16.msra.mxu0 0
  %865 = vmatprep.mubr.bf16.mxu0 0
  %866 = vmatmul.mubr.bf16.gmra.mxu0 %v831
  %v867 = vpop.f32.mrf.mxu0
  %v868 = vadd.f32 0.0, %v867
  %v869 = vpop.f32.mrf.mxu0
  %v870 = vadd.f32 0.0, %v869
  %v871 = vpop.f32.mrf.mxu0
  %v872 = vadd.f32 0.0, %v871
  %v873 = vpop.f32.mrf.mxu0
  %v874 = vadd.f32 0.0, %v873
  %875 = vdwg.mxu0
  %v876 = vld [vmem:[#allocation2 + $0x20] sm:$0xff]
  %v877 = vld [vmem:[#allocation2 + $0x28] sm:$0xff]
  %v878 = vadd.f32 %v868, %v876
  %v879 = vadd.f32 %v872, %v877
  %v880 = vld [vmem:[#allocation3 + $0x50] sm:$0xff]
  %v881 = vld [vmem:[#allocation3 + $0x58] sm:$0xff]
  %v882 = vadd.f32 %v870, %v880
  %v883 = vadd.f32 %v874, %v881
  %v884 = vxor.u32 %v878, 2147483648
  %v885 = vxor.u32 %v879, 2147483648
  %v886 = vmul.f32 %v884, 1.442695
  %v887 = vpow.pop %v886
  %v888 = vmul.f32 %v885, 1.442695
  %v889 = vpow.pop %v888
  %v890 = vadd.f32 %v887, 1.0
  %v891 = vadd.f32 %v889, 1.0
  %v892 = vrcp.pop %v890
  %v893 = vmul.f32 1.0, %v892
  %v894 = vrcp.pop %v891
  %v895 = vmul.f32 1.0, %v894
  %v896 = vtanh.pop %v878
  %v897 = vtanh.pop %v879
  %v898 = vxor.u32 %v882, 2147483648
  %v899 = vxor.u32 %v883, 2147483648
  %v900 = vmul.f32 %v898, 1.442695
  %v901 = vpow.pop %v900
  %v902 = vmul.f32 %v899, 1.442695
  %v903 = vpow.pop %v902
  %v904 = vadd.f32 %v901, 1.0
  %v905 = vadd.f32 %v903, 1.0
  %v906 = vrcp.pop %v904
  %v907 = vmul.f32 1.0, %v906
  %v908 = vrcp.pop %v905
  %v909 = vmul.f32 1.0, %v908
  %v910 = vtanh.pop %v882
  %v911 = vtanh.pop %v883
  %v912 = vmul.f32 %v893, %v735
  %v913 = vmul.f32 %v895, %v736
  %916 = vrot.lane.b32.xlu0 %v896, 64
  %v917 = vpop.permute.xlu0 %916
  %918 = vrot.lane.b32.xlu0 %v897, 64
  %v919 = vpop.permute.xlu0 %918
  %v922 = vmul.f32 %v893, %v917
  %v923 = vmul.f32 %v895, %v919
  %926 = vrot.lane.b32.xlu0 %v922, 32
  %v927 = vpop.permute.xlu0 %926
  %928 = vrot.lane.b32.xlu0 %v923, 32
  %v929 = vpop.permute.xlu0 %928
  %v932 = vadd.f32 %v912, %v927
  %v933 = vadd.f32 %v913, %v929
  %v934 = vmul.f32 %v907, %v757
  %v935 = vmul.f32 %v909, %v758
  %938 = vrot.lane.b32.xlu0 %v910, 64
  %v939 = vpop.permute.xlu0 %938
  %940 = vrot.lane.b32.xlu0 %v911, 64
  %v941 = vpop.permute.xlu0 %940
  %v944 = vmul.f32 %v907, %v939
  %v945 = vmul.f32 %v909, %v941
  %948 = vrot.lane.b32.xlu0 %v944, 32
  %v949 = vpop.permute.xlu0 %948
  %950 = vrot.lane.b32.xlu0 %v945, 32
  %v951 = vpop.permute.xlu0 %950
  %v954 = vadd.f32 %v934, %v949
  %v955 = vadd.f32 %v935, %v951
  %v956 = vtanh.pop %v932
  %v957 = vtanh.pop %v933
  %960 = vrot.lane.b32.xlu0 %v956, 64
  %v961 = vpop.permute.xlu0 %960
  %962 = vrot.lane.b32.xlu0 %v957, 64
  %v963 = vpop.permute.xlu0 %962
  %v966 = vmul.f32 %v893, %v961
  %v967 = vmul.f32 %v895, %v963
  %v968 = vtanh.pop %v954
  %v969 = vtanh.pop %v955
  %972 = vrot.lane.b32.xlu0 %v968, 64
  %v973 = vpop.permute.xlu0 %972
  %974 = vrot.lane.b32.xlu0 %v969, 64
  %v975 = vpop.permute.xlu0 %974
  %v978 = vmul.f32 %v907, %v973
  %v979 = vmul.f32 %v909, %v975
  %982 = vrot.lane.b32.xlu0 %v966, 32
  %v983 = vpop.permute.xlu0 %982
  %984 = vrot.lane.b32.xlu0 %v967, 32
  %v985 = vpop.permute.xlu0 %984
  %990 = vrot.lane.b32.xlu0 %v978, 64
  %v991 = vpop.permute.xlu0 %990
  %992 = vrot.lane.b32.xlu0 %v979, 64
  %v993 = vpop.permute.xlu0 %992
  %v996 = vsel %vm600, %v983, %v991
  %v997 = vsel %vm600, %v985, %v993
  %v998 = vpack.c.bf16 %v997, %v996
  %v999 = vpack.c.bf16 %v967, %v966
  %v1001 = vunpack.c.l.b16 %v999
  %v1002 = vunpack.c.h.b16 %v999
  %v1003 = vpack.c.b16 %v1001, %v1001
  %v1004 = vpack.c.b16 %v1002, %v1002
  %1005 = vrot.lane.b32.xlu0 %v1003, 32
  %v1006 = vpop.permute.xlu0 %1005
  %1007 = vrot.lane.b32.xlu0 %v1004, 32
  %v1008 = vpop.permute.xlu0 %1007
  %1011 = vst.msk [vmem:[#allocation4 + $0x10] sm:$0xf] %vm616, %v1006
  %1012 = vst.msk [vmem:[#allocation4 + $0x14] sm:$0xf] %vm616, %v1008
  %v1013 = vpack.c.bf16 %v979, %v978
  %v1015 = vunpack.c.l.b16 %v1013
  %v1016 = vunpack.c.h.b16 %v1013
  %v1017 = vpack.c.b16 %v1015, %v1015
  %v1018 = vpack.c.b16 %v1016, %v1016
  %1019 = vrot.lane.b32.xlu0 %v1017, 32
  %v1020 = vpop.permute.xlu0 %1019
  %1021 = vrot.lane.b32.xlu0 %v1018, 32
  %v1022 = vpop.permute.xlu0 %1021
  %1025 = vst.msk [vmem:[#allocation5 + $0x28] sm:$0xf] %vm616, %v1020
  %1026 = vst.msk [vmem:[#allocation5 + $0x2c] sm:$0xf] %vm616, %v1022
  %v1028 = vsel %vm433, %v998, 0
  %1030 = vmatprep.subr.bf16.mxu0 0
  %1031 = vmatpush1.bf16.msra.mxu0 0
  %1032 = vmatprep.subr.bf16.mxu0 0
  %1033 = vmatpush1.bf16.msra.mxu0 0
  %1034 = vmatprep.subr.bf16.mxu0 0
  %1035 = vmatpush1.bf16.msra.mxu0 0
  %1036 = vmatprep.subr.bf16.mxu0 0
  %1037 = vmatpush1.bf16.msra.mxu0 0
  %1038 = vmatprep.subr.bf16.mxu0 %v424
  %1039 = vmatpush1.bf16.msra.mxu0 %v423
  %1040 = vmatprep.subr.bf16.mxu0 %v422
  %1041 = vmatpush1.bf16.msra.mxu0 %v421
  %1042 = vmatprep.subr.bf16.mxu0 %v420
  %1043 = vmatpush1.bf16.msra.mxu0 %v419
  %1044 = vmatprep.subr.bf16.mxu0 %v418
  %1045 = vmatpush1.bf16.msra.mxu0 %v417
  %1046 = vmatprep.subr.bf16.mxu0 0
  %1047 = vmatpush2.bf16.msra.mxu0 0
  %1048 = vmatprep.subr.bf16.mxu0 0
  %1049 = vmatpush2.bf16.msra.mxu0 0
  %1050 = vmatprep.subr.bf16.mxu0 0
  %1051 = vmatpush2.bf16.msra.mxu0 0
  %1052 = vmatprep.subr.bf16.mxu0 0
  %1053 = vmatpush2.bf16.msra.mxu0 0
  %1054 = vmatprep.subr.bf16.mxu0 0
  %1055 = vmatpush2.bf16.msra.mxu0 0
  %1056 = vmatprep.subr.bf16.mxu0 0
  %1057 = vmatpush2.bf16.msra.mxu0 0
  %1058 = vmatprep.subr.bf16.mxu0 0
  %1059 = vmatpush2.bf16.msra.mxu0 0
  %1060 = vmatprep.subr.bf16.mxu0 0
  %1061 = vmatpush2.bf16.msra.mxu0 0
  %1062 = vmatprep.mubr.bf16.mxu0 0
  %1063 = vmatmul.mubr.bf16.gmra.mxu0 %v1028
  %v1064 = vpop.f32.mrf.mxu0
  %v1065 = vadd.f32 0.0, %v1064
  %v1066 = vpop.f32.mrf.mxu0
  %v1067 = vadd.f32 0.0, %v1066
  %v1068 = vpop.f32.mrf.mxu0
  %v1069 = vadd.f32 0.0, %v1068
  %v1070 = vpop.f32.mrf.mxu0
  %v1071 = vadd.f32 0.0, %v1070
  %1072 = vdwg.mxu0
  %v1073 = vld [vmem:[#allocation2 + $0x30] sm:$0xff]
  %v1074 = vld [vmem:[#allocation2 + $0x38] sm:$0xff]
  %v1075 = vadd.f32 %v1065, %v1073
  %v1076 = vadd.f32 %v1069, %v1074
  %v1077 = vld [vmem:[#allocation3 + $0x40] sm:$0xff]
  %v1078 = vld [vmem:[#allocation3 + $0x48] sm:$0xff]
  %v1079 = vadd.f32 %v1067, %v1077
  %v1080 = vadd.f32 %v1071, %v1078
  %v1081 = vxor.u32 %v1075, 2147483648
  %v1082 = vxor.u32 %v1076, 2147483648
  %v1083 = vmul.f32 %v1081, 1.442695
  %v1084 = vpow.pop %v1083
  %v1085 = vmul.f32 %v1082, 1.442695
  %v1086 = vpow.pop %v1085
  %v1087 = vadd.f32 %v1084, 1.0
  %v1088 = vadd.f32 %v1086, 1.0
  %v1089 = vrcp.pop %v1087
  %v1090 = vmul.f32 1.0, %v1089
  %v1091 = vrcp.pop %v1088
  %v1092 = vmul.f32 1.0, %v1091
  %v1093 = vtanh.pop %v1075
  %v1094 = vtanh.pop %v1076
  %v1095 = vxor.u32 %v1079, 2147483648
  %v1096 = vxor.u32 %v1080, 2147483648
  %v1097 = vmul.f32 %v1095, 1.442695
  %v1098 = vpow.pop %v1097
  %v1099 = vmul.f32 %v1096, 1.442695
  %v1100 = vpow.pop %v1099
  %v1101 = vadd.f32 %v1098, 1.0
  %v1102 = vadd.f32 %v1100, 1.0
  %v1103 = vrcp.pop %v1101
  %v1104 = vmul.f32 1.0, %v1103
  %v1105 = vrcp.pop %v1102
  %v1106 = vmul.f32 1.0, %v1105
  %v1107 = vtanh.pop %v1079
  %v1108 = vtanh.pop %v1080
  %v1109 = vmul.f32 %v1090, %v932
  %v1110 = vmul.f32 %v1092, %v933
  %1113 = vrot.lane.b32.xlu0 %v1093, 64
  %v1114 = vpop.permute.xlu0 %1113
  %1115 = vrot.lane.b32.xlu0 %v1094, 64
  %v1116 = vpop.permute.xlu0 %1115
  %v1119 = vmul.f32 %v1090, %v1114
  %v1120 = vmul.f32 %v1092, %v1116
  %1123 = vrot.lane.b32.xlu0 %v1119, 32
  %v1124 = vpop.permute.xlu0 %1123
  %1125 = vrot.lane.b32.xlu0 %v1120, 32
  %v1126 = vpop.permute.xlu0 %1125
  %v1129 = vadd.f32 %v1109, %v1124
  %v1130 = vadd.f32 %v1110, %v1126
  %v1131 = vmul.f32 %v1104, %v954
  %v1132 = vmul.f32 %v1106, %v955
  %1135 = vrot.lane.b32.xlu0 %v1107, 64
  %v1136 = vpop.permute.xlu0 %1135
  %1137 = vrot.lane.b32.xlu0 %v1108, 64
  %v1138 = vpop.permute.xlu0 %1137
  %v1141 = vmul.f32 %v1104, %v1136
  %v1142 = vmul.f32 %v1106, %v1138
  %1145 = vrot.lane.b32.xlu0 %v1141, 32
  %v1146 = vpop.permute.xlu0 %1145
  %1147 = vrot.lane.b32.xlu0 %v1142, 32
  %v1148 = vpop.permute.xlu0 %1147
  %v1151 = vadd.f32 %v1131, %v1146
  %v1152 = vadd.f32 %v1132, %v1148
  %v1153 = vtanh.pop %v1129
  %v1154 = vtanh.pop %v1130
  %1157 = vrot.lane.b32.xlu0 %v1153, 64
  %v1158 = vpop.permute.xlu0 %1157
  %1159 = vrot.lane.b32.xlu0 %v1154, 64
  %v1160 = vpop.permute.xlu0 %1159
  %v1163 = vmul.f32 %v1090, %v1158
  %v1164 = vmul.f32 %v1092, %v1160
  %v1165 = vtanh.pop %v1151
  %v1166 = vtanh.pop %v1152
  %1169 = vrot.lane.b32.xlu0 %v1165, 64
  %v1170 = vpop.permute.xlu0 %1169
  %1171 = vrot.lane.b32.xlu0 %v1166, 64
  %v1172 = vpop.permute.xlu0 %1171
  %v1175 = vmul.f32 %v1104, %v1170
  %v1176 = vmul.f32 %v1106, %v1172
  %1179 = vrot.lane.b32.xlu0 %v1163, 32
  %v1180 = vpop.permute.xlu0 %1179
  %1181 = vrot.lane.b32.xlu0 %v1164, 32
  %v1182 = vpop.permute.xlu0 %1181
  %1187 = vrot.lane.b32.xlu0 %v1175, 64
  %v1188 = vpop.permute.xlu0 %1187
  %1189 = vrot.lane.b32.xlu0 %v1176, 64
  %v1190 = vpop.permute.xlu0 %1189
  %v1193 = vsel %vm600, %v1180, %v1188
  %v1194 = vsel %vm600, %v1182, %v1190
  %v1195 = vpack.c.bf16 %v1194, %v1193
  %v1196 = vpack.c.bf16 %v1164, %v1163
  %v1198 = vunpack.c.l.b16 %v1196
  %v1199 = vunpack.c.h.b16 %v1196
  %v1200 = vpack.c.b16 %v1198, %v1198
  %v1201 = vpack.c.b16 %v1199, %v1199
  %1202 = vrot.lane.b32.xlu0 %v1200, 32
  %v1203 = vpop.permute.xlu0 %1202
  %1204 = vrot.lane.b32.xlu0 %v1201, 32
  %v1205 = vpop.permute.xlu0 %1204
  %1208 = vst.msk [vmem:[#allocation4 + $0x18] sm:$0xf] %vm616, %v1203
  %1209 = vst.msk [vmem:[#allocation4 + $0x1c] sm:$0xf] %vm616, %v1205
  %v1210 = vpack.c.bf16 %v1176, %v1175
  %v1212 = vunpack.c.l.b16 %v1210
  %v1213 = vunpack.c.h.b16 %v1210
  %v1214 = vpack.c.b16 %v1212, %v1212
  %v1215 = vpack.c.b16 %v1213, %v1213
  %1216 = vrot.lane.b32.xlu0 %v1214, 32
  %v1217 = vpop.permute.xlu0 %1216
  %1218 = vrot.lane.b32.xlu0 %v1215, 32
  %v1219 = vpop.permute.xlu0 %1218
  %1222 = vst.msk [vmem:[#allocation5 + $0x20] sm:$0xf] %vm616, %v1217
  %1223 = vst.msk [vmem:[#allocation5 + $0x24] sm:$0xf] %vm616, %v1219
  %v1225 = vsel %vm433, %v1195, 0
  %1227 = vmatprep.subr.bf16.mxu0 0
  %1228 = vmatpush1.bf16.msra.mxu0 0
  %1229 = vmatprep.subr.bf16.mxu0 0
  %1230 = vmatpush1.bf16.msra.mxu0 0
  %1231 = vmatprep.subr.bf16.mxu0 0
  %1232 = vmatpush1.bf16.msra.mxu0 0
  %1233 = vmatprep.subr.bf16.mxu0 0
  %1234 = vmatpush1.bf16.msra.mxu0 0
  %1235 = vmatprep.subr.bf16.mxu0 %v424
  %1236 = vmatpush1.bf16.msra.mxu0 %v423
  %1237 = vmatprep.subr.bf16.mxu0 %v422
  %1238 = vmatpush1.bf16.msra.mxu0 %v421
  %1239 = vmatprep.subr.bf16.mxu0 %v420
  %1240 = vmatpush1.bf16.msra.mxu0 %v419
  %1241 = vmatprep.subr.bf16.mxu0 %v418
  %1242 = vmatpush1.bf16.msra.mxu0 %v417
  %1243 = vmatprep.subr.bf16.mxu0 0
  %1244 = vmatpush2.bf16.msra.mxu0 0
  %1245 = vmatprep.subr.bf16.mxu0 0
  %1246 = vmatpush2.bf16.msra.mxu0 0
  %1247 = vmatprep.subr.bf16.mxu0 0
  %1248 = vmatpush2.bf16.msra.mxu0 0
  %1249 = vmatprep.subr.bf16.mxu0 0
  %1250 = vmatpush2.bf16.msra.mxu0 0
  %1251 = vmatprep.subr.bf16.mxu0 0
  %1252 = vmatpush2.bf16.msra.mxu0 0
  %1253 = vmatprep.subr.bf16.mxu0 0
  %1254 = vmatpush2.bf16.msra.mxu0 0
  %1255 = vmatprep.subr.bf16.mxu0 0
  %1256 = vmatpush2.bf16.msra.mxu0 0
  %1257 = vmatprep.subr.bf16.mxu0 0
  %1258 = vmatpush2.bf16.msra.mxu0 0
  %1259 = vmatprep.mubr.bf16.mxu0 0
  %1260 = vmatmul.mubr.bf16.gmra.mxu0 %v1225
  %v1261 = vpop.f32.mrf.mxu0
  %v1262 = vadd.f32 0.0, %v1261
  %v1263 = vpop.f32.mrf.mxu0
  %v1264 = vadd.f32 0.0, %v1263
  %v1265 = vpop.f32.mrf.mxu0
  %v1266 = vadd.f32 0.0, %v1265
  %v1267 = vpop.f32.mrf.mxu0
  %v1268 = vadd.f32 0.0, %v1267
  %1269 = vdwg.mxu0
  %v1270 = vld [vmem:[#allocation2 + $0x40] sm:$0xff]
  %v1271 = vld [vmem:[#allocation2 + $0x48] sm:$0xff]
  %v1272 = vadd.f32 %v1262, %v1270
  %v1273 = vadd.f32 %v1266, %v1271
  %v1274 = vld [vmem:[#allocation3 + $0x30] sm:$0xff]
  %v1275 = vld [vmem:[#allocation3 + $0x38] sm:$0xff]
  %v1276 = vadd.f32 %v1264, %v1274
  %v1277 = vadd.f32 %v1268, %v1275
  %v1278 = vxor.u32 %v1272, 2147483648
  %v1279 = vxor.u32 %v1273, 2147483648
  %v1280 = vmul.f32 %v1278, 1.442695
  %v1281 = vpow.pop %v1280
  %v1282 = vmul.f32 %v1279, 1.442695
  %v1283 = vpow.pop %v1282
  %v1284 = vadd.f32 %v1281, 1.0
  %v1285 = vadd.f32 %v1283, 1.0
  %v1286 = vrcp.pop %v1284
  %v1287 = vmul.f32 1.0, %v1286
  %v1288 = vrcp.pop %v1285
  %v1289 = vmul.f32 1.0, %v1288
  %v1290 = vtanh.pop %v1272
  %v1291 = vtanh.pop %v1273
  %v1292 = vxor.u32 %v1276, 2147483648
  %v1293 = vxor.u32 %v1277, 2147483648
  %v1294 = vmul.f32 %v1292, 1.442695
  %v1295 = vpow.pop %v1294
  %v1296 = vmul.f32 %v1293, 1.442695
  %v1297 = vpow.pop %v1296
  %v1298 = vadd.f32 %v1295, 1.0
  %v1299 = vadd.f32 %v1297, 1.0
  %v1300 = vrcp.pop %v1298
  %v1301 = vmul.f32 1.0, %v1300
  %v1302 = vrcp.pop %v1299
  %v1303 = vmul.f32 1.0, %v1302
  %v1304 = vtanh.pop %v1276
  %v1305 = vtanh.pop %v1277
  %v1306 = vmul.f32 %v1287, %v1129
  %v1307 = vmul.f32 %v1289, %v1130
  %1310 = vrot.lane.b32.xlu0 %v1290, 64
  %v1311 = vpop.permute.xlu0 %1310
  %1312 = vrot.lane.b32.xlu0 %v1291, 64
  %v1313 = vpop.permute.xlu0 %1312
  %v1316 = vmul.f32 %v1287, %v1311
  %v1317 = vmul.f32 %v1289, %v1313
  %1320 = vrot.lane.b32.xlu0 %v1316, 32
  %v1321 = vpop.permute.xlu0 %1320
  %1322 = vrot.lane.b32.xlu0 %v1317, 32
  %v1323 = vpop.permute.xlu0 %1322
  %v1326 = vadd.f32 %v1306, %v1321
  %v1327 = vadd.f32 %v1307, %v1323
  %v1328 = vmul.f32 %v1301, %v1151
  %v1329 = vmul.f32 %v1303, %v1152
  %1332 = vrot.lane.b32.xlu0 %v1304, 64
  %v1333 = vpop.permute.xlu0 %1332
  %1334 = vrot.lane.b32.xlu0 %v1305, 64
  %v1335 = vpop.permute.xlu0 %1334
  %v1338 = vmul.f32 %v1301, %v1333
  %v1339 = vmul.f32 %v1303, %v1335
  %1342 = vrot.lane.b32.xlu0 %v1338, 32
  %v1343 = vpop.permute.xlu0 %1342
  %1344 = vrot.lane.b32.xlu0 %v1339, 32
  %v1345 = vpop.permute.xlu0 %1344
  %v1348 = vadd.f32 %v1328, %v1343
  %v1349 = vadd.f32 %v1329, %v1345
  %v1350 = vtanh.pop %v1326
  %v1351 = vtanh.pop %v1327
  %1354 = vrot.lane.b32.xlu0 %v1350, 64
  %v1355 = vpop.permute.xlu0 %1354
  %1356 = vrot.lane.b32.xlu0 %v1351, 64
  %v1357 = vpop.permute.xlu0 %1356
  %v1360 = vmul.f32 %v1287, %v1355
  %v1361 = vmul.f32 %v1289, %v1357
  %v1362 = vtanh.pop %v1348
  %v1363 = vtanh.pop %v1349
  %1366 = vrot.lane.b32.xlu0 %v1362, 64
  %v1367 = vpop.permute.xlu0 %1366
  %1368 = vrot.lane.b32.xlu0 %v1363, 64
  %v1369 = vpop.permute.xlu0 %1368
  %v1372 = vmul.f32 %v1301, %v1367
  %v1373 = vmul.f32 %v1303, %v1369
  %1376 = vrot.lane.b32.xlu0 %v1360, 32
  %v1377 = vpop.permute.xlu0 %1376
  %1378 = vrot.lane.b32.xlu0 %v1361, 32
  %v1379 = vpop.permute.xlu0 %1378
  %1384 = vrot.lane.b32.xlu0 %v1372, 64
  %v1385 = vpop.permute.xlu0 %1384
  %1386 = vrot.lane.b32.xlu0 %v1373, 64
  %v1387 = vpop.permute.xlu0 %1386
  %v1390 = vsel %vm600, %v1377, %v1385
  %v1391 = vsel %vm600, %v1379, %v1387
  %v1392 = vpack.c.bf16 %v1391, %v1390
  %v1393 = vpack.c.bf16 %v1361, %v1360
  %v1395 = vunpack.c.l.b16 %v1393
  %v1396 = vunpack.c.h.b16 %v1393
  %v1397 = vpack.c.b16 %v1395, %v1395
  %v1398 = vpack.c.b16 %v1396, %v1396
  %1399 = vrot.lane.b32.xlu0 %v1397, 32
  %v1400 = vpop.permute.xlu0 %1399
  %1401 = vrot.lane.b32.xlu0 %v1398, 32
  %v1402 = vpop.permute.xlu0 %1401
  %1405 = vst.msk [vmem:[#allocation4 + $0x20] sm:$0xf] %vm616, %v1400
  %1406 = vst.msk [vmem:[#allocation4 + $0x24] sm:$0xf] %vm616, %v1402
  %v1407 = vpack.c.bf16 %v1373, %v1372
  %v1409 = vunpack.c.l.b16 %v1407
  %v1410 = vunpack.c.h.b16 %v1407
  %v1411 = vpack.c.b16 %v1409, %v1409
  %v1412 = vpack.c.b16 %v1410, %v1410
  %1413 = vrot.lane.b32.xlu0 %v1411, 32
  %v1414 = vpop.permute.xlu0 %1413
  %1415 = vrot.lane.b32.xlu0 %v1412, 32
  %v1416 = vpop.permute.xlu0 %1415
  %1419 = vst.msk [vmem:[#allocation5 + $0x18] sm:$0xf] %vm616, %v1414
  %1420 = vst.msk [vmem:[#allocation5 + $0x1c] sm:$0xf] %vm616, %v1416
  %v1422 = vsel %vm433, %v1392, 0
  %1424 = vmatprep.subr.bf16.mxu0 0
  %1425 = vmatpush1.bf16.msra.mxu0 0
  %1426 = vmatprep.subr.bf16.mxu0 0
  %1427 = vmatpush1.bf16.msra.mxu0 0
  %1428 = vmatprep.subr.bf16.mxu0 0
  %1429 = vmatpush1.bf16.msra.mxu0 0
  %1430 = vmatprep.subr.bf16.mxu0 0
  %1431 = vmatpush1.bf16.msra.mxu0 0
  %1432 = vmatprep.subr.bf16.mxu0 %v424
  %1433 = vmatpush1.bf16.msra.mxu0 %v423
  %1434 = vmatprep.subr.bf16.mxu0 %v422
  %1435 = vmatpush1.bf16.msra.mxu0 %v421
  %1436 = vmatprep.subr.bf16.mxu0 %v420
  %1437 = vmatpush1.bf16.msra.mxu0 %v419
  %1438 = vmatprep.subr.bf16.mxu0 %v418
  %1439 = vmatpush1.bf16.msra.mxu0 %v417
  %1440 = vmatprep.subr.bf16.mxu0 0
  %1441 = vmatpush2.bf16.msra.mxu0 0
  %1442 = vmatprep.subr.bf16.mxu0 0
  %1443 = vmatpush2.bf16.msra.mxu0 0
  %1444 = vmatprep.subr.bf16.mxu0 0
  %1445 = vmatpush2.bf16.msra.mxu0 0
  %1446 = vmatprep.subr.bf16.mxu0 0
  %1447 = vmatpush2.bf16.msra.mxu0 0
  %1448 = vmatprep.subr.bf16.mxu0 0
  %1449 = vmatpush2.bf16.msra.mxu0 0
  %1450 = vmatprep.subr.bf16.mxu0 0
  %1451 = vmatpush2.bf16.msra.mxu0 0
  %1452 = vmatprep.subr.bf16.mxu0 0
  %1453 = vmatpush2.bf16.msra.mxu0 0
  %1454 = vmatprep.subr.bf16.mxu0 0
  %1455 = vmatpush2.bf16.msra.mxu0 0
  %1456 = vmatprep.mubr.bf16.mxu0 0
  %1457 = vmatmul.mubr.bf16.gmra.mxu0 %v1422
  %v1458 = vpop.f32.mrf.mxu0
  %v1459 = vadd.f32 0.0, %v1458
  %v1460 = vpop.f32.mrf.mxu0
  %v1461 = vadd.f32 0.0, %v1460
  %v1462 = vpop.f32.mrf.mxu0
  %v1463 = vadd.f32 0.0, %v1462
  %v1464 = vpop.f32.mrf.mxu0
  %v1465 = vadd.f32 0.0, %v1464
  %1466 = vdwg.mxu0
  %v1467 = vld [vmem:[#allocation2 + $0x50] sm:$0xff]
  %v1468 = vld [vmem:[#allocation2 + $0x58] sm:$0xff]
  %v1469 = vadd.f32 %v1459, %v1467
  %v1470 = vadd.f32 %v1463, %v1468
  %v1471 = vld [vmem:[#allocation3 + $0x20] sm:$0xff]
  %v1472 = vld [vmem:[#allocation3 + $0x28] sm:$0xff]
  %v1473 = vadd.f32 %v1461, %v1471
  %v1474 = vadd.f32 %v1465, %v1472
  %v1475 = vxor.u32 %v1469, 2147483648
  %v1476 = vxor.u32 %v1470, 2147483648
  %v1477 = vmul.f32 %v1475, 1.442695
  %v1478 = vpow.pop %v1477
  %v1479 = vmul.f32 %v1476, 1.442695
  %v1480 = vpow.pop %v1479
  %v1481 = vadd.f32 %v1478, 1.0
  %v1482 = vadd.f32 %v1480, 1.0
  %v1483 = vrcp.pop %v1481
  %v1484 = vmul.f32 1.0, %v1483
  %v1485 = vrcp.pop %v1482
  %v1486 = vmul.f32 1.0, %v1485
  %v1487 = vtanh.pop %v1469
  %v1488 = vtanh.pop %v1470
  %v1489 = vxor.u32 %v1473, 2147483648
  %v1490 = vxor.u32 %v1474, 2147483648
  %v1491 = vmul.f32 %v1489, 1.442695
  %v1492 = vpow.pop %v1491
  %v1493 = vmul.f32 %v1490, 1.442695
  %v1494 = vpow.pop %v1493
  %v1495 = vadd.f32 %v1492, 1.0
  %v1496 = vadd.f32 %v1494, 1.0
  %v1497 = vrcp.pop %v1495
  %v1498 = vmul.f32 1.0, %v1497
  %v1499 = vrcp.pop %v1496
  %v1500 = vmul.f32 1.0, %v1499
  %v1501 = vtanh.pop %v1473
  %v1502 = vtanh.pop %v1474
  %v1503 = vmul.f32 %v1484, %v1326
  %v1504 = vmul.f32 %v1486, %v1327
  %1507 = vrot.lane.b32.xlu0 %v1487, 64
  %v1508 = vpop.permute.xlu0 %1507
  %1509 = vrot.lane.b32.xlu0 %v1488, 64
  %v1510 = vpop.permute.xlu0 %1509
  %v1513 = vmul.f32 %v1484, %v1508
  %v1514 = vmul.f32 %v1486, %v1510
  %1517 = vrot.lane.b32.xlu0 %v1513, 32
  %v1518 = vpop.permute.xlu0 %1517
  %1519 = vrot.lane.b32.xlu0 %v1514, 32
  %v1520 = vpop.permute.xlu0 %1519
  %v1523 = vadd.f32 %v1503, %v1518
  %v1524 = vadd.f32 %v1504, %v1520
  %v1525 = vmul.f32 %v1498, %v1348
  %v1526 = vmul.f32 %v1500, %v1349
  %1529 = vrot.lane.b32.xlu0 %v1501, 64
  %v1530 = vpop.permute.xlu0 %1529
  %1531 = vrot.lane.b32.xlu0 %v1502, 64
  %v1532 = vpop.permute.xlu0 %1531
  %v1535 = vmul.f32 %v1498, %v1530
  %v1536 = vmul.f32 %v1500, %v1532
  %1539 = vrot.lane.b32.xlu0 %v1535, 32
  %v1540 = vpop.permute.xlu0 %1539
  %1541 = vrot.lane.b32.xlu0 %v1536, 32
  %v1542 = vpop.permute.xlu0 %1541
  %v1545 = vadd.f32 %v1525, %v1540
  %v1546 = vadd.f32 %v1526, %v1542
  %v1547 = vtanh.pop %v1523
  %v1548 = vtanh.pop %v1524
  %1551 = vrot.lane.b32.xlu0 %v1547, 64
  %v1552 = vpop.permute.xlu0 %1551
  %1553 = vrot.lane.b32.xlu0 %v1548, 64
  %v1554 = vpop.permute.xlu0 %1553
  %v1557 = vmul.f32 %v1484, %v1552
  %v1558 = vmul.f32 %v1486, %v1554
  %v1559 = vtanh.pop %v1545
  %v1560 = vtanh.pop %v1546
  %1563 = vrot.lane.b32.xlu0 %v1559, 64
  %v1564 = vpop.permute.xlu0 %1563
  %1565 = vrot.lane.b32.xlu0 %v1560, 64
  %v1566 = vpop.permute.xlu0 %1565
  %v1569 = vmul.f32 %v1498, %v1564
  %v1570 = vmul.f32 %v1500, %v1566
  %1573 = vrot.lane.b32.xlu0 %v1557, 32
  %v1574 = vpop.permute.xlu0 %1573
  %1575 = vrot.lane.b32.xlu0 %v1558, 32
  %v1576 = vpop.permute.xlu0 %1575
  %1581 = vrot.lane.b32.xlu0 %v1569, 64
  %v1582 = vpop.permute.xlu0 %1581
  %1583 = vrot.lane.b32.xlu0 %v1570, 64
  %v1584 = vpop.permute.xlu0 %1583
  %v1587 = vsel %vm600, %v1574, %v1582
  %v1588 = vsel %vm600, %v1576, %v1584
  %v1589 = vpack.c.bf16 %v1588, %v1587
  %v1590 = vpack.c.bf16 %v1558, %v1557
  %v1592 = vunpack.c.l.b16 %v1590
  %v1593 = vunpack.c.h.b16 %v1590
  %v1594 = vpack.c.b16 %v1592, %v1592
  %v1595 = vpack.c.b16 %v1593, %v1593
  %1596 = vrot.lane.b32.xlu0 %v1594, 32
  %v1597 = vpop.permute.xlu0 %1596
  %1598 = vrot.lane.b32.xlu0 %v1595, 32
  %v1599 = vpop.permute.xlu0 %1598
  %1602 = vst.msk [vmem:[#allocation4 + $0x28] sm:$0xf] %vm616, %v1597
  %1603 = vst.msk [vmem:[#allocation4 + $0x2c] sm:$0xf] %vm616, %v1599
  %v1604 = vpack.c.bf16 %v1570, %v1569
  %v1606 = vunpack.c.l.b16 %v1604
  %v1607 = vunpack.c.h.b16 %v1604
  %v1608 = vpack.c.b16 %v1606, %v1606
  %v1609 = vpack.c.b16 %v1607, %v1607
  %1610 = vrot.lane.b32.xlu0 %v1608, 32
  %v1611 = vpop.permute.xlu0 %1610
  %1612 = vrot.lane.b32.xlu0 %v1609, 32
  %v1613 = vpop.permute.xlu0 %1612
  %1616 = vst.msk [vmem:[#allocation5 + $0x10] sm:$0xf] %vm616, %v1611
  %1617 = vst.msk [vmem:[#allocation5 + $0x14] sm:$0xf] %vm616, %v1613
  %v1619 = vsel %vm433, %v1589, 0
  %1621 = vmatprep.subr.bf16.mxu0 0
  %1622 = vmatpush1.bf16.msra.mxu0 0
  %1623 = vmatprep.subr.bf16.mxu0 0
  %1624 = vmatpush1.bf16.msra.mxu0 0
  %1625 = vmatprep.subr.bf16.mxu0 0
  %1626 = vmatpush1.bf16.msra.mxu0 0
  %1627 = vmatprep.subr.bf16.mxu0 0
  %1628 = vmatpush1.bf16.msra.mxu0 0
  %1629 = vmatprep.subr.bf16.mxu0 %v424
  %1630 = vmatpush1.bf16.msra.mxu0 %v423
  %1631 = vmatprep.subr.bf16.mxu0 %v422
  %1632 = vmatpush1.bf16.msra.mxu0 %v421
  %1633 = vmatprep.subr.bf16.mxu0 %v420
  %1634 = vmatpush1.bf16.msra.mxu0 %v419
  %1635 = vmatprep.subr.bf16.mxu0 %v418
  %1636 = vmatpush1.bf16.msra.mxu0 %v417
  %1637 = vmatprep.subr.bf16.mxu0 0
  %1638 = vmatpush2.bf16.msra.mxu0 0
  %1639 = vmatprep.subr.bf16.mxu0 0
  %1640 = vmatpush2.bf16.msra.mxu0 0
  %1641 = vmatprep.subr.bf16.mxu0 0
  %1642 = vmatpush2.bf16.msra.mxu0 0
  %1643 = vmatprep.subr.bf16.mxu0 0
  %1644 = vmatpush2.bf16.msra.mxu0 0
  %1645 = vmatprep.subr.bf16.mxu0 0
  %1646 = vmatpush2.bf16.msra.mxu0 0
  %1647 = vmatprep.subr.bf16.mxu0 0
  %1648 = vmatpush2.bf16.msra.mxu0 0
  %1649 = vmatprep.subr.bf16.mxu0 0
  %1650 = vmatpush2.bf16.msra.mxu0 0
  %1651 = vmatprep.subr.bf16.mxu0 0
  %1652 = vmatpush2.bf16.msra.mxu0 0
  %1653 = vmatprep.mubr.bf16.mxu0 0
  %1654 = vmatmul.mubr.bf16.gmra.mxu0 %v1619
  %v1655 = vpop.f32.mrf.mxu0
  %v1656 = vadd.f32 0.0, %v1655
  %v1657 = vpop.f32.mrf.mxu0
  %v1658 = vadd.f32 0.0, %v1657
  %v1659 = vpop.f32.mrf.mxu0
  %v1660 = vadd.f32 0.0, %v1659
  %v1661 = vpop.f32.mrf.mxu0
  %v1662 = vadd.f32 0.0, %v1661
  %1663 = vdwg.mxu0
  %v1664 = vld [vmem:[#allocation2 + $0x60] sm:$0xff]
  %v1665 = vld [vmem:[#allocation2 + $0x68] sm:$0xff]
  %v1666 = vadd.f32 %v1656, %v1664
  %v1667 = vadd.f32 %v1660, %v1665
  %v1668 = vld [vmem:[#allocation3 + $0x10] sm:$0xff]
  %v1669 = vld [vmem:[#allocation3 + $0x18] sm:$0xff]
  %v1670 = vadd.f32 %v1658, %v1668
  %v1671 = vadd.f32 %v1662, %v1669
  %v1672 = vxor.u32 %v1666, 2147483648
  %v1673 = vxor.u32 %v1667, 2147483648
  %v1674 = vmul.f32 %v1672, 1.442695
  %v1675 = vpow.pop %v1674
  %v1676 = vmul.f32 %v1673, 1.442695
  %v1677 = vpow.pop %v1676
  %v1678 = vadd.f32 %v1675, 1.0
  %v1679 = vadd.f32 %v1677, 1.0
  %v1680 = vrcp.pop %v1678
  %v1681 = vmul.f32 1.0, %v1680
  %v1682 = vrcp.pop %v1679
  %v1683 = vmul.f32 1.0, %v1682
  %v1684 = vtanh.pop %v1666
  %v1685 = vtanh.pop %v1667
  %v1686 = vxor.u32 %v1670, 2147483648
  %v1687 = vxor.u32 %v1671, 2147483648
  %v1688 = vmul.f32 %v1686, 1.442695
  %v1689 = vpow.pop %v1688
  %v1690 = vmul.f32 %v1687, 1.442695
  %v1691 = vpow.pop %v1690
  %v1692 = vadd.f32 %v1689, 1.0
  %v1693 = vadd.f32 %v1691, 1.0
  %v1694 = vrcp.pop %v1692
  %v1695 = vmul.f32 1.0, %v1694
  %v1696 = vrcp.pop %v1693
  %v1697 = vmul.f32 1.0, %v1696
  %v1698 = vtanh.pop %v1670
  %v1699 = vtanh.pop %v1671
  %v1700 = vmul.f32 %v1681, %v1523
  %v1701 = vmul.f32 %v1683, %v1524
  %1704 = vrot.lane.b32.xlu0 %v1684, 64
  %v1705 = vpop.permute.xlu0 %1704
  %1706 = vrot.lane.b32.xlu0 %v1685, 64
  %v1707 = vpop.permute.xlu0 %1706
  %v1710 = vmul.f32 %v1681, %v1705
  %v1711 = vmul.f32 %v1683, %v1707
  %1714 = vrot.lane.b32.xlu0 %v1710, 32
  %v1715 = vpop.permute.xlu0 %1714
  %1716 = vrot.lane.b32.xlu0 %v1711, 32
  %v1717 = vpop.permute.xlu0 %1716
  %v1720 = vadd.f32 %v1700, %v1715
  %v1721 = vadd.f32 %v1701, %v1717
  %v1722 = vmul.f32 %v1695, %v1545
  %v1723 = vmul.f32 %v1697, %v1546
  %1726 = vrot.lane.b32.xlu0 %v1698, 64
  %v1727 = vpop.permute.xlu0 %1726
  %1728 = vrot.lane.b32.xlu0 %v1699, 64
  %v1729 = vpop.permute.xlu0 %1728
  %v1732 = vmul.f32 %v1695, %v1727
  %v1733 = vmul.f32 %v1697, %v1729
  %1736 = vrot.lane.b32.xlu0 %v1732, 32
  %v1737 = vpop.permute.xlu0 %1736
  %1738 = vrot.lane.b32.xlu0 %v1733, 32
  %v1739 = vpop.permute.xlu0 %1738
  %v1742 = vadd.f32 %v1722, %v1737
  %v1743 = vadd.f32 %v1723, %v1739
  %v1744 = vtanh.pop %v1720
  %v1745 = vtanh.pop %v1721
  %1748 = vrot.lane.b32.xlu0 %v1744, 64
  %v1749 = vpop.permute.xlu0 %1748
  %1750 = vrot.lane.b32.xlu0 %v1745, 64
  %v1751 = vpop.permute.xlu0 %1750
  %v1754 = vmul.f32 %v1681, %v1749
  %v1755 = vmul.f32 %v1683, %v1751
  %v1756 = vtanh.pop %v1742
  %v1757 = vtanh.pop %v1743
  %1760 = vrot.lane.b32.xlu0 %v1756, 64
  %v1761 = vpop.permute.xlu0 %1760
  %1762 = vrot.lane.b32.xlu0 %v1757, 64
  %v1763 = vpop.permute.xlu0 %1762
  %v1766 = vmul.f32 %v1695, %v1761
  %v1767 = vmul.f32 %v1697, %v1763
  %1770 = vrot.lane.b32.xlu0 %v1754, 32
  %v1771 = vpop.permute.xlu0 %1770
  %1772 = vrot.lane.b32.xlu0 %v1755, 32
  %v1773 = vpop.permute.xlu0 %1772
  %1778 = vrot.lane.b32.xlu0 %v1766, 64
  %v1779 = vpop.permute.xlu0 %1778
  %1780 = vrot.lane.b32.xlu0 %v1767, 64
  %v1781 = vpop.permute.xlu0 %1780
  %v1784 = vsel %vm600, %v1771, %v1779
  %v1785 = vsel %vm600, %v1773, %v1781
  %v1786 = vpack.c.bf16 %v1785, %v1784
  %v1787 = vpack.c.bf16 %v1755, %v1754
  %v1789 = vunpack.c.l.b16 %v1787
  %v1790 = vunpack.c.h.b16 %v1787
  %v1791 = vpack.c.b16 %v1789, %v1789
  %v1792 = vpack.c.b16 %v1790, %v1790
  %1793 = vrot.lane.b32.xlu0 %v1791, 32
  %v1794 = vpop.permute.xlu0 %1793
  %1795 = vrot.lane.b32.xlu0 %v1792, 32
  %v1796 = vpop.permute.xlu0 %1795
  %1799 = vst.msk [vmem:[#allocation4 + $0x30] sm:$0xf] %vm616, %v1794
  %1800 = vst.msk [vmem:[#allocation4 + $0x34] sm:$0xf] %vm616, %v1796
  %v1801 = vpack.c.bf16 %v1767, %v1766
  %v1803 = vunpack.c.l.b16 %v1801
  %v1804 = vunpack.c.h.b16 %v1801
  %v1805 = vpack.c.b16 %v1803, %v1803
  %v1806 = vpack.c.b16 %v1804, %v1804
  %1807 = vrot.lane.b32.xlu0 %v1805, 32
  %v1808 = vpop.permute.xlu0 %1807
  %1809 = vrot.lane.b32.xlu0 %v1806, 32
  %v1810 = vpop.permute.xlu0 %1809
  %1813 = vst.msk [vmem:[#allocation5 + $0x8] sm:$0xf] %vm616, %v1808
  %1814 = vst.msk [vmem:[#allocation5 + $0xc] sm:$0xf] %vm616, %v1810
  %v1816 = vsel %vm433, %v1786, 0
  %1818 = vmatprep.subr.bf16.mxu0 0
  %1819 = vmatpush1.bf16.msra.mxu0 0
  %1820 = vmatprep.subr.bf16.mxu0 0
  %1821 = vmatpush1.bf16.msra.mxu0 0
  %1822 = vmatprep.subr.bf16.mxu0 0
  %1823 = vmatpush1.bf16.msra.mxu0 0
  %1824 = vmatprep.subr.bf16.mxu0 0
  %1825 = vmatpush1.bf16.msra.mxu0 0
  %1826 = vmatprep.subr.bf16.mxu0 %v424
  %1827 = vmatpush1.bf16.msra.mxu0 %v423
  %1828 = vmatprep.subr.bf16.mxu0 %v422
  %1829 = vmatpush1.bf16.msra.mxu0 %v421
  %1830 = vmatprep.subr.bf16.mxu0 %v420
  %1831 = vmatpush1.bf16.msra.mxu0 %v419
  %1832 = vmatprep.subr.bf16.mxu0 %v418
  %1833 = vmatpush1.bf16.msra.mxu0 %v417
  %1834 = vmatprep.subr.bf16.mxu0 0
  %1835 = vmatpush2.bf16.msra.mxu0 0
  %1836 = vmatprep.subr.bf16.mxu0 0
  %1837 = vmatpush2.bf16.msra.mxu0 0
  %1838 = vmatprep.subr.bf16.mxu0 0
  %1839 = vmatpush2.bf16.msra.mxu0 0
  %1840 = vmatprep.subr.bf16.mxu0 0
  %1841 = vmatpush2.bf16.msra.mxu0 0
  %1842 = vmatprep.subr.bf16.mxu0 0
  %1843 = vmatpush2.bf16.msra.mxu0 0
  %1844 = vmatprep.subr.bf16.mxu0 0
  %1845 = vmatpush2.bf16.msra.mxu0 0
  %1846 = vmatprep.subr.bf16.mxu0 0
  %1847 = vmatpush2.bf16.msra.mxu0 0
  %1848 = vmatprep.subr.bf16.mxu0 0
  %1849 = vmatpush2.bf16.msra.mxu0 0
  %1850 = vmatprep.mubr.bf16.mxu0 0
  %1851 = vmatmul.mubr.bf16.gmra.mxu0 %v1816
  %v1852 = vpop.f32.mrf.mxu0
  %v1853 = vadd.f32 0.0, %v1852
  %v1854 = vpop.f32.mrf.mxu0
  %v1855 = vadd.f32 0.0, %v1854
  %v1856 = vpop.f32.mrf.mxu0
  %v1857 = vadd.f32 0.0, %v1856
  %v1858 = vpop.f32.mrf.mxu0
  %v1859 = vadd.f32 0.0, %v1858
  %1860 = vdwg.mxu0
  %v1861 = vld [vmem:[#allocation2 + $0x70] sm:$0xff]
  %v1862 = vld [vmem:[#allocation2 + $0x78] sm:$0xff]
  %v1863 = vadd.f32 %v1853, %v1861
  %v1864 = vadd.f32 %v1857, %v1862
  %v1865 = vld [vmem:[#allocation3] sm:$0xff]
  %v1866 = vld [vmem:[#allocation3 + $0x8] sm:$0xff]
  %v1867 = vadd.f32 %v1855, %v1865
  %v1868 = vadd.f32 %v1859, %v1866
  %v1869 = vxor.u32 %v1863, 2147483648
  %v1870 = vxor.u32 %v1864, 2147483648
  %v1871 = vmul.f32 %v1869, 1.442695
  %v1872 = vpow.pop %v1871
  %v1873 = vmul.f32 %v1870, 1.442695
  %v1874 = vpow.pop %v1873
  %v1875 = vadd.f32 %v1872, 1.0
  %v1876 = vadd.f32 %v1874, 1.0
  %v1877 = vrcp.pop %v1875
  %v1878 = vmul.f32 1.0, %v1877
  %v1879 = vrcp.pop %v1876
  %v1880 = vmul.f32 1.0, %v1879
  %v1881 = vtanh.pop %v1863
  %v1882 = vtanh.pop %v1864
  %v1883 = vxor.u32 %v1867, 2147483648
  %v1884 = vxor.u32 %v1868, 2147483648
  %v1885 = vmul.f32 %v1883, 1.442695
  %v1886 = vpow.pop %v1885
  %v1887 = vmul.f32 %v1884, 1.442695
  %v1888 = vpow.pop %v1887
  %v1889 = vadd.f32 %v1886, 1.0
  %v1890 = vadd.f32 %v1888, 1.0
  %v1891 = vrcp.pop %v1889
  %v1892 = vmul.f32 1.0, %v1891
  %v1893 = vrcp.pop %v1890
  %v1894 = vmul.f32 1.0, %v1893
  %v1895 = vtanh.pop %v1867
  %v1896 = vtanh.pop %v1868
  %v1897 = vmul.f32 %v1878, %v1720
  %v1898 = vmul.f32 %v1880, %v1721
  %1901 = vrot.lane.b32.xlu0 %v1881, 64
  %v1902 = vpop.permute.xlu0 %1901
  %1903 = vrot.lane.b32.xlu0 %v1882, 64
  %v1904 = vpop.permute.xlu0 %1903
  %v1907 = vmul.f32 %v1878, %v1902
  %v1908 = vmul.f32 %v1880, %v1904
  %1911 = vrot.lane.b32.xlu0 %v1907, 32
  %v1912 = vpop.permute.xlu0 %1911
  %1913 = vrot.lane.b32.xlu0 %v1908, 32
  %v1914 = vpop.permute.xlu0 %1913
  %v1917 = vadd.f32 %v1897, %v1912
  %v1918 = vadd.f32 %v1898, %v1914
  %v1919 = vmul.f32 %v1892, %v1742
  %v1920 = vmul.f32 %v1894, %v1743
  %1923 = vrot.lane.b32.xlu0 %v1895, 64
  %v1924 = vpop.permute.xlu0 %1923
  %1925 = vrot.lane.b32.xlu0 %v1896, 64
  %v1926 = vpop.permute.xlu0 %1925
  %v1929 = vmul.f32 %v1892, %v1924
  %v1930 = vmul.f32 %v1894, %v1926
  %1933 = vrot.lane.b32.xlu0 %v1929, 32
  %v1934 = vpop.permute.xlu0 %1933
  %1935 = vrot.lane.b32.xlu0 %v1930, 32
  %v1936 = vpop.permute.xlu0 %1935
  %v1939 = vadd.f32 %v1919, %v1934
  %v1940 = vadd.f32 %v1920, %v1936
  %v1941 = vtanh.pop %v1917
  %v1942 = vtanh.pop %v1918
  %1945 = vrot.lane.b32.xlu0 %v1941, 64
  %v1946 = vpop.permute.xlu0 %1945
  %1947 = vrot.lane.b32.xlu0 %v1942, 64
  %v1948 = vpop.permute.xlu0 %1947
  %v1951 = vmul.f32 %v1878, %v1946
  %v1952 = vmul.f32 %v1880, %v1948
  %v1953 = vtanh.pop %v1939
  %v1954 = vtanh.pop %v1940
  %1957 = vrot.lane.b32.xlu0 %v1953, 64
  %v1958 = vpop.permute.xlu0 %1957
  %1959 = vrot.lane.b32.xlu0 %v1954, 64
  %v1960 = vpop.permute.xlu0 %1959
  %v1963 = vmul.f32 %v1892, %v1958
  %v1964 = vmul.f32 %v1894, %v1960
  %v1965 = vpack.c.bf16 %v1952, %v1951
  %v1967 = vunpack.c.l.b16 %v1965
  %v1968 = vunpack.c.h.b16 %v1965
  %v1969 = vpack.c.b16 %v1967, %v1967
  %v1970 = vpack.c.b16 %v1968, %v1968
  %1971 = vrot.lane.b32.xlu0 %v1969, 32
  %v1972 = vpop.permute.xlu0 %1971
  %1973 = vrot.lane.b32.xlu0 %v1970, 32
  %v1974 = vpop.permute.xlu0 %1973
  %1977 = vst.msk [vmem:[#allocation4 + $0x38] sm:$0xf] %vm616, %v1972
  %1978 = vst.msk [vmem:[#allocation4 + $0x3c] sm:$0xf] %vm616, %v1974
  %v1979 = vpack.c.bf16 %v1964, %v1963
  %v1981 = vunpack.c.l.b16 %v1979
  %v1982 = vunpack.c.h.b16 %v1979
  %v1983 = vpack.c.b16 %v1981, %v1981
  %v1984 = vpack.c.b16 %v1982, %v1982
  %1985 = vrot.lane.b32.xlu0 %v1983, 32
  %v1986 = vpop.permute.xlu0 %1985
  %1987 = vrot.lane.b32.xlu0 %v1984, 32
  %v1988 = vpop.permute.xlu0 %1987
  %1991 = vst.msk [vmem:[#allocation5] sm:$0xf] %vm616, %v1986
  %1992 = vst.msk [vmem:[#allocation5 + $0x4] sm:$0xf] %vm616, %v1988
  %v1993 = vld [vmem:[#allocation4] sm:$0xf]
  %v1994 = vld [vmem:[#allocation4 + $0x4] sm:$0xf]
  %v1995 = vld [vmem:[#allocation4 + $0x8] sm:$0xf]
  %v1996 = vld [vmem:[#allocation4 + $0xc] sm:$0xf]
  %v1997 = vld [vmem:[#allocation4 + $0x10] sm:$0xf]
  %v1998 = vld [vmem:[#allocation4 + $0x14] sm:$0xf]
  %v1999 = vld [vmem:[#allocation4 + $0x18] sm:$0xf]
  %v2000 = vld [vmem:[#allocation4 + $0x1c] sm:$0xf]
  %v2001 = vld [vmem:[#allocation4 + $0x20] sm:$0xf]
  %v2002 = vld [vmem:[#allocation4 + $0x24] sm:$0xf]
  %v2003 = vld [vmem:[#allocation4 + $0x28] sm:$0xf]
  %v2004 = vld [vmem:[#allocation4 + $0x2c] sm:$0xf]
  %v2005 = vld [vmem:[#allocation4 + $0x30] sm:$0xf]
  %v2006 = vld [vmem:[#allocation4 + $0x34] sm:$0xf]
  %v2007 = vld [vmem:[#allocation4 + $0x38] sm:$0xf]
  %v2008 = vld [vmem:[#allocation4 + $0x3c] sm:$0xf]
  %v2009 = vld [vmem:[#allocation5] sm:$0xf]
  %v2010 = vld [vmem:[#allocation5 + $0x4] sm:$0xf]
  %v2011 = vld [vmem:[#allocation5 + $0x8] sm:$0xf]
  %v2012 = vld [vmem:[#allocation5 + $0xc] sm:$0xf]
  %v2013 = vld [vmem:[#allocation5 + $0x10] sm:$0xf]
  %v2014 = vld [vmem:[#allocation5 + $0x14] sm:$0xf]
  %v2015 = vld [vmem:[#allocation5 + $0x18] sm:$0xf]
  %v2016 = vld [vmem:[#allocation5 + $0x1c] sm:$0xf]
  %v2017 = vld [vmem:[#allocation5 + $0x20] sm:$0xf]
  %v2018 = vld [vmem:[#allocation5 + $0x24] sm:$0xf]
  %v2019 = vld [vmem:[#allocation5 + $0x28] sm:$0xf]
  %v2020 = vld [vmem:[#allocation5 + $0x2c] sm:$0xf]
  %v2021 = vld [vmem:[#allocation5 + $0x30] sm:$0xf]
  %v2022 = vld [vmem:[#allocation5 + $0x34] sm:$0xf]
  %v2023 = vld [vmem:[#allocation5 + $0x38] sm:$0xf]
  %v2024 = vld [vmem:[#allocation5 + $0x3c] sm:$0xf]
  %v2041 = vunpack.c.l.b16 %v1993
  %v2042 = vunpack.c.l.b16 %v1994
  %v2043 = vunpack.c.l.b16 %v1995
  %v2044 = vunpack.c.l.b16 %v1996
  %v2045 = vunpack.c.l.b16 %v1997
  %v2046 = vunpack.c.l.b16 %v1998
  %v2047 = vunpack.c.l.b16 %v1999
  %v2048 = vunpack.c.l.b16 %v2000
  %v2049 = vunpack.c.l.b16 %v2001
  %v2050 = vunpack.c.l.b16 %v2002
  %v2051 = vunpack.c.l.b16 %v2003
  %v2052 = vunpack.c.l.b16 %v2004
  %v2053 = vunpack.c.l.b16 %v2005
  %v2054 = vunpack.c.l.b16 %v2006
  %v2055 = vunpack.c.l.b16 %v2007
  %v2056 = vunpack.c.l.b16 %v2008
  %v2057 = vpack.c.b16 %v2042, %v2041
  %v2058 = vpack.c.b16 %v2044, %v2043
  %v2059 = vpack.c.b16 %v2046, %v2045
  %v2060 = vpack.c.b16 %v2048, %v2047
  %v2061 = vpack.c.b16 %v2050, %v2049
  %v2062 = vpack.c.b16 %v2052, %v2051
  %v2063 = vpack.c.b16 %v2054, %v2053
  %v2064 = vpack.c.b16 %v2056, %v2055
  %v2081 = vunpack.c.l.b16 %v2009
  %v2082 = vunpack.c.l.b16 %v2010
  %v2083 = vunpack.c.l.b16 %v2011
  %v2084 = vunpack.c.l.b16 %v2012
  %v2085 = vunpack.c.l.b16 %v2013
  %v2086 = vunpack.c.l.b16 %v2014
  %v2087 = vunpack.c.l.b16 %v2015
  %v2088 = vunpack.c.l.b16 %v2016
  %v2089 = vunpack.c.l.b16 %v2017
  %v2090 = vunpack.c.l.b16 %v2018
  %v2091 = vunpack.c.l.b16 %v2019
  %v2092 = vunpack.c.l.b16 %v2020
  %v2093 = vunpack.c.l.b16 %v2021
  %v2094 = vunpack.c.l.b16 %v2022
  %v2095 = vunpack.c.l.b16 %v2023
  %v2096 = vunpack.c.l.b16 %v2024
  %v2097 = vpack.c.b16 %v2082, %v2081
  %v2098 = vpack.c.b16 %v2084, %v2083
  %v2099 = vpack.c.b16 %v2086, %v2085
  %v2100 = vpack.c.b16 %v2088, %v2087
  %v2101 = vpack.c.b16 %v2090, %v2089
  %v2102 = vpack.c.b16 %v2092, %v2091
  %v2103 = vpack.c.b16 %v2094, %v2093
  %v2104 = vpack.c.b16 %v2096, %v2095
  %2105 = vrot.lane.b32.xlu0 %v2097, 32
  %v2106 = vpop.permute.xlu0 %2105
  %2107 = vrot.lane.b32.xlu0 %v2098, 32
  %v2108 = vpop.permute.xlu0 %2107
  %2109 = vrot.lane.b32.xlu0 %v2099, 32
  %v2110 = vpop.permute.xlu0 %2109
  %2111 = vrot.lane.b32.xlu0 %v2100, 32
  %v2112 = vpop.permute.xlu0 %2111
  %2113 = vrot.lane.b32.xlu0 %v2101, 32
  %v2114 = vpop.permute.xlu0 %2113
  %2115 = vrot.lane.b32.xlu0 %v2102, 32
  %v2116 = vpop.permute.xlu0 %2115
  %2117 = vrot.lane.b32.xlu0 %v2103, 32
  %v2118 = vpop.permute.xlu0 %2117
  %2119 = vrot.lane.b32.xlu0 %v2104, 32
  %v2120 = vpop.permute.xlu0 %2119
  %v2123 = vsel %vm600, %v2057, %v2106
  %v2126 = vsel %vm600, %v2058, %v2108
  %v2129 = vsel %vm600, %v2059, %v2110
  %v2132 = vsel %vm600, %v2060, %v2112
  %v2135 = vsel %vm600, %v2061, %v2114
  %v2138 = vsel %vm600, %v2062, %v2116
  %v2141 = vsel %vm600, %v2063, %v2118
  %v2144 = vsel %vm600, %v2064, %v2120
  %v2145 = vld [vmem:[%s6] sm:$0xf]
  %v2146 = vld [vmem:[%s6 + $0x4] sm:$0xf]
  %v2147 = vld [vmem:[%s6 + $0x8] sm:$0xf]
  %v2148 = vld [vmem:[%s6 + $0xc] sm:$0xf]
  %v2149 = vld [vmem:[%s6 + $0x10] sm:$0xf]
  %v2150 = vld [vmem:[%s6 + $0x14] sm:$0xf]
  %v2151 = vld [vmem:[%s6 + $0x18] sm:$0xf]
  %v2152 = vld [vmem:[%s6 + $0x1c] sm:$0xf]
  %v2153 = vld [vmem:[%s9] sm:$0x1]
  %v2155 = vlaneseq
  %v2156 = vshrl.u32 %v2155, 7
  %v2157 = vsub.s32 0, %v2156
  %v2158 = vrot.slane %v2153, %v2157
  %v2168 = vunpack.c.l.b16 %v2145
  %v2169 = vunpack.c.l.b16 %v2146
  %v2170 = vunpack.c.l.b16 %v2147
  %v2171 = vunpack.c.l.b16 %v2148
  %v2172 = vunpack.c.l.b16 %v2149
  %v2173 = vunpack.c.l.b16 %v2150
  %v2174 = vunpack.c.l.b16 %v2151
  %v2175 = vunpack.c.l.b16 %v2152
  %v2176 = vpack.c.b16 %v2169, %v2168
  %v2177 = vpack.c.b16 %v2171, %v2170
  %v2178 = vpack.c.b16 %v2173, %v2172
  %v2179 = vpack.c.b16 %v2175, %v2174
  %v2184 = vsel %vm433, %v2123, 0
  %v2186 = vsel %vm433, %v2126, 0
  %v2188 = vsel %vm433, %v2129, 0
  %v2190 = vsel %vm433, %v2132, 0
  %v2192 = vsel %vm433, %v2135, 0
  %v2194 = vsel %vm433, %v2138, 0
  %v2196 = vsel %vm433, %v2141, 0
  %v2198 = vsel %vm433, %v2144, 0
  %2200 = vmatprep.subr.bf16.mxu0 0
  %2201 = vmatpush1.bf16.msra.mxu0 0
  %2202 = vmatprep.subr.bf16.mxu0 0
  %2203 = vmatpush1.bf16.msra.mxu0 0
  %2204 = vmatprep.subr.bf16.mxu0 0
  %2205 = vmatpush1.bf16.msra.mxu0 0
  %2206 = vmatprep.subr.bf16.mxu0 0
  %2207 = vmatpush1.bf16.msra.mxu0 0
  %2208 = vmatprep.subr.bf16.mxu0 0
  %2209 = vmatpush1.bf16.msra.mxu0 %v2179
  %2210 = vmatprep.subr.bf16.mxu0 0
  %2211 = vmatpush1.bf16.msra.mxu0 %v2178
  %2212 = vmatprep.subr.bf16.mxu0 0
  %2213 = vmatpush1.bf16.msra.mxu0 %v2177
  %2214 = vmatprep.subr.bf16.mxu0 0
  %2215 = vmatpush1.bf16.msra.mxu0 %v2176
  %2216 = vmatprep.subr.bf16.mxu0 0
  %2217 = vmatpush2.bf16.msra.mxu0 0
  %2218 = vmatprep.subr.bf16.mxu0 0
  %2219 = vmatpush2.bf16.msra.mxu0 0
  %2220 = vmatprep.subr.bf16.mxu0 0
  %2221 = vmatpush2.bf16.msra.mxu0 0
  %2222 = vmatprep.subr.bf16.mxu0 0
  %2223 = vmatpush2.bf16.msra.mxu0 0
  %2224 = vmatprep.subr.bf16.mxu0 0
  %2225 = vmatpush2.bf16.msra.mxu0 0
  %2226 = vmatprep.subr.bf16.mxu0 0
  %2227 = vmatpush2.bf16.msra.mxu0 0
  %2228 = vmatprep.subr.bf16.mxu0 0
  %2229 = vmatpush2.bf16.msra.mxu0 0
  %2230 = vmatprep.subr.bf16.mxu0 0
  %2231 = vmatpush2.bf16.msra.mxu0 0
  %2232 = vmatprep.mubr.bf16.mxu0 0
  %2233 = vmatmul.mubr.bf16.gmra.mxu0 %v2184
  %v2234 = vpop.f32.mrf.mxu0
  %v2235 = vadd.f32 %v2158, %v2234
  %v2236 = vpop.f32.mrf.mxu0
  %v2237 = vpop.f32.mrf.mxu0
  %v2238 = vadd.f32 %v2158, %v2237
  %v2239 = vpop.f32.mrf.mxu0
  %2240 = vmatprep.mubr.bf16.mxu0 0
  %2241 = vmatmul.mubr.bf16.gmra.mxu0 %v2186
  %v2242 = vpop.f32.mrf.mxu0
  %v2243 = vadd.f32 %v2158, %v2242
  %v2244 = vpop.f32.mrf.mxu0
  %v2245 = vpop.f32.mrf.mxu0
  %v2246 = vadd.f32 %v2158, %v2245
  %v2247 = vpop.f32.mrf.mxu0
  %2248 = vmatprep.mubr.bf16.mxu0 0
  %2249 = vmatmul.mubr.bf16.gmra.mxu0 %v2188
  %v2250 = vpop.f32.mrf.mxu0
  %v2251 = vadd.f32 %v2158, %v2250
  %v2252 = vpop.f32.mrf.mxu0
  %v2253 = vpop.f32.mrf.mxu0
  %v2254 = vadd.f32 %v2158, %v2253
  %v2255 = vpop.f32.mrf.mxu0
  %2256 = vmatprep.mubr.bf16.mxu0 0
  %2257 = vmatmul.mubr.bf16.gmra.mxu0 %v2190
  %v2258 = vpop.f32.mrf.mxu0
  %v2259 = vadd.f32 %v2158, %v2258
  %v2260 = vpop.f32.mrf.mxu0
  %v2261 = vpop.f32.mrf.mxu0
  %v2262 = vadd.f32 %v2158, %v2261
  %v2263 = vpop.f32.mrf.mxu0
  %2264 = vmatprep.mubr.bf16.mxu0 0
  %2265 = vmatmul.mubr.bf16.gmra.mxu0 %v2192
  %v2266 = vpop.f32.mrf.mxu0
  %v2267 = vadd.f32 %v2158, %v2266
  %v2268 = vpop.f32.mrf.mxu0
  %v2269 = vpop.f32.mrf.mxu0
  %v2270 = vadd.f32 %v2158, %v2269
  %v2271 = vpop.f32.mrf.mxu0
  %2272 = vmatprep.mubr.bf16.mxu0 0
  %2273 = vmatmul.mubr.bf16.gmra.mxu0 %v2194
  %v2274 = vpop.f32.mrf.mxu0
  %v2275 = vadd.f32 %v2158, %v2274
  %v2276 = vpop.f32.mrf.mxu0
  %v2277 = vpop.f32.mrf.mxu0
  %v2278 = vadd.f32 %v2158, %v2277
  %v2279 = vpop.f32.mrf.mxu0
  %2280 = vmatprep.mubr.bf16.mxu0 0
  %2281 = vmatmul.mubr.bf16.gmra.mxu0 %v2196
  %v2282 = vpop.f32.mrf.mxu0
  %v2283 = vadd.f32 %v2158, %v2282
  %v2284 = vpop.f32.mrf.mxu0
  %v2285 = vpop.f32.mrf.mxu0
  %v2286 = vadd.f32 %v2158, %v2285
  %v2287 = vpop.f32.mrf.mxu0
  %2288 = vmatprep.mubr.bf16.mxu0 0
  %2289 = vmatmul.mubr.bf16.gmra.mxu0 %v2198
  %v2290 = vpop.f32.mrf.mxu0
  %v2291 = vadd.f32 %v2158, %v2290
  %v2292 = vpop.f32.mrf.mxu0
  %v2293 = vpop.f32.mrf.mxu0
  %v2294 = vadd.f32 %v2158, %v2293
  %v2295 = vpop.f32.mrf.mxu0
  %2296 = vdwg.mxu0
  %2297 = vst [vmem:[#allocation2] sm:$0xff] %v2235
  %2298 = vst [vmem:[#allocation2 + $0x8] sm:$0xff] %v2238
  %2299 = vst [vmem:[#allocation2 + $0x10] sm:$0xff] %v2243
  %2300 = vst [vmem:[#allocation2 + $0x18] sm:$0xff] %v2246
  %2301 = vst [vmem:[#allocation2 + $0x20] sm:$0xff] %v2251
  %2302 = vst [vmem:[#allocation2 + $0x28] sm:$0xff] %v2254
  %2303 = vst [vmem:[#allocation2 + $0x30] sm:$0xff] %v2259
  %2304 = vst [vmem:[#allocation2 + $0x38] sm:$0xff] %v2262
  %2305 = vst [vmem:[#allocation2 + $0x40] sm:$0xff] %v2267
  %2306 = vst [vmem:[#allocation2 + $0x48] sm:$0xff] %v2270
  %2307 = vst [vmem:[#allocation2 + $0x50] sm:$0xff] %v2275
  %2308 = vst [vmem:[#allocation2 + $0x58] sm:$0xff] %v2278
  %2309 = vst [vmem:[#allocation2 + $0x60] sm:$0xff] %v2283
  %2310 = vst [vmem:[#allocation2 + $0x68] sm:$0xff] %v2286
  %2311 = vst [vmem:[#allocation2 + $0x70] sm:$0xff] %v2291
  %2312 = vst [vmem:[#allocation2 + $0x78] sm:$0xff] %v2294
  %v2313 = vld [vmem:[%s7] sm:$0xf]
  %v2314 = vld [vmem:[%s7 + $0x4] sm:$0xf]
  %v2315 = vld [vmem:[%s7 + $0x8] sm:$0xf]
  %v2316 = vld [vmem:[%s7 + $0xc] sm:$0xf]
  %v2317 = vld [vmem:[%s7 + $0x10] sm:$0xf]
  %v2318 = vld [vmem:[%s7 + $0x14] sm:$0xf]
  %v2319 = vld [vmem:[%s7 + $0x18] sm:$0xf]
  %v2320 = vld [vmem:[%s7 + $0x1c] sm:$0xf]
  %v2321 = vld [vmem:[%s10] sm:$0x1]
  %v2323 = vlaneseq
  %v2324 = vshrl.u32 %v2323, 7
  %v2325 = vsub.s32 0, %v2324
  %v2326 = vrot.slane %v2321, %v2325
  %v2336 = vunpack.c.l.b16 %v2313
  %v2337 = vunpack.c.l.b16 %v2314
  %v2338 = vunpack.c.l.b16 %v2315
  %v2339 = vunpack.c.l.b16 %v2316
  %v2340 = vunpack.c.l.b16 %v2317
  %v2341 = vunpack.c.l.b16 %v2318
  %v2342 = vunpack.c.l.b16 %v2319
  %v2343 = vunpack.c.l.b16 %v2320
  %v2344 = vpack.c.b16 %v2337, %v2336
  %v2345 = vpack.c.b16 %v2339, %v2338
  %v2346 = vpack.c.b16 %v2341, %v2340
  %v2347 = vpack.c.b16 %v2343, %v2342
  %2352 = vmatprep.subr.bf16.mxu0 0
  %2353 = vmatpush1.bf16.msra.mxu0 0
  %2354 = vmatprep.subr.bf16.mxu0 0
  %2355 = vmatpush1.bf16.msra.mxu0 0
  %2356 = vmatprep.subr.bf16.mxu0 0
  %2357 = vmatpush1.bf16.msra.mxu0 0
  %2358 = vmatprep.subr.bf16.mxu0 0
  %2359 = vmatpush1.bf16.msra.mxu0 0
  %2360 = vmatprep.subr.bf16.mxu0 0
  %2361 = vmatpush1.bf16.msra.mxu0 %v2347
  %2362 = vmatprep.subr.bf16.mxu0 0
  %2363 = vmatpush1.bf16.msra.mxu0 %v2346
  %2364 = vmatprep.subr.bf16.mxu0 0
  %2365 = vmatpush1.bf16.msra.mxu0 %v2345
  %2366 = vmatprep.subr.bf16.mxu0 0
  %2367 = vmatpush1.bf16.msra.mxu0 %v2344
  %2368 = vmatprep.subr.bf16.mxu0 0
  %2369 = vmatpush2.bf16.msra.mxu0 0
  %2370 = vmatprep.subr.bf16.mxu0 0
  %2371 = vmatpush2.bf16.msra.mxu0 0
  %2372 = vmatprep.subr.bf16.mxu0 0
  %2373 = vmatpush2.bf16.msra.mxu0 0
  %2374 = vmatprep.subr.bf16.mxu0 0
  %2375 = vmatpush2.bf16.msra.mxu0 0
  %2376 = vmatprep.subr.bf16.mxu0 0
  %2377 = vmatpush2.bf16.msra.mxu0 0
  %2378 = vmatprep.subr.bf16.mxu0 0
  %2379 = vmatpush2.bf16.msra.mxu0 0
  %2380 = vmatprep.subr.bf16.mxu0 0
  %2381 = vmatpush2.bf16.msra.mxu0 0
  %2382 = vmatprep.subr.bf16.mxu0 0
  %2383 = vmatpush2.bf16.msra.mxu0 0
  %2384 = vmatprep.mubr.bf16.mxu0 0
  %2385 = vmatmul.mubr.bf16.gmra.mxu0 %v2184
  %v2386 = vpop.f32.mrf.mxu0
  %v2387 = vadd.f32 %v2326, %v2386
  %v2388 = vpop.f32.mrf.mxu0
  %v2389 = vpop.f32.mrf.mxu0
  %v2390 = vadd.f32 %v2326, %v2389
  %v2391 = vpop.f32.mrf.mxu0
  %2392 = vmatprep.mubr.bf16.mxu0 0
  %2393 = vmatmul.mubr.bf16.gmra.mxu0 %v2186
  %v2394 = vpop.f32.mrf.mxu0
  %v2395 = vadd.f32 %v2326, %v2394
  %v2396 = vpop.f32.mrf.mxu0
  %v2397 = vpop.f32.mrf.mxu0
  %v2398 = vadd.f32 %v2326, %v2397
  %v2399 = vpop.f32.mrf.mxu0
  %2400 = vmatprep.mubr.bf16.mxu0 0
  %2401 = vmatmul.mubr.bf16.gmra.mxu0 %v2188
  %v2402 = vpop.f32.mrf.mxu0
  %v2403 = vadd.f32 %v2326, %v2402
  %v2404 = vpop.f32.mrf.mxu0
  %v2405 = vpop.f32.mrf.mxu0
  %v2406 = vadd.f32 %v2326, %v2405
  %v2407 = vpop.f32.mrf.mxu0
  %2408 = vmatprep.mubr.bf16.mxu0 0
  %2409 = vmatmul.mubr.bf16.gmra.mxu0 %v2190
  %v2410 = vpop.f32.mrf.mxu0
  %v2411 = vadd.f32 %v2326, %v2410
  %v2412 = vpop.f32.mrf.mxu0
  %v2413 = vpop.f32.mrf.mxu0
  %v2414 = vadd.f32 %v2326, %v2413
  %v2415 = vpop.f32.mrf.mxu0
  %2416 = vmatprep.mubr.bf16.mxu0 0
  %2417 = vmatmul.mubr.bf16.gmra.mxu0 %v2192
  %v2418 = vpop.f32.mrf.mxu0
  %v2419 = vadd.f32 %v2326, %v2418
  %v2420 = vpop.f32.mrf.mxu0
  %v2421 = vpop.f32.mrf.mxu0
  %v2422 = vadd.f32 %v2326, %v2421
  %v2423 = vpop.f32.mrf.mxu0
  %2424 = vmatprep.mubr.bf16.mxu0 0
  %2425 = vmatmul.mubr.bf16.gmra.mxu0 %v2194
  %v2426 = vpop.f32.mrf.mxu0
  %v2427 = vadd.f32 %v2326, %v2426
  %v2428 = vpop.f32.mrf.mxu0
  %v2429 = vpop.f32.mrf.mxu0
  %v2430 = vadd.f32 %v2326, %v2429
  %v2431 = vpop.f32.mrf.mxu0
  %2432 = vmatprep.mubr.bf16.mxu0 0
  %2433 = vmatmul.mubr.bf16.gmra.mxu0 %v2196
  %v2434 = vpop.f32.mrf.mxu0
  %v2435 = vadd.f32 %v2326, %v2434
  %v2436 = vpop.f32.mrf.mxu0
  %v2437 = vpop.f32.mrf.mxu0
  %v2438 = vadd.f32 %v2326, %v2437
  %v2439 = vpop.f32.mrf.mxu0
  %2440 = vmatprep.mubr.bf16.mxu0 0
  %2441 = vmatmul.mubr.bf16.gmra.mxu0 %v2198
  %v2442 = vpop.f32.mrf.mxu0
  %v2443 = vadd.f32 %v2326, %v2442
  %v2444 = vpop.f32.mrf.mxu0
  %v2445 = vpop.f32.mrf.mxu0
  %v2446 = vadd.f32 %v2326, %v2445
  %v2447 = vpop.f32.mrf.mxu0
  %2448 = vdwg.mxu0
  %2449 = vst [vmem:[#allocation3] sm:$0xff] %v2387
  %2450 = vst [vmem:[#allocation3 + $0x8] sm:$0xff] %v2390
  %2451 = vst [vmem:[#allocation3 + $0x10] sm:$0xff] %v2395
  %2452 = vst [vmem:[#allocation3 + $0x18] sm:$0xff] %v2398
  %2453 = vst [vmem:[#allocation3 + $0x20] sm:$0xff] %v2403
  %2454 = vst [vmem:[#allocation3 + $0x28] sm:$0xff] %v2406
  %2455 = vst [vmem:[#allocation3 + $0x30] sm:$0xff] %v2411
  %2456 = vst [vmem:[#allocation3 + $0x38] sm:$0xff] %v2414
  %2457 = vst [vmem:[#allocation3 + $0x40] sm:$0xff] %v2419
  %2458 = vst [vmem:[#allocation3 + $0x48] sm:$0xff] %v2422
  %2459 = vst [vmem:[#allocation3 + $0x50] sm:$0xff] %v2427
  %2460 = vst [vmem:[#allocation3 + $0x58] sm:$0xff] %v2430
  %2461 = vst [vmem:[#allocation3 + $0x60] sm:$0xff] %v2435
  %2462 = vst [vmem:[#allocation3 + $0x68] sm:$0xff] %v2438
  %2463 = vst [vmem:[#allocation3 + $0x70] sm:$0xff] %v2443
  %2464 = vst [vmem:[#allocation3 + $0x78] sm:$0xff] %v2446
  %v2465 = vld [vmem:[%s8] sm:$0xff]
  %v2466 = vld [vmem:[%s8 + $0x8] sm:$0xff]
  %v2467 = vld [vmem:[%s8 + $0x10] sm:$0xff]
  %v2468 = vld [vmem:[%s8 + $0x18] sm:$0xff]
  %v2469 = vld [vmem:[%s8 + $0x20] sm:$0xff]
  %v2470 = vld [vmem:[%s8 + $0x28] sm:$0xff]
  %v2471 = vld [vmem:[%s8 + $0x30] sm:$0xff]
  %v2472 = vld [vmem:[%s8 + $0x38] sm:$0xff]
  %v2481 = vunpack.c.l.b16 %v2465
  %v2482 = vunpack.c.h.b16 %v2465
  %v2483 = vunpack.c.l.b16 %v2466
  %v2484 = vunpack.c.h.b16 %v2466
  %v2485 = vunpack.c.l.b16 %v2467
  %v2486 = vunpack.c.h.b16 %v2467
  %v2487 = vunpack.c.l.b16 %v2468
  %v2488 = vunpack.c.h.b16 %v2468
  %v2489 = vunpack.c.l.b16 %v2469
  %v2490 = vunpack.c.h.b16 %v2469
  %v2491 = vunpack.c.l.b16 %v2470
  %v2492 = vunpack.c.h.b16 %v2470
  %v2493 = vunpack.c.l.b16 %v2471
  %v2494 = vunpack.c.h.b16 %v2471
  %v2495 = vunpack.c.l.b16 %v2472
  %v2496 = vunpack.c.h.b16 %v2472
  %v2497 = vpack.c.b16 %v2483, %v2481
  %v2498 = vpack.c.b16 %v2484, %v2482
  %v2499 = vpack.c.b16 %v2487, %v2485
  %v2500 = vpack.c.b16 %v2488, %v2486
  %v2501 = vpack.c.b16 %v2491, %v2489
  %v2502 = vpack.c.b16 %v2492, %v2490
  %v2503 = vpack.c.b16 %v2495, %v2493
  %v2504 = vpack.c.b16 %v2496, %v2494
  %2513 = vmatprep.subr.bf16.mxu0 0
  %2514 = vmatpush1.bf16.msra.mxu0 0
  %2515 = vmatprep.subr.bf16.mxu0 0
  %2516 = vmatpush1.bf16.msra.mxu0 0
  %2517 = vmatprep.subr.bf16.mxu0 0
  %2518 = vmatpush1.bf16.msra.mxu0 0
  %2519 = vmatprep.subr.bf16.mxu0 0
  %2520 = vmatpush1.bf16.msra.mxu0 0
  %2521 = vmatprep.subr.bf16.mxu0 %v2504
  %2522 = vmatpush1.bf16.msra.mxu0 %v2503
  %2523 = vmatprep.subr.bf16.mxu0 %v2502
  %2524 = vmatpush1.bf16.msra.mxu0 %v2501
  %2525 = vmatprep.subr.bf16.mxu0 %v2500
  %2526 = vmatpush1.bf16.msra.mxu0 %v2499
  %2527 = vmatprep.subr.bf16.mxu0 %v2498
  %2528 = vmatpush1.bf16.msra.mxu0 %v2497
  %2529 = vmatprep.subr.bf16.mxu0 0
  %2530 = vmatpush2.bf16.msra.mxu0 0
  %2531 = vmatprep.subr.bf16.mxu0 0
  %2532 = vmatpush2.bf16.msra.mxu0 0
  %2533 = vmatprep.subr.bf16.mxu0 0
  %2534 = vmatpush2.bf16.msra.mxu0 0
  %2535 = vmatprep.subr.bf16.mxu0 0
  %2536 = vmatpush2.bf16.msra.mxu0 0
  %2537 = vmatprep.subr.bf16.mxu0 0
  %2538 = vmatpush2.bf16.msra.mxu0 0
  %2539 = vmatprep.subr.bf16.mxu0 0
  %2540 = vmatpush2.bf16.msra.mxu0 0
  %2541 = vmatprep.subr.bf16.mxu0 0
  %2542 = vmatpush2.bf16.msra.mxu0 0
  %2543 = vmatprep.subr.bf16.mxu0 0
  %2544 = vmatpush2.bf16.msra.mxu0 0
  %2545 = vmatprep.mubr.bf16.mxu0 0
  %2546 = vmatmul.mubr.bf16.gmra.mxu0 %v435
  %v2547 = vpop.f32.mrf.mxu0
  %v2548 = vadd.f32 0.0, %v2547
  %v2549 = vpop.f32.mrf.mxu0
  %v2550 = vadd.f32 0.0, %v2549
  %v2551 = vpop.f32.mrf.mxu0
  %v2552 = vadd.f32 0.0, %v2551
  %v2553 = vpop.f32.mrf.mxu0
  %v2554 = vadd.f32 0.0, %v2553
  %2555 = vdwg.mxu0
  %v2556 = vld [vmem:[#allocation2] sm:$0xff]
  %v2557 = vld [vmem:[#allocation2 + $0x8] sm:$0xff]
  %v2558 = vadd.f32 %v2548, %v2556
  %v2559 = vadd.f32 %v2552, %v2557
  %v2560 = vld [vmem:[#allocation3 + $0x70] sm:$0xff]
  %v2561 = vld [vmem:[#allocation3 + $0x78] sm:$0xff]
  %v2562 = vadd.f32 %v2550, %v2560
  %v2563 = vadd.f32 %v2554, %v2561
  %v2564 = vxor.u32 %v2558, 2147483648
  %v2565 = vxor.u32 %v2559, 2147483648
  %v2566 = vmul.f32 %v2564, 1.442695
  %v2567 = vpow.pop %v2566
  %v2568 = vmul.f32 %v2565, 1.442695
  %v2569 = vpow.pop %v2568
  %v2570 = vadd.f32 %v2567, 1.0
  %v2571 = vadd.f32 %v2569, 1.0
  %v2572 = vrcp.pop %v2570
  %v2573 = vmul.f32 1.0, %v2572
  %v2574 = vrcp.pop %v2571
  %v2575 = vmul.f32 1.0, %v2574
  %v2576 = vtanh.pop %v2558
  %v2577 = vtanh.pop %v2559
  %v2578 = vxor.u32 %v2562, 2147483648
  %v2579 = vxor.u32 %v2563, 2147483648
  %v2580 = vmul.f32 %v2578, 1.442695
  %v2581 = vpow.pop %v2580
  %v2582 = vmul.f32 %v2579, 1.442695
  %v2583 = vpow.pop %v2582
  %v2584 = vadd.f32 %v2581, 1.0
  %v2585 = vadd.f32 %v2583, 1.0
  %v2586 = vrcp.pop %v2584
  %v2587 = vmul.f32 1.0, %v2586
  %v2588 = vrcp.pop %v2585
  %v2589 = vmul.f32 1.0, %v2588
  %v2590 = vtanh.pop %v2562
  %v2591 = vtanh.pop %v2563
  %v2592 = vmul.f32 %v2573, 0.0
  %v2593 = vmul.f32 %v2575, 0.0
  %2596 = vrot.lane.b32.xlu0 %v2576, 64
  %v2597 = vpop.permute.xlu0 %2596
  %2598 = vrot.lane.b32.xlu0 %v2577, 64
  %v2599 = vpop.permute.xlu0 %2598
  %v2602 = vmul.f32 %v2573, %v2597
  %v2603 = vmul.f32 %v2575, %v2599
  %2606 = vrot.lane.b32.xlu0 %v2602, 32
  %v2607 = vpop.permute.xlu0 %2606
  %2608 = vrot.lane.b32.xlu0 %v2603, 32
  %v2609 = vpop.permute.xlu0 %2608
  %v2612 = vadd.f32 %v2592, %v2607
  %v2613 = vadd.f32 %v2593, %v2609
  %v2614 = vmul.f32 %v2587, 0.0
  %v2615 = vmul.f32 %v2589, 0.0
  %2618 = vrot.lane.b32.xlu0 %v2590, 64
  %v2619 = vpop.permute.xlu0 %2618
  %2620 = vrot.lane.b32.xlu0 %v2591, 64
  %v2621 = vpop.permute.xlu0 %2620
  %v2624 = vmul.f32 %v2587, %v2619
  %v2625 = vmul.f32 %v2589, %v2621
  %2628 = vrot.lane.b32.xlu0 %v2624, 32
  %v2629 = vpop.permute.xlu0 %2628
  %2630 = vrot.lane.b32.xlu0 %v2625, 32
  %v2631 = vpop.permute.xlu0 %2630
  %v2634 = vadd.f32 %v2614, %v2629
  %v2635 = vadd.f32 %v2615, %v2631
  %v2636 = vtanh.pop %v2612
  %v2637 = vtanh.pop %v2613
  %2640 = vrot.lane.b32.xlu0 %v2636, 64
  %v2641 = vpop.permute.xlu0 %2640
  %2642 = vrot.lane.b32.xlu0 %v2637, 64
  %v2643 = vpop.permute.xlu0 %2642
  %v2646 = vmul.f32 %v2573, %v2641
  %v2647 = vmul.f32 %v2575, %v2643
  %v2648 = vtanh.pop %v2634
  %v2649 = vtanh.pop %v2635
  %2652 = vrot.lane.b32.xlu0 %v2648, 64
  %v2653 = vpop.permute.xlu0 %2652
  %2654 = vrot.lane.b32.xlu0 %v2649, 64
  %v2655 = vpop.permute.xlu0 %2654
  %v2658 = vmul.f32 %v2587, %v2653
  %v2659 = vmul.f32 %v2589, %v2655
  %2662 = vrot.lane.b32.xlu0 %v2646, 32
  %v2663 = vpop.permute.xlu0 %2662
  %2664 = vrot.lane.b32.xlu0 %v2647, 32
  %v2665 = vpop.permute.xlu0 %2664
  %2670 = vrot.lane.b32.xlu0 %v2658, 64
  %v2671 = vpop.permute.xlu0 %2670
  %2672 = vrot.lane.b32.xlu0 %v2659, 64
  %v2673 = vpop.permute.xlu0 %2672
  %v2676 = vsel %vm600, %v2663, %v2671
  %v2677 = vsel %vm600, %v2665, %v2673
  %v2678 = vpack.c.bf16 %v2677, %v2676
  %v2680 = vsel %vm433, %v2678, 0
  %2682 = vmatprep.subr.bf16.mxu0 0
  %2683 = vmatpush1.bf16.msra.mxu0 0
  %2684 = vmatprep.subr.bf16.mxu0 0
  %2685 = vmatpush1.bf16.msra.mxu0 0
  %2686 = vmatprep.subr.bf16.mxu0 0
  %2687 = vmatpush1.bf16.msra.mxu0 0
  %2688 = vmatprep.subr.bf16.mxu0 0
  %2689 = vmatpush1.bf16.msra.mxu0 0
  %2690 = vmatprep.subr.bf16.mxu0 %v2504
  %2691 = vmatpush1.bf16.msra.mxu0 %v2503
  %2692 = vmatprep.subr.bf16.mxu0 %v2502
  %2693 = vmatpush1.bf16.msra.mxu0 %v2501
  %2694 = vmatprep.subr.bf16.mxu0 %v2500
  %2695 = vmatpush1.bf16.msra.mxu0 %v2499
  %2696 = vmatprep.subr.bf16.mxu0 %v2498
  %2697 = vmatpush1.bf16.msra.mxu0 %v2497
  %2698 = vmatprep.subr.bf16.mxu0 0
  %2699 = vmatpush2.bf16.msra.mxu0 0
  %2700 = vmatprep.subr.bf16.mxu0 0
  %2701 = vmatpush2.bf16.msra.mxu0 0
  %2702 = vmatprep.subr.bf16.mxu0 0
  %2703 = vmatpush2.bf16.msra.mxu0 0
  %2704 = vmatprep.subr.bf16.mxu0 0
  %2705 = vmatpush2.bf16.msra.mxu0 0
  %2706 = vmatprep.subr.bf16.mxu0 0
  %2707 = vmatpush2.bf16.msra.mxu0 0
  %2708 = vmatprep.subr.bf16.mxu0 0
  %2709 = vmatpush2.bf16.msra.mxu0 0
  %2710 = vmatprep.subr.bf16.mxu0 0
  %2711 = vmatpush2.bf16.msra.mxu0 0
  %2712 = vmatprep.subr.bf16.mxu0 0
  %2713 = vmatpush2.bf16.msra.mxu0 0
  %2714 = vmatprep.mubr.bf16.mxu0 0
  %2715 = vmatmul.mubr.bf16.gmra.mxu0 %v2680
  %v2716 = vpop.f32.mrf.mxu0
  %v2717 = vadd.f32 0.0, %v2716
  %v2718 = vpop.f32.mrf.mxu0
  %v2719 = vadd.f32 0.0, %v2718
  %v2720 = vpop.f32.mrf.mxu0
  %v2721 = vadd.f32 0.0, %v2720
  %v2722 = vpop.f32.mrf.mxu0
  %v2723 = vadd.f32 0.0, %v2722
  %2724 = vdwg.mxu0
  %v2725 = vld [vmem:[#allocation2 + $0x10] sm:$0xff]
  %v2726 = vld [vmem:[#allocation2 + $0x18] sm:$0xff]
  %v2727 = vadd.f32 %v2717, %v2725
  %v2728 = vadd.f32 %v2721, %v2726
  %v2729 = vld [vmem:[#allocation3 + $0x60] sm:$0xff]
  %v2730 = vld [vmem:[#allocation3 + $0x68] sm:$0xff]
  %v2731 = vadd.f32 %v2719, %v2729
  %v2732 = vadd.f32 %v2723, %v2730
  %v2733 = vxor.u32 %v2727, 2147483648
  %v2734 = vxor.u32 %v2728, 2147483648
  %v2735 = vmul.f32 %v2733, 1.442695
  %v2736 = vpow.pop %v2735
  %v2737 = vmul.f32 %v2734, 1.442695
  %v2738 = vpow.pop %v2737
  %v2739 = vadd.f32 %v2736, 1.0
  %v2740 = vadd.f32 %v2738, 1.0
  %v2741 = vrcp.pop %v2739
  %v2742 = vmul.f32 1.0, %v2741
  %v2743 = vrcp.pop %v2740
  %v2744 = vmul.f32 1.0, %v2743
  %v2745 = vtanh.pop %v2727
  %v2746 = vtanh.pop %v2728
  %v2747 = vxor.u32 %v2731, 2147483648
  %v2748 = vxor.u32 %v2732, 2147483648
  %v2749 = vmul.f32 %v2747, 1.442695
  %v2750 = vpow.pop %v2749
  %v2751 = vmul.f32 %v2748, 1.442695
  %v2752 = vpow.pop %v2751
  %v2753 = vadd.f32 %v2750, 1.0
  %v2754 = vadd.f32 %v2752, 1.0
  %v2755 = vrcp.pop %v2753
  %v2756 = vmul.f32 1.0, %v2755
  %v2757 = vrcp.pop %v2754
  %v2758 = vmul.f32 1.0, %v2757
  %v2759 = vtanh.pop %v2731
  %v2760 = vtanh.pop %v2732
  %v2761 = vmul.f32 %v2742, %v2612
  %v2762 = vmul.f32 %v2744, %v2613
  %2765 = vrot.lane.b32.xlu0 %v2745, 64
  %v2766 = vpop.permute.xlu0 %2765
  %2767 = vrot.lane.b32.xlu0 %v2746, 64
  %v2768 = vpop.permute.xlu0 %2767
  %v2771 = vmul.f32 %v2742, %v2766
  %v2772 = vmul.f32 %v2744, %v2768
  %2775 = vrot.lane.b32.xlu0 %v2771, 32
  %v2776 = vpop.permute.xlu0 %2775
  %2777 = vrot.lane.b32.xlu0 %v2772, 32
  %v2778 = vpop.permute.xlu0 %2777
  %v2781 = vadd.f32 %v2761, %v2776
  %v2782 = vadd.f32 %v2762, %v2778
  %v2783 = vmul.f32 %v2756, %v2634
  %v2784 = vmul.f32 %v2758, %v2635
  %2787 = vrot.lane.b32.xlu0 %v2759, 64
  %v2788 = vpop.permute.xlu0 %2787
  %2789 = vrot.lane.b32.xlu0 %v2760, 64
  %v2790 = vpop.permute.xlu0 %2789
  %v2793 = vmul.f32 %v2756, %v2788
  %v2794 = vmul.f32 %v2758, %v2790
  %2797 = vrot.lane.b32.xlu0 %v2793, 32
  %v2798 = vpop.permute.xlu0 %2797
  %2799 = vrot.lane.b32.xlu0 %v2794, 32
  %v2800 = vpop.permute.xlu0 %2799
  %v2803 = vadd.f32 %v2783, %v2798
  %v2804 = vadd.f32 %v2784, %v2800
  %v2805 = vtanh.pop %v2781
  %v2806 = vtanh.pop %v2782
  %2809 = vrot.lane.b32.xlu0 %v2805, 64
  %v2810 = vpop.permute.xlu0 %2809
  %2811 = vrot.lane.b32.xlu0 %v2806, 64
  %v2812 = vpop.permute.xlu0 %2811
  %v2815 = vmul.f32 %v2742, %v2810
  %v2816 = vmul.f32 %v2744, %v2812
  %v2817 = vtanh.pop %v2803
  %v2818 = vtanh.pop %v2804
  %2821 = vrot.lane.b32.xlu0 %v2817, 64
  %v2822 = vpop.permute.xlu0 %2821
  %2823 = vrot.lane.b32.xlu0 %v2818, 64
  %v2824 = vpop.permute.xlu0 %2823
  %v2827 = vmul.f32 %v2756, %v2822
  %v2828 = vmul.f32 %v2758, %v2824
  %2831 = vrot.lane.b32.xlu0 %v2815, 32
  %v2832 = vpop.permute.xlu0 %2831
  %2833 = vrot.lane.b32.xlu0 %v2816, 32
  %v2834 = vpop.permute.xlu0 %2833
  %2839 = vrot.lane.b32.xlu0 %v2827, 64
  %v2840 = vpop.permute.xlu0 %2839
  %2841 = vrot.lane.b32.xlu0 %v2828, 64
  %v2842 = vpop.permute.xlu0 %2841
  %v2845 = vsel %vm600, %v2832, %v2840
  %v2846 = vsel %vm600, %v2834, %v2842
  %v2847 = vpack.c.bf16 %v2846, %v2845
  %v2849 = vsel %vm433, %v2847, 0
  %2851 = vmatprep.subr.bf16.mxu0 0
  %2852 = vmatpush1.bf16.msra.mxu0 0
  %2853 = vmatprep.subr.bf16.mxu0 0
  %2854 = vmatpush1.bf16.msra.mxu0 0
  %2855 = vmatprep.subr.bf16.mxu0 0
  %2856 = vmatpush1.bf16.msra.mxu0 0
  %2857 = vmatprep.subr.bf16.mxu0 0
  %2858 = vmatpush1.bf16.msra.mxu0 0
  %2859 = vmatprep.subr.bf16.mxu0 %v2504
  %2860 = vmatpush1.bf16.msra.mxu0 %v2503
  %2861 = vmatprep.subr.bf16.mxu0 %v2502
  %2862 = vmatpush1.bf16.msra.mxu0 %v2501
  %2863 = vmatprep.subr.bf16.mxu0 %v2500
  %2864 = vmatpush1.bf16.msra.mxu0 %v2499
  %2865 = vmatprep.subr.bf16.mxu0 %v2498
  %2866 = vmatpush1.bf16.msra.mxu0 %v2497
  %2867 = vmatprep.subr.bf16.mxu0 0
  %2868 = vmatpush2.bf16.msra.mxu0 0
  %2869 = vmatprep.subr.bf16.mxu0 0
  %2870 = vmatpush2.bf16.msra.mxu0 0
  %2871 = vmatprep.subr.bf16.mxu0 0
  %2872 = vmatpush2.bf16.msra.mxu0 0
  %2873 = vmatprep.subr.bf16.mxu0 0
  %2874 = vmatpush2.bf16.msra.mxu0 0
  %2875 = vmatprep.subr.bf16.mxu0 0
  %2876 = vmatpush2.bf16.msra.mxu0 0
  %2877 = vmatprep.subr.bf16.mxu0 0
  %2878 = vmatpush2.bf16.msra.mxu0 0
  %2879 = vmatprep.subr.bf16.mxu0 0
  %2880 = vmatpush2.bf16.msra.mxu0 0
  %2881 = vmatprep.subr.bf16.mxu0 0
  %2882 = vmatpush2.bf16.msra.mxu0 0
  %2883 = vmatprep.mubr.bf16.mxu0 0
  %2884 = vmatmul.mubr.bf16.gmra.mxu0 %v2849
  %v2885 = vpop.f32.mrf.mxu0
  %v2886 = vadd.f32 0.0, %v2885
  %v2887 = vpop.f32.mrf.mxu0
  %v2888 = vadd.f32 0.0, %v2887
  %v2889 = vpop.f32.mrf.mxu0
  %v2890 = vadd.f32 0.0, %v2889
  %v2891 = vpop.f32.mrf.mxu0
  %v2892 = vadd.f32 0.0, %v2891
  %2893 = vdwg.mxu0
  %v2894 = vld [vmem:[#allocation2 + $0x20] sm:$0xff]
  %v2895 = vld [vmem:[#allocation2 + $0x28] sm:$0xff]
  %v2896 = vadd.f32 %v2886, %v2894
  %v2897 = vadd.f32 %v2890, %v2895
  %v2898 = vld [vmem:[#allocation3 + $0x50] sm:$0xff]
  %v2899 = vld [vmem:[#allocation3 + $0x58] sm:$0xff]
  %v2900 = vadd.f32 %v2888, %v2898
  %v2901 = vadd.f32 %v2892, %v2899
  %v2902 = vxor.u32 %v2896, 2147483648
  %v2903 = vxor.u32 %v2897, 2147483648
  %v2904 = vmul.f32 %v2902, 1.442695
  %v2905 = vpow.pop %v2904
  %v2906 = vmul.f32 %v2903, 1.442695
  %v2907 = vpow.pop %v2906
  %v2908 = vadd.f32 %v2905, 1.0
  %v2909 = vadd.f32 %v2907, 1.0
  %v2910 = vrcp.pop %v2908
  %v2911 = vmul.f32 1.0, %v2910
  %v2912 = vrcp.pop %v2909
  %v2913 = vmul.f32 1.0, %v2912
  %v2914 = vtanh.pop %v2896
  %v2915 = vtanh.pop %v2897
  %v2916 = vxor.u32 %v2900, 2147483648
  %v2917 = vxor.u32 %v2901, 2147483648
  %v2918 = vmul.f32 %v2916, 1.442695
  %v2919 = vpow.pop %v2918
  %v2920 = vmul.f32 %v2917, 1.442695
  %v2921 = vpow.pop %v2920
  %v2922 = vadd.f32 %v2919, 1.0
  %v2923 = vadd.f32 %v2921, 1.0
  %v2924 = vrcp.pop %v2922
  %v2925 = vmul.f32 1.0, %v2924
  %v2926 = vrcp.pop %v2923
  %v2927 = vmul.f32 1.0, %v2926
  %v2928 = vtanh.pop %v2900
  %v2929 = vtanh.pop %v2901
  %v2930 = vmul.f32 %v2911, %v2781
  %v2931 = vmul.f32 %v2913, %v2782
  %2934 = vrot.lane.b32.xlu0 %v2914, 64
  %v2935 = vpop.permute.xlu0 %2934
  %2936 = vrot.lane.b32.xlu0 %v2915, 64
  %v2937 = vpop.permute.xlu0 %2936
  %v2940 = vmul.f32 %v2911, %v2935
  %v2941 = vmul.f32 %v2913, %v2937
  %2944 = vrot.lane.b32.xlu0 %v2940, 32
  %v2945 = vpop.permute.xlu0 %2944
  %2946 = vrot.lane.b32.xlu0 %v2941, 32
  %v2947 = vpop.permute.xlu0 %2946
  %v2950 = vadd.f32 %v2930, %v2945
  %v2951 = vadd.f32 %v2931, %v2947
  %v2952 = vmul.f32 %v2925, %v2803
  %v2953 = vmul.f32 %v2927, %v2804
  %2956 = vrot.lane.b32.xlu0 %v2928, 64
  %v2957 = vpop.permute.xlu0 %2956
  %2958 = vrot.lane.b32.xlu0 %v2929, 64
  %v2959 = vpop.permute.xlu0 %2958
  %v2962 = vmul.f32 %v2925, %v2957
  %v2963 = vmul.f32 %v2927, %v2959
  %2966 = vrot.lane.b32.xlu0 %v2962, 32
  %v2967 = vpop.permute.xlu0 %2966
  %2968 = vrot.lane.b32.xlu0 %v2963, 32
  %v2969 = vpop.permute.xlu0 %2968
  %v2972 = vadd.f32 %v2952, %v2967
  %v2973 = vadd.f32 %v2953, %v2969
  %v2974 = vtanh.pop %v2950
  %v2975 = vtanh.pop %v2951
  %2978 = vrot.lane.b32.xlu0 %v2974, 64
  %v2979 = vpop.permute.xlu0 %2978
  %2980 = vrot.lane.b32.xlu0 %v2975, 64
  %v2981 = vpop.permute.xlu0 %2980
  %v2984 = vmul.f32 %v2911, %v2979
  %v2985 = vmul.f32 %v2913, %v2981
  %v2986 = vtanh.pop %v2972
  %v2987 = vtanh.pop %v2973
  %2990 = vrot.lane.b32.xlu0 %v2986, 64
  %v2991 = vpop.permute.xlu0 %2990
  %2992 = vrot.lane.b32.xlu0 %v2987, 64
  %v2993 = vpop.permute.xlu0 %2992
  %v2996 = vmul.f32 %v2925, %v2991
  %v2997 = vmul.f32 %v2927, %v2993
  %3000 = vrot.lane.b32.xlu0 %v2984, 32
  %v3001 = vpop.permute.xlu0 %3000
  %3002 = vrot.lane.b32.xlu0 %v2985, 32
  %v3003 = vpop.permute.xlu0 %3002
  %3008 = vrot.lane.b32.xlu0 %v2996, 64
  %v3009 = vpop.permute.xlu0 %3008
  %3010 = vrot.lane.b32.xlu0 %v2997, 64
  %v3011 = vpop.permute.xlu0 %3010
  %v3014 = vsel %vm600, %v3001, %v3009
  %v3015 = vsel %vm600, %v3003, %v3011
  %v3016 = vpack.c.bf16 %v3015, %v3014
  %v3018 = vsel %vm433, %v3016, 0
  %3020 = vmatprep.subr.bf16.mxu0 0
  %3021 = vmatpush1.bf16.msra.mxu0 0
  %3022 = vmatprep.subr.bf16.mxu0 0
  %3023 = vmatpush1.bf16.msra.mxu0 0
  %3024 = vmatprep.subr.bf16.mxu0 0
  %3025 = vmatpush1.bf16.msra.mxu0 0
  %3026 = vmatprep.subr.bf16.mxu0 0
  %3027 = vmatpush1.bf16.msra.mxu0 0
  %3028 = vmatprep.subr.bf16.mxu0 %v2504
  %3029 = vmatpush1.bf16.msra.mxu0 %v2503
  %3030 = vmatprep.subr.bf16.mxu0 %v2502
  %3031 = vmatpush1.bf16.msra.mxu0 %v2501
  %3032 = vmatprep.subr.bf16.mxu0 %v2500
  %3033 = vmatpush1.bf16.msra.mxu0 %v2499
  %3034 = vmatprep.subr.bf16.mxu0 %v2498
  %3035 = vmatpush1.bf16.msra.mxu0 %v2497
  %3036 = vmatprep.subr.bf16.mxu0 0
  %3037 = vmatpush2.bf16.msra.mxu0 0
  %3038 = vmatprep.subr.bf16.mxu0 0
  %3039 = vmatpush2.bf16.msra.mxu0 0
  %3040 = vmatprep.subr.bf16.mxu0 0
  %3041 = vmatpush2.bf16.msra.mxu0 0
  %3042 = vmatprep.subr.bf16.mxu0 0
  %3043 = vmatpush2.bf16.msra.mxu0 0
  %3044 = vmatprep.subr.bf16.mxu0 0
  %3045 = vmatpush2.bf16.msra.mxu0 0
  %3046 = vmatprep.subr.bf16.mxu0 0
  %3047 = vmatpush2.bf16.msra.mxu0 0
  %3048 = vmatprep.subr.bf16.mxu0 0
  %3049 = vmatpush2.bf16.msra.mxu0 0
  %3050 = vmatprep.subr.bf16.mxu0 0
  %3051 = vmatpush2.bf16.msra.mxu0 0
  %3052 = vmatprep.mubr.bf16.mxu0 0
  %3053 = vmatmul.mubr.bf16.gmra.mxu0 %v3018
  %v3054 = vpop.f32.mrf.mxu0
  %v3055 = vadd.f32 0.0, %v3054
  %v3056 = vpop.f32.mrf.mxu0
  %v3057 = vadd.f32 0.0, %v3056
  %v3058 = vpop.f32.mrf.mxu0
  %v3059 = vadd.f32 0.0, %v3058
  %v3060 = vpop.f32.mrf.mxu0
  %v3061 = vadd.f32 0.0, %v3060
  %3062 = vdwg.mxu0
  %v3063 = vld [vmem:[#allocation2 + $0x30] sm:$0xff]
  %v3064 = vld [vmem:[#allocation2 + $0x38] sm:$0xff]
  %v3065 = vadd.f32 %v3055, %v3063
  %v3066 = vadd.f32 %v3059, %v3064
  %v3067 = vld [vmem:[#allocation3 + $0x40] sm:$0xff]
  %v3068 = vld [vmem:[#allocation3 + $0x48] sm:$0xff]
  %v3069 = vadd.f32 %v3057, %v3067
  %v3070 = vadd.f32 %v3061, %v3068
  %v3071 = vxor.u32 %v3065, 2147483648
  %v3072 = vxor.u32 %v3066, 2147483648
  %v3073 = vmul.f32 %v3071, 1.442695
  %v3074 = vpow.pop %v3073
  %v3075 = vmul.f32 %v3072, 1.442695
  %v3076 = vpow.pop %v3075
  %v3077 = vadd.f32 %v3074, 1.0
  %v3078 = vadd.f32 %v3076, 1.0
  %v3079 = vrcp.pop %v3077
  %v3080 = vmul.f32 1.0, %v3079
  %v3081 = vrcp.pop %v3078
  %v3082 = vmul.f32 1.0, %v3081
  %v3083 = vtanh.pop %v3065
  %v3084 = vtanh.pop %v3066
  %v3085 = vxor.u32 %v3069, 2147483648
  %v3086 = vxor.u32 %v3070, 2147483648
  %v3087 = vmul.f32 %v3085, 1.442695
  %v3088 = vpow.pop %v3087
  %v3089 = vmul.f32 %v3086, 1.442695
  %v3090 = vpow.pop %v3089
  %v3091 = vadd.f32 %v3088, 1.0
  %v3092 = vadd.f32 %v3090, 1.0
  %v3093 = vrcp.pop %v3091
  %v3094 = vmul.f32 1.0, %v3093
  %v3095 = vrcp.pop %v3092
  %v3096 = vmul.f32 1.0, %v3095
  %v3097 = vtanh.pop %v3069
  %v3098 = vtanh.pop %v3070
  %v3099 = vmul.f32 %v3080, %v2950
  %v3100 = vmul.f32 %v3082, %v2951
  %3103 = vrot.lane.b32.xlu0 %v3083, 64
  %v3104 = vpop.permute.xlu0 %3103
  %3105 = vrot.lane.b32.xlu0 %v3084, 64
  %v3106 = vpop.permute.xlu0 %3105
  %v3109 = vmul.f32 %v3080, %v3104
  %v3110 = vmul.f32 %v3082, %v3106
  %3113 = vrot.lane.b32.xlu0 %v3109, 32
  %v3114 = vpop.permute.xlu0 %3113
  %3115 = vrot.lane.b32.xlu0 %v3110, 32
  %v3116 = vpop.permute.xlu0 %3115
  %v3119 = vadd.f32 %v3099, %v3114
  %v3120 = vadd.f32 %v3100, %v3116
  %v3121 = vmul.f32 %v3094, %v2972
  %v3122 = vmul.f32 %v3096, %v2973
  %3125 = vrot.lane.b32.xlu0 %v3097, 64
  %v3126 = vpop.permute.xlu0 %3125
  %3127 = vrot.lane.b32.xlu0 %v3098, 64
  %v3128 = vpop.permute.xlu0 %3127
  %v3131 = vmul.f32 %v3094, %v3126
  %v3132 = vmul.f32 %v3096, %v3128
  %3135 = vrot.lane.b32.xlu0 %v3131, 32
  %v3136 = vpop.permute.xlu0 %3135
  %3137 = vrot.lane.b32.xlu0 %v3132, 32
  %v3138 = vpop.permute.xlu0 %3137
  %v3141 = vadd.f32 %v3121, %v3136
  %v3142 = vadd.f32 %v3122, %v3138
  %v3143 = vtanh.pop %v3119
  %v3144 = vtanh.pop %v3120
  %3147 = vrot.lane.b32.xlu0 %v3143, 64
  %v3148 = vpop.permute.xlu0 %3147
  %3149 = vrot.lane.b32.xlu0 %v3144, 64
  %v3150 = vpop.permute.xlu0 %3149
  %v3153 = vmul.f32 %v3080, %v3148
  %v3154 = vmul.f32 %v3082, %v3150
  %v3155 = vtanh.pop %v3141
  %v3156 = vtanh.pop %v3142
  %3159 = vrot.lane.b32.xlu0 %v3155, 64
  %v3160 = vpop.permute.xlu0 %3159
  %3161 = vrot.lane.b32.xlu0 %v3156, 64
  %v3162 = vpop.permute.xlu0 %3161
  %v3165 = vmul.f32 %v3094, %v3160
  %v3166 = vmul.f32 %v3096, %v3162
  %3169 = vrot.lane.b32.xlu0 %v3153, 32
  %v3170 = vpop.permute.xlu0 %3169
  %3171 = vrot.lane.b32.xlu0 %v3154, 32
  %v3172 = vpop.permute.xlu0 %3171
  %3177 = vrot.lane.b32.xlu0 %v3165, 64
  %v3178 = vpop.permute.xlu0 %3177
  %3179 = vrot.lane.b32.xlu0 %v3166, 64
  %v3180 = vpop.permute.xlu0 %3179
  %v3183 = vsel %vm600, %v3170, %v3178
  %v3184 = vsel %vm600, %v3172, %v3180
  %v3185 = vpack.c.bf16 %v3184, %v3183
  %v3187 = vsel %vm433, %v3185, 0
  %3189 = vmatprep.subr.bf16.mxu0 0
  %3190 = vmatpush1.bf16.msra.mxu0 0
  %3191 = vmatprep.subr.bf16.mxu0 0
  %3192 = vmatpush1.bf16.msra.mxu0 0
  %3193 = vmatprep.subr.bf16.mxu0 0
  %3194 = vmatpush1.bf16.msra.mxu0 0
  %3195 = vmatprep.subr.bf16.mxu0 0
  %3196 = vmatpush1.bf16.msra.mxu0 0
  %3197 = vmatprep.subr.bf16.mxu0 %v2504
  %3198 = vmatpush1.bf16.msra.mxu0 %v2503
  %3199 = vmatprep.subr.bf16.mxu0 %v2502
  %3200 = vmatpush1.bf16.msra.mxu0 %v2501
  %3201 = vmatprep.subr.bf16.mxu0 %v2500
  %3202 = vmatpush1.bf16.msra.mxu0 %v2499
  %3203 = vmatprep.subr.bf16.mxu0 %v2498
  %3204 = vmatpush1.bf16.msra.mxu0 %v2497
  %3205 = vmatprep.subr.bf16.mxu0 0
  %3206 = vmatpush2.bf16.msra.mxu0 0
  %3207 = vmatprep.subr.bf16.mxu0 0
  %3208 = vmatpush2.bf16.msra.mxu0 0
  %3209 = vmatprep.subr.bf16.mxu0 0
  %3210 = vmatpush2.bf16.msra.mxu0 0
  %3211 = vmatprep.subr.bf16.mxu0 0
  %3212 = vmatpush2.bf16.msra.mxu0 0
  %3213 = vmatprep.subr.bf16.mxu0 0
  %3214 = vmatpush2.bf16.msra.mxu0 0
  %3215 = vmatprep.subr.bf16.mxu0 0
  %3216 = vmatpush2.bf16.msra.mxu0 0
  %3217 = vmatprep.subr.bf16.mxu0 0
  %3218 = vmatpush2.bf16.msra.mxu0 0
  %3219 = vmatprep.subr.bf16.mxu0 0
  %3220 = vmatpush2.bf16.msra.mxu0 0
  %3221 = vmatprep.mubr.bf16.mxu0 0
  %3222 = vmatmul.mubr.bf16.gmra.mxu0 %v3187
  %v3223 = vpop.f32.mrf.mxu0
  %v3224 = vadd.f32 0.0, %v3223
  %v3225 = vpop.f32.mrf.mxu0
  %v3226 = vadd.f32 0.0, %v3225
  %v3227 = vpop.f32.mrf.mxu0
  %v3228 = vadd.f32 0.0, %v3227
  %v3229 = vpop.f32.mrf.mxu0
  %v3230 = vadd.f32 0.0, %v3229
  %3231 = vdwg.mxu0
  %v3232 = vld [vmem:[#allocation2 + $0x40] sm:$0xff]
  %v3233 = vld [vmem:[#allocation2 + $0x48] sm:$0xff]
  %v3234 = vadd.f32 %v3224, %v3232
  %v3235 = vadd.f32 %v3228, %v3233
  %v3236 = vld [vmem:[#allocation3 + $0x30] sm:$0xff]
  %v3237 = vld [vmem:[#allocation3 + $0x38] sm:$0xff]
  %v3238 = vadd.f32 %v3226, %v3236
  %v3239 = vadd.f32 %v3230, %v3237
  %v3240 = vxor.u32 %v3234, 2147483648
  %v3241 = vxor.u32 %v3235, 2147483648
  %v3242 = vmul.f32 %v3240, 1.442695
  %v3243 = vpow.pop %v3242
  %v3244 = vmul.f32 %v3241, 1.442695
  %v3245 = vpow.pop %v3244
  %v3246 = vadd.f32 %v3243, 1.0
  %v3247 = vadd.f32 %v3245, 1.0
  %v3248 = vrcp.pop %v3246
  %v3249 = vmul.f32 1.0, %v3248
  %v3250 = vrcp.pop %v3247
  %v3251 = vmul.f32 1.0, %v3250
  %v3252 = vtanh.pop %v3234
  %v3253 = vtanh.pop %v3235
  %v3254 = vxor.u32 %v3238, 2147483648
  %v3255 = vxor.u32 %v3239, 2147483648
  %v3256 = vmul.f32 %v3254, 1.442695
  %v3257 = vpow.pop %v3256
  %v3258 = vmul.f32 %v3255, 1.442695
  %v3259 = vpow.pop %v3258
  %v3260 = vadd.f32 %v3257, 1.0
  %v3261 = vadd.f32 %v3259, 1.0
  %v3262 = vrcp.pop %v3260
  %v3263 = vmul.f32 1.0, %v3262
  %v3264 = vrcp.pop %v3261
  %v3265 = vmul.f32 1.0, %v3264
  %v3266 = vtanh.pop %v3238
  %v3267 = vtanh.pop %v3239
  %v3268 = vmul.f32 %v3249, %v3119
  %v3269 = vmul.f32 %v3251, %v3120
  %3272 = vrot.lane.b32.xlu0 %v3252, 64
  %v3273 = vpop.permute.xlu0 %3272
  %3274 = vrot.lane.b32.xlu0 %v3253, 64
  %v3275 = vpop.permute.xlu0 %3274
  %v3278 = vmul.f32 %v3249, %v3273
  %v3279 = vmul.f32 %v3251, %v3275
  %3282 = vrot.lane.b32.xlu0 %v3278, 32
  %v3283 = vpop.permute.xlu0 %3282
  %3284 = vrot.lane.b32.xlu0 %v3279, 32
  %v3285 = vpop.permute.xlu0 %3284
  %v3288 = vadd.f32 %v3268, %v3283
  %v3289 = vadd.f32 %v3269, %v3285
  %v3290 = vmul.f32 %v3263, %v3141
  %v3291 = vmul.f32 %v3265, %v3142
  %3294 = vrot.lane.b32.xlu0 %v3266, 64
  %v3295 = vpop.permute.xlu0 %3294
  %3296 = vrot.lane.b32.xlu0 %v3267, 64
  %v3297 = vpop.permute.xlu0 %3296
  %v3300 = vmul.f32 %v3263, %v3295
  %v3301 = vmul.f32 %v3265, %v3297
  %3304 = vrot.lane.b32.xlu0 %v3300, 32
  %v3305 = vpop.permute.xlu0 %3304
  %3306 = vrot.lane.b32.xlu0 %v3301, 32
  %v3307 = vpop.permute.xlu0 %3306
  %v3310 = vadd.f32 %v3290, %v3305
  %v3311 = vadd.f32 %v3291, %v3307
  %v3312 = vtanh.pop %v3288
  %v3313 = vtanh.pop %v3289
  %3316 = vrot.lane.b32.xlu0 %v3312, 64
  %v3317 = vpop.permute.xlu0 %3316
  %3318 = vrot.lane.b32.xlu0 %v3313, 64
  %v3319 = vpop.permute.xlu0 %3318
  %v3322 = vmul.f32 %v3249, %v3317
  %v3323 = vmul.f32 %v3251, %v3319
  %v3324 = vtanh.pop %v3310
  %v3325 = vtanh.pop %v3311
  %3328 = vrot.lane.b32.xlu0 %v3324, 64
  %v3329 = vpop.permute.xlu0 %3328
  %3330 = vrot.lane.b32.xlu0 %v3325, 64
  %v3331 = vpop.permute.xlu0 %3330
  %v3334 = vmul.f32 %v3263, %v3329
  %v3335 = vmul.f32 %v3265, %v3331
  %3338 = vrot.lane.b32.xlu0 %v3322, 32
  %v3339 = vpop.permute.xlu0 %3338
  %3340 = vrot.lane.b32.xlu0 %v3323, 32
  %v3341 = vpop.permute.xlu0 %3340
  %3346 = vrot.lane.b32.xlu0 %v3334, 64
  %v3347 = vpop.permute.xlu0 %3346
  %3348 = vrot.lane.b32.xlu0 %v3335, 64
  %v3349 = vpop.permute.xlu0 %3348
  %v3352 = vsel %vm600, %v3339, %v3347
  %v3353 = vsel %vm600, %v3341, %v3349
  %v3354 = vpack.c.bf16 %v3353, %v3352
  %v3356 = vsel %vm433, %v3354, 0
  %3358 = vmatprep.subr.bf16.mxu0 0
  %3359 = vmatpush1.bf16.msra.mxu0 0
  %3360 = vmatprep.subr.bf16.mxu0 0
  %3361 = vmatpush1.bf16.msra.mxu0 0
  %3362 = vmatprep.subr.bf16.mxu0 0
  %3363 = vmatpush1.bf16.msra.mxu0 0
  %3364 = vmatprep.subr.bf16.mxu0 0
  %3365 = vmatpush1.bf16.msra.mxu0 0
  %3366 = vmatprep.subr.bf16.mxu0 %v2504
  %3367 = vmatpush1.bf16.msra.mxu0 %v2503
  %3368 = vmatprep.subr.bf16.mxu0 %v2502
  %3369 = vmatpush1.bf16.msra.mxu0 %v2501
  %3370 = vmatprep.subr.bf16.mxu0 %v2500
  %3371 = vmatpush1.bf16.msra.mxu0 %v2499
  %3372 = vmatprep.subr.bf16.mxu0 %v2498
  %3373 = vmatpush1.bf16.msra.mxu0 %v2497
  %3374 = vmatprep.subr.bf16.mxu0 0
  %3375 = vmatpush2.bf16.msra.mxu0 0
  %3376 = vmatprep.subr.bf16.mxu0 0
  %3377 = vmatpush2.bf16.msra.mxu0 0
  %3378 = vmatprep.subr.bf16.mxu0 0
  %3379 = vmatpush2.bf16.msra.mxu0 0
  %3380 = vmatprep.subr.bf16.mxu0 0
  %3381 = vmatpush2.bf16.msra.mxu0 0
  %3382 = vmatprep.subr.bf16.mxu0 0
  %3383 = vmatpush2.bf16.msra.mxu0 0
  %3384 = vmatprep.subr.bf16.mxu0 0
  %3385 = vmatpush2.bf16.msra.mxu0 0
  %3386 = vmatprep.subr.bf16.mxu0 0
  %3387 = vmatpush2.bf16.msra.mxu0 0
  %3388 = vmatprep.subr.bf16.mxu0 0
  %3389 = vmatpush2.bf16.msra.mxu0 0
  %3390 = vmatprep.mubr.bf16.mxu0 0
  %3391 = vmatmul.mubr.bf16.gmra.mxu0 %v3356
  %v3392 = vpop.f32.mrf.mxu0
  %v3393 = vadd.f32 0.0, %v3392
  %v3394 = vpop.f32.mrf.mxu0
  %v3395 = vadd.f32 0.0, %v3394
  %v3396 = vpop.f32.mrf.mxu0
  %v3397 = vadd.f32 0.0, %v3396
  %v3398 = vpop.f32.mrf.mxu0
  %v3399 = vadd.f32 0.0, %v3398
  %3400 = vdwg.mxu0
  %v3401 = vld [vmem:[#allocation2 + $0x50] sm:$0xff]
  %v3402 = vld [vmem:[#allocation2 + $0x58] sm:$0xff]
  %v3403 = vadd.f32 %v3393, %v3401
  %v3404 = vadd.f32 %v3397, %v3402
  %v3405 = vld [vmem:[#allocation3 + $0x20] sm:$0xff]
  %v3406 = vld [vmem:[#allocation3 + $0x28] sm:$0xff]
  %v3407 = vadd.f32 %v3395, %v3405
  %v3408 = vadd.f32 %v3399, %v3406
  %v3409 = vxor.u32 %v3403, 2147483648
  %v3410 = vxor.u32 %v3404, 2147483648
  %v3411 = vmul.f32 %v3409, 1.442695
  %v3412 = vpow.pop %v3411
  %v3413 = vmul.f32 %v3410, 1.442695
  %v3414 = vpow.pop %v3413
  %v3415 = vadd.f32 %v3412, 1.0
  %v3416 = vadd.f32 %v3414, 1.0
  %v3417 = vrcp.pop %v3415
  %v3418 = vmul.f32 1.0, %v3417
  %v3419 = vrcp.pop %v3416
  %v3420 = vmul.f32 1.0, %v3419
  %v3421 = vtanh.pop %v3403
  %v3422 = vtanh.pop %v3404
  %v3423 = vxor.u32 %v3407, 2147483648
  %v3424 = vxor.u32 %v3408, 2147483648
  %v3425 = vmul.f32 %v3423, 1.442695
  %v3426 = vpow.pop %v3425
  %v3427 = vmul.f32 %v3424, 1.442695
  %v3428 = vpow.pop %v3427
  %v3429 = vadd.f32 %v3426, 1.0
  %v3430 = vadd.f32 %v3428, 1.0
  %v3431 = vrcp.pop %v3429
  %v3432 = vmul.f32 1.0, %v3431
  %v3433 = vrcp.pop %v3430
  %v3434 = vmul.f32 1.0, %v3433
  %v3435 = vtanh.pop %v3407
  %v3436 = vtanh.pop %v3408
  %v3437 = vmul.f32 %v3418, %v3288
  %v3438 = vmul.f32 %v3420, %v3289
  %3441 = vrot.lane.b32.xlu0 %v3421, 64
  %v3442 = vpop.permute.xlu0 %3441
  %3443 = vrot.lane.b32.xlu0 %v3422, 64
  %v3444 = vpop.permute.xlu0 %3443
  %v3447 = vmul.f32 %v3418, %v3442
  %v3448 = vmul.f32 %v3420, %v3444
  %3451 = vrot.lane.b32.xlu0 %v3447, 32
  %v3452 = vpop.permute.xlu0 %3451
  %3453 = vrot.lane.b32.xlu0 %v3448, 32
  %v3454 = vpop.permute.xlu0 %3453
  %v3457 = vadd.f32 %v3437, %v3452
  %v3458 = vadd.f32 %v3438, %v3454
  %v3459 = vmul.f32 %v3432, %v3310
  %v3460 = vmul.f32 %v3434, %v3311
  %3463 = vrot.lane.b32.xlu0 %v3435, 64
  %v3464 = vpop.permute.xlu0 %3463
  %3465 = vrot.lane.b32.xlu0 %v3436, 64
  %v3466 = vpop.permute.xlu0 %3465
  %v3469 = vmul.f32 %v3432, %v3464
  %v3470 = vmul.f32 %v3434, %v3466
  %3473 = vrot.lane.b32.xlu0 %v3469, 32
  %v3474 = vpop.permute.xlu0 %3473
  %3475 = vrot.lane.b32.xlu0 %v3470, 32
  %v3476 = vpop.permute.xlu0 %3475
  %v3479 = vadd.f32 %v3459, %v3474
  %v3480 = vadd.f32 %v3460, %v3476
  %v3481 = vtanh.pop %v3457
  %v3482 = vtanh.pop %v3458
  %3485 = vrot.lane.b32.xlu0 %v3481, 64
  %v3486 = vpop.permute.xlu0 %3485
  %3487 = vrot.lane.b32.xlu0 %v3482, 64
  %v3488 = vpop.permute.xlu0 %3487
  %v3491 = vmul.f32 %v3418, %v3486
  %v3492 = vmul.f32 %v3420, %v3488
  %v3493 = vtanh.pop %v3479
  %v3494 = vtanh.pop %v3480
  %3497 = vrot.lane.b32.xlu0 %v3493, 64
  %v3498 = vpop.permute.xlu0 %3497
  %3499 = vrot.lane.b32.xlu0 %v3494, 64
  %v3500 = vpop.permute.xlu0 %3499
  %v3503 = vmul.f32 %v3432, %v3498
  %v3504 = vmul.f32 %v3434, %v3500
  %3507 = vrot.lane.b32.xlu0 %v3491, 32
  %v3508 = vpop.permute.xlu0 %3507
  %3509 = vrot.lane.b32.xlu0 %v3492, 32
  %v3510 = vpop.permute.xlu0 %3509
  %3515 = vrot.lane.b32.xlu0 %v3503, 64
  %v3516 = vpop.permute.xlu0 %3515
  %3517 = vrot.lane.b32.xlu0 %v3504, 64
  %v3518 = vpop.permute.xlu0 %3517
  %v3521 = vsel %vm600, %v3508, %v3516
  %v3522 = vsel %vm600, %v3510, %v3518
  %v3523 = vpack.c.bf16 %v3522, %v3521
  %v3525 = vsel %vm433, %v3523, 0
  %3527 = vmatprep.subr.bf16.mxu0 0
  %3528 = vmatpush1.bf16.msra.mxu0 0
  %3529 = vmatprep.subr.bf16.mxu0 0
  %3530 = vmatpush1.bf16.msra.mxu0 0
  %3531 = vmatprep.subr.bf16.mxu0 0
  %3532 = vmatpush1.bf16.msra.mxu0 0
  %3533 = vmatprep.subr.bf16.mxu0 0
  %3534 = vmatpush1.bf16.msra.mxu0 0
  %3535 = vmatprep.subr.bf16.mxu0 %v2504
  %3536 = vmatpush1.bf16.msra.mxu0 %v2503
  %3537 = vmatprep.subr.bf16.mxu0 %v2502
  %3538 = vmatpush1.bf16.msra.mxu0 %v2501
  %3539 = vmatprep.subr.bf16.mxu0 %v2500
  %3540 = vmatpush1.bf16.msra.mxu0 %v2499
  %3541 = vmatprep.subr.bf16.mxu0 %v2498
  %3542 = vmatpush1.bf16.msra.mxu0 %v2497
  %3543 = vmatprep.subr.bf16.mxu0 0
  %3544 = vmatpush2.bf16.msra.mxu0 0
  %3545 = vmatprep.subr.bf16.mxu0 0
  %3546 = vmatpush2.bf16.msra.mxu0 0
  %3547 = vmatprep.subr.bf16.mxu0 0
  %3548 = vmatpush2.bf16.msra.mxu0 0
  %3549 = vmatprep.subr.bf16.mxu0 0
  %3550 = vmatpush2.bf16.msra.mxu0 0
  %3551 = vmatprep.subr.bf16.mxu0 0
  %3552 = vmatpush2.bf16.msra.mxu0 0
  %3553 = vmatprep.subr.bf16.mxu0 0
  %3554 = vmatpush2.bf16.msra.mxu0 0
  %3555 = vmatprep.subr.bf16.mxu0 0
  %3556 = vmatpush2.bf16.msra.mxu0 0
  %3557 = vmatprep.subr.bf16.mxu0 0
  %3558 = vmatpush2.bf16.msra.mxu0 0
  %3559 = vmatprep.mubr.bf16.mxu0 0
  %3560 = vmatmul.mubr.bf16.gmra.mxu0 %v3525
  %v3561 = vpop.f32.mrf.mxu0
  %v3562 = vadd.f32 0.0, %v3561
  %v3563 = vpop.f32.mrf.mxu0
  %v3564 = vadd.f32 0.0, %v3563
  %v3565 = vpop.f32.mrf.mxu0
  %v3566 = vadd.f32 0.0, %v3565
  %v3567 = vpop.f32.mrf.mxu0
  %v3568 = vadd.f32 0.0, %v3567
  %3569 = vdwg.mxu0
  %v3570 = vld [vmem:[#allocation2 + $0x60] sm:$0xff]
  %v3571 = vld [vmem:[#allocation2 + $0x68] sm:$0xff]
  %v3572 = vadd.f32 %v3562, %v3570
  %v3573 = vadd.f32 %v3566, %v3571
  %v3574 = vld [vmem:[#allocation3 + $0x10] sm:$0xff]
  %v3575 = vld [vmem:[#allocation3 + $0x18] sm:$0xff]
  %v3576 = vadd.f32 %v3564, %v3574
  %v3577 = vadd.f32 %v3568, %v3575
  %v3578 = vxor.u32 %v3572, 2147483648
  %v3579 = vxor.u32 %v3573, 2147483648
  %v3580 = vmul.f32 %v3578, 1.442695
  %v3581 = vpow.pop %v3580
  %v3582 = vmul.f32 %v3579, 1.442695
  %v3583 = vpow.pop %v3582
  %v3584 = vadd.f32 %v3581, 1.0
  %v3585 = vadd.f32 %v3583, 1.0
  %v3586 = vrcp.pop %v3584
  %v3587 = vmul.f32 1.0, %v3586
  %v3588 = vrcp.pop %v3585
  %v3589 = vmul.f32 1.0, %v3588
  %v3590 = vtanh.pop %v3572
  %v3591 = vtanh.pop %v3573
  %v3592 = vxor.u32 %v3576, 2147483648
  %v3593 = vxor.u32 %v3577, 2147483648
  %v3594 = vmul.f32 %v3592, 1.442695
  %v3595 = vpow.pop %v3594
  %v3596 = vmul.f32 %v3593, 1.442695
  %v3597 = vpow.pop %v3596
  %v3598 = vadd.f32 %v3595, 1.0
  %v3599 = vadd.f32 %v3597, 1.0
  %v3600 = vrcp.pop %v3598
  %v3601 = vmul.f32 1.0, %v3600
  %v3602 = vrcp.pop %v3599
  %v3603 = vmul.f32 1.0, %v3602
  %v3604 = vtanh.pop %v3576
  %v3605 = vtanh.pop %v3577
  %v3606 = vmul.f32 %v3587, %v3457
  %v3607 = vmul.f32 %v3589, %v3458
  %3610 = vrot.lane.b32.xlu0 %v3590, 64
  %v3611 = vpop.permute.xlu0 %3610
  %3612 = vrot.lane.b32.xlu0 %v3591, 64
  %v3613 = vpop.permute.xlu0 %3612
  %v3616 = vmul.f32 %v3587, %v3611
  %v3617 = vmul.f32 %v3589, %v3613
  %3620 = vrot.lane.b32.xlu0 %v3616, 32
  %v3621 = vpop.permute.xlu0 %3620
  %3622 = vrot.lane.b32.xlu0 %v3617, 32
  %v3623 = vpop.permute.xlu0 %3622
  %v3626 = vadd.f32 %v3606, %v3621
  %v3627 = vadd.f32 %v3607, %v3623
  %v3628 = vmul.f32 %v3601, %v3479
  %v3629 = vmul.f32 %v3603, %v3480
  %3632 = vrot.lane.b32.xlu0 %v3604, 64
  %v3633 = vpop.permute.xlu0 %3632
  %3634 = vrot.lane.b32.xlu0 %v3605, 64
  %v3635 = vpop.permute.xlu0 %3634
  %v3638 = vmul.f32 %v3601, %v3633
  %v3639 = vmul.f32 %v3603, %v3635
  %3642 = vrot.lane.b32.xlu0 %v3638, 32
  %v3643 = vpop.permute.xlu0 %3642
  %3644 = vrot.lane.b32.xlu0 %v3639, 32
  %v3645 = vpop.permute.xlu0 %3644
  %v3648 = vadd.f32 %v3628, %v3643
  %v3649 = vadd.f32 %v3629, %v3645
  %v3650 = vtanh.pop %v3626
  %v3651 = vtanh.pop %v3627
  %3654 = vrot.lane.b32.xlu0 %v3650, 64
  %v3655 = vpop.permute.xlu0 %3654
  %3656 = vrot.lane.b32.xlu0 %v3651, 64
  %v3657 = vpop.permute.xlu0 %3656
  %v3660 = vmul.f32 %v3587, %v3655
  %v3661 = vmul.f32 %v3589, %v3657
  %v3662 = vtanh.pop %v3648
  %v3663 = vtanh.pop %v3649
  %3666 = vrot.lane.b32.xlu0 %v3662, 64
  %v3667 = vpop.permute.xlu0 %3666
  %3668 = vrot.lane.b32.xlu0 %v3663, 64
  %v3669 = vpop.permute.xlu0 %3668
  %v3672 = vmul.f32 %v3601, %v3667
  %v3673 = vmul.f32 %v3603, %v3669
  %3676 = vrot.lane.b32.xlu0 %v3660, 32
  %v3677 = vpop.permute.xlu0 %3676
  %3678 = vrot.lane.b32.xlu0 %v3661, 32
  %v3679 = vpop.permute.xlu0 %3678
  %3684 = vrot.lane.b32.xlu0 %v3672, 64
  %v3685 = vpop.permute.xlu0 %3684
  %3686 = vrot.lane.b32.xlu0 %v3673, 64
  %v3687 = vpop.permute.xlu0 %3686
  %v3690 = vsel %vm600, %v3677, %v3685
  %v3691 = vsel %vm600, %v3679, %v3687
  %v3692 = vpack.c.bf16 %v3691, %v3690
  %v3694 = vsel %vm433, %v3692, 0
  %3696 = vmatprep.subr.bf16.mxu0 0
  %3697 = vmatpush1.bf16.msra.mxu0 0
  %3698 = vmatprep.subr.bf16.mxu0 0
  %3699 = vmatpush1.bf16.msra.mxu0 0
  %3700 = vmatprep.subr.bf16.mxu0 0
  %3701 = vmatpush1.bf16.msra.mxu0 0
  %3702 = vmatprep.subr.bf16.mxu0 0
  %3703 = vmatpush1.bf16.msra.mxu0 0
  %3704 = vmatprep.subr.bf16.mxu0 %v2504
  %3705 = vmatpush1.bf16.msra.mxu0 %v2503
  %3706 = vmatprep.subr.bf16.mxu0 %v2502
  %3707 = vmatpush1.bf16.msra.mxu0 %v2501
  %3708 = vmatprep.subr.bf16.mxu0 %v2500
  %3709 = vmatpush1.bf16.msra.mxu0 %v2499
  %3710 = vmatprep.subr.bf16.mxu0 %v2498
  %3711 = vmatpush1.bf16.msra.mxu0 %v2497
  %3712 = vmatprep.subr.bf16.mxu0 0
  %3713 = vmatpush2.bf16.msra.mxu0 0
  %3714 = vmatprep.subr.bf16.mxu0 0
  %3715 = vmatpush2.bf16.msra.mxu0 0
  %3716 = vmatprep.subr.bf16.mxu0 0
  %3717 = vmatpush2.bf16.msra.mxu0 0
  %3718 = vmatprep.subr.bf16.mxu0 0
  %3719 = vmatpush2.bf16.msra.mxu0 0
  %3720 = vmatprep.subr.bf16.mxu0 0
  %3721 = vmatpush2.bf16.msra.mxu0 0
  %3722 = vmatprep.subr.bf16.mxu0 0
  %3723 = vmatpush2.bf16.msra.mxu0 0
  %3724 = vmatprep.subr.bf16.mxu0 0
  %3725 = vmatpush2.bf16.msra.mxu0 0
  %3726 = vmatprep.subr.bf16.mxu0 0
  %3727 = vmatpush2.bf16.msra.mxu0 0
  %3728 = vmatprep.mubr.bf16.mxu0 0
  %3729 = vmatmul.mubr.bf16.gmra.mxu0 %v3694
  %v3730 = vpop.f32.mrf.mxu0
  %v3731 = vadd.f32 0.0, %v3730
  %v3732 = vpop.f32.mrf.mxu0
  %v3733 = vadd.f32 0.0, %v3732
  %v3734 = vpop.f32.mrf.mxu0
  %v3735 = vadd.f32 0.0, %v3734
  %v3736 = vpop.f32.mrf.mxu0
  %v3737 = vadd.f32 0.0, %v3736
  %3738 = vdwg.mxu0
  %v3739 = vld [vmem:[#allocation2 + $0x70] sm:$0xff]
  %v3740 = vld [vmem:[#allocation2 + $0x78] sm:$0xff]
  %v3741 = vadd.f32 %v3731, %v3739
  %v3742 = vadd.f32 %v3735, %v3740
  %v3743 = vld [vmem:[#allocation3] sm:$0xff]
  %v3744 = vld [vmem:[#allocation3 + $0x8] sm:$0xff]
  %v3745 = vadd.f32 %v3733, %v3743
  %v3746 = vadd.f32 %v3737, %v3744
  %v3747 = vxor.u32 %v3741, 2147483648
  %v3748 = vxor.u32 %v3742, 2147483648
  %v3749 = vmul.f32 %v3747, 1.442695
  %v3750 = vpow.pop %v3749
  %v3751 = vmul.f32 %v3748, 1.442695
  %v3752 = vpow.pop %v3751
  %v3753 = vadd.f32 %v3750, 1.0
  %v3754 = vadd.f32 %v3752, 1.0
  %v3755 = vrcp.pop %v3753
  %v3756 = vmul.f32 1.0, %v3755
  %v3757 = vrcp.pop %v3754
  %v3758 = vmul.f32 1.0, %v3757
  %v3759 = vtanh.pop %v3741
  %v3760 = vtanh.pop %v3742
  %v3761 = vxor.u32 %v3745, 2147483648
  %v3762 = vxor.u32 %v3746, 2147483648
  %v3763 = vmul.f32 %v3761, 1.442695
  %v3764 = vpow.pop %v3763
  %v3765 = vmul.f32 %v3762, 1.442695
  %v3766 = vpow.pop %v3765
  %v3767 = vadd.f32 %v3764, 1.0
  %v3768 = vadd.f32 %v3766, 1.0
  %v3769 = vrcp.pop %v3767
  %v3770 = vmul.f32 1.0, %v3769
  %v3771 = vrcp.pop %v3768
  %v3772 = vmul.f32 1.0, %v3771
  %v3773 = vtanh.pop %v3745
  %v3774 = vtanh.pop %v3746
  %v3775 = vmul.f32 %v3756, %v3626
  %v3776 = vmul.f32 %v3758, %v3627
  %3779 = vrot.lane.b32.xlu0 %v3759, 64
  %v3780 = vpop.permute.xlu0 %3779
  %3781 = vrot.lane.b32.xlu0 %v3760, 64
  %v3782 = vpop.permute.xlu0 %3781
  %v3785 = vmul.f32 %v3756, %v3780
  %v3786 = vmul.f32 %v3758, %v3782
  %3789 = vrot.lane.b32.xlu0 %v3785, 32
  %v3790 = vpop.permute.xlu0 %3789
  %3791 = vrot.lane.b32.xlu0 %v3786, 32
  %v3792 = vpop.permute.xlu0 %3791
  %v3795 = vadd.f32 %v3775, %v3790
  %v3796 = vadd.f32 %v3776, %v3792
  %v3797 = vmul.f32 %v3770, %v3648
  %v3798 = vmul.f32 %v3772, %v3649
  %3801 = vrot.lane.b32.xlu0 %v3773, 64
  %v3802 = vpop.permute.xlu0 %3801
  %3803 = vrot.lane.b32.xlu0 %v3774, 64
  %v3804 = vpop.permute.xlu0 %3803
  %v3807 = vmul.f32 %v3770, %v3802
  %v3808 = vmul.f32 %v3772, %v3804
  %3811 = vrot.lane.b32.xlu0 %v3807, 32
  %v3812 = vpop.permute.xlu0 %3811
  %3813 = vrot.lane.b32.xlu0 %v3808, 32
  %v3814 = vpop.permute.xlu0 %3813
  %v3817 = vadd.f32 %v3797, %v3812
  %v3818 = vadd.f32 %v3798, %v3814
  %v3819 = vtanh.pop %v3795
  %v3820 = vtanh.pop %v3796
  %3823 = vrot.lane.b32.xlu0 %v3819, 64
  %v3824 = vpop.permute.xlu0 %3823
  %3825 = vrot.lane.b32.xlu0 %v3820, 64
  %v3826 = vpop.permute.xlu0 %3825
  %v3829 = vmul.f32 %v3756, %v3824
  %v3830 = vmul.f32 %v3758, %v3826
  %v3831 = vtanh.pop %v3817
  %v3832 = vtanh.pop %v3818
  %3835 = vrot.lane.b32.xlu0 %v3831, 64
  %v3836 = vpop.permute.xlu0 %3835
  %3837 = vrot.lane.b32.xlu0 %v3832, 64
  %v3838 = vpop.permute.xlu0 %3837
  %v3841 = vmul.f32 %v3770, %v3836
  %v3842 = vmul.f32 %v3772, %v3838
  %3845 = vrot.lane.b32.xlu0 %v3829, 32
  %v3846 = vpop.permute.xlu0 %3845
  %3847 = vrot.lane.b32.xlu0 %v3830, 32
  %v3848 = vpop.permute.xlu0 %3847
  %3853 = vrot.lane.b32.xlu0 %v3841, 64
  %v3854 = vpop.permute.xlu0 %3853
  %3855 = vrot.lane.b32.xlu0 %v3842, 64
  %v3856 = vpop.permute.xlu0 %3855
  %v3859 = vsel %vm600, %v3846, %v3854
  %v3860 = vsel %vm600, %v3848, %v3856
  %v3861 = vpack.c.bf16 %v3860, %v3859
  %v3862 = vld [vmem:[%s11] sm:$0xf]
  %v3863 = vld [vmem:[%s11 + $0x4] sm:$0xf]
  %v3864 = vld [vmem:[%s11 + $0x8] sm:$0xf]
  %v3865 = vld [vmem:[%s11 + $0xc] sm:$0xf]
  %v3866 = vld [vmem:[%s11 + $0x10] sm:$0xf]
  %v3867 = vld [vmem:[%s11 + $0x14] sm:$0xf]
  %v3868 = vld [vmem:[%s11 + $0x18] sm:$0xf]
  %v3869 = vld [vmem:[%s11 + $0x1c] sm:$0xf]
  %v3878 = vunpack.c.l.b16 %v3862
  %v3879 = vunpack.c.l.b16 %v3863
  %v3880 = vunpack.c.l.b16 %v3864
  %v3881 = vunpack.c.l.b16 %v3865
  %v3882 = vunpack.c.l.b16 %v3866
  %v3883 = vunpack.c.l.b16 %v3867
  %v3884 = vunpack.c.l.b16 %v3868
  %v3885 = vunpack.c.l.b16 %v3869
  %v3886 = vpack.c.b16 %v3879, %v3878
  %v3887 = vpack.c.b16 %v3881, %v3880
  %v3888 = vpack.c.b16 %v3883, %v3882
  %v3889 = vpack.c.b16 %v3885, %v3884
  %v3895 = vsel %vm433, %v3861, 0
  %3897 = vmatprep.subr.bf16.mxu0 0
  %3898 = vmatpush1.bf16.msra.mxu0 0
  %3899 = vmatprep.subr.bf16.mxu0 0
  %3900 = vmatpush1.bf16.msra.mxu0 0
  %3901 = vmatprep.subr.bf16.mxu0 0
  %3902 = vmatpush1.bf16.msra.mxu0 0
  %3903 = vmatprep.subr.bf16.mxu0 0
  %3904 = vmatpush1.bf16.msra.mxu0 0
  %3905 = vmatprep.subr.bf16.mxu0 0
  %3906 = vmatpush1.bf16.msra.mxu0 %v3889
  %3907 = vmatprep.subr.bf16.mxu0 0
  %3908 = vmatpush1.bf16.msra.mxu0 %v3888
  %3909 = vmatprep.subr.bf16.mxu0 0
  %3910 = vmatpush1.bf16.msra.mxu0 %v3887
  %3911 = vmatprep.subr.bf16.mxu0 0
  %3912 = vmatpush1.bf16.msra.mxu0 %v3886
  %3913 = vmatprep.subr.bf16.mxu0 0
  %3914 = vmatpush2.bf16.msra.mxu0 0
  %3915 = vmatprep.subr.bf16.mxu0 0
  %3916 = vmatpush2.bf16.msra.mxu0 0
  %3917 = vmatprep.subr.bf16.mxu0 0
  %3918 = vmatpush2.bf16.msra.mxu0 0
  %3919 = vmatprep.subr.bf16.mxu0 0
  %3920 = vmatpush2.bf16.msra.mxu0 0
  %3921 = vmatprep.subr.bf16.mxu0 0
  %3922 = vmatpush2.bf16.msra.mxu0 0
  %3923 = vmatprep.subr.bf16.mxu0 0
  %3924 = vmatpush2.bf16.msra.mxu0 0
  %3925 = vmatprep.subr.bf16.mxu0 0
  %3926 = vmatpush2.bf16.msra.mxu0 0
  %3927 = vmatprep.subr.bf16.mxu0 0
  %3928 = vmatpush2.bf16.msra.mxu0 0
  %3929 = vmatprep.mubr.bf16.mxu0 0
  %3930 = vmatmul.mubr.bf16.gmra.mxu0 %v3895
  %v3931 = vpop.f32.mrf.mxu0
  %v3932 = vadd.f32 0.0, %v3931
  %v3933 = vpop.f32.mrf.mxu0
  %v3934 = vpop.f32.mrf.mxu0
  %v3935 = vpop.f32.mrf.mxu0
  %3936 = vdwg.mxu0
  %v3937 = vmax.f32 %v3932, 0.0
  %v3939 = vrot.slane %v3861, 4
  %v3941 = vsel %vm433, %v3939, 0
  %3943 = vmatprep.subr.bf16.mxu0 0
  %3944 = vmatpush1.bf16.msra.mxu0 0
  %3945 = vmatprep.subr.bf16.mxu0 0
  %3946 = vmatpush1.bf16.msra.mxu0 0
  %3947 = vmatprep.subr.bf16.mxu0 0
  %3948 = vmatpush1.bf16.msra.mxu0 0
  %3949 = vmatprep.subr.bf16.mxu0 0
  %3950 = vmatpush1.bf16.msra.mxu0 0
  %3951 = vmatprep.subr.bf16.mxu0 0
  %3952 = vmatpush1.bf16.msra.mxu0 %v3889
  %3953 = vmatprep.subr.bf16.mxu0 0
  %3954 = vmatpush1.bf16.msra.mxu0 %v3888
  %3955 = vmatprep.subr.bf16.mxu0 0
  %3956 = vmatpush1.bf16.msra.mxu0 %v3887
  %3957 = vmatprep.subr.bf16.mxu0 0
  %3958 = vmatpush1.bf16.msra.mxu0 %v3886
  %3959 = vmatprep.subr.bf16.mxu0 0
  %3960 = vmatpush2.bf16.msra.mxu0 0
  %3961 = vmatprep.subr.bf16.mxu0 0
  %3962 = vmatpush2.bf16.msra.mxu0 0
  %3963 = vmatprep.subr.bf16.mxu0 0
  %3964 = vmatpush2.bf16.msra.mxu0 0
  %3965 = vmatprep.subr.bf16.mxu0 0
  %3966 = vmatpush2.bf16.msra.mxu0 0
  %3967 = vmatprep.subr.bf16.mxu0 0
  %3968 = vmatpush2.bf16.msra.mxu0 0
  %3969 = vmatprep.subr.bf16.mxu0 0
  %3970 = vmatpush2.bf16.msra.mxu0 0
  %3971 = vmatprep.subr.bf16.mxu0 0
  %3972 = vmatpush2.bf16.msra.mxu0 0
  %3973 = vmatprep.subr.bf16.mxu0 0
  %3974 = vmatpush2.bf16.msra.mxu0 0
  %3975 = vmatprep.mubr.bf16.mxu0 0
  %3976 = vmatmul.mubr.bf16.gmra.mxu0 %v3941
  %v3977 = vpop.f32.mrf.mxu0
  %v3978 = vadd.f32 0.0, %v3977
  %v3979 = vpop.f32.mrf.mxu0
  %v3980 = vpop.f32.mrf.mxu0
  %v3981 = vpop.f32.mrf.mxu0
  %3982 = vdwg.mxu0
  %v3983 = vmax.f32 %v3978, 0.0
  %v3984 = vsub.f32 %v3937, %v3983
  %v3985 = vpack.c.bf16 %v3984, %v3984
  %v3986 = vld [vmem:[%s12] sm:$0xf]
  %vm3987 = vcmask 64512
  %v3989 = vsel %vm3987, %v3985, 0
  %vm3991 = vcmask 1043456
  %v3993 = vsel %vm3991, %v3986, 0
  %3995 = vmatprep.subr.bf16.mxu0 0
  %3996 = vmatpush1.bf16.msra.mxu0 0
  %3997 = vmatprep.subr.bf16.mxu0 0
  %3998 = vmatpush1.bf16.msra.mxu0 0
  %3999 = vmatprep.subr.bf16.mxu0 0
  %4000 = vmatpush1.bf16.msra.mxu0 0
  %4001 = vmatprep.subr.bf16.mxu0 0
  %4002 = vmatpush1.bf16.msra.mxu0 0
  %4003 = vmatprep.subr.bf16.mxu0 0
  %4004 = vmatpush1.bf16.msra.mxu0 0
  %4005 = vmatprep.subr.bf16.mxu0 0
  %4006 = vmatpush1.bf16.msra.mxu0 0
  %4007 = vmatprep.subr.bf16.mxu0 0
  %4008 = vmatpush1.bf16.msra.mxu0 0
  %4009 = vmatprep.subr.bf16.mxu0 0
  %4010 = vmatpush1.bf16.msra.mxu0 %v3993
  %4011 = vmatprep.subr.bf16.mxu0 0
  %4012 = vmatpush2.bf16.msra.mxu0 0
  %4013 = vmatprep.subr.bf16.mxu0 0
  %4014 = vmatpush2.bf16.msra.mxu0 0
  %4015 = vmatprep.subr.bf16.mxu0 0
  %4016 = vmatpush2.bf16.msra.mxu0 0
  %4017 = vmatprep.subr.bf16.mxu0 0
  %4018 = vmatpush2.bf16.msra.mxu0 0
  %4019 = vmatprep.subr.bf16.mxu0 0
  %4020 = vmatpush2.bf16.msra.mxu0 0
  %4021 = vmatprep.subr.bf16.mxu0 0
  %4022 = vmatpush2.bf16.msra.mxu0 0
  %4023 = vmatprep.subr.bf16.mxu0 0
  %4024 = vmatpush2.bf16.msra.mxu0 0
  %4025 = vmatprep.subr.bf16.mxu0 0
  %4026 = vmatpush2.bf16.msra.mxu0 0
  %4027 = vmatprep.mubr.bf16.mxu0 0
  %4028 = vmatmul.mubr.bf16.gmra.mxu0 %v3989
  %v4029 = vpop.f32.mrf.mxu0
  %v4030 = vadd.f32 0.0, %v4029
  %v4031 = vpop.f32.mrf.mxu0
  %v4032 = vpop.f32.mrf.mxu0
  %v4033 = vpop.f32.mrf.mxu0
  %4034 = vdwg.mxu0
  %v4035 = vmax.f32 %v4030, 0.0
  %v4036 = vpack.c.bf16 %v4035, %v4035
  %v4037 = vld [vmem:[%s13] sm:$0xf]
  %v4038 = vld [vmem:[%s13 + $0x4] sm:$0xf]
  %v4039 = vld [vmem:[%s13 + $0x8] sm:$0xf]
  %v4040 = vld [vmem:[%s13 + $0xc] sm:$0xf]
  %v4041 = vld [vmem:[%s13 + $0x10] sm:$0xf]
  %v4042 = vld [vmem:[%s13 + $0x14] sm:$0xf]
  %v4043 = vld [vmem:[%s13 + $0x18] sm:$0xf]
  %v4044 = vld [vmem:[%s13 + $0x1c] sm:$0xf]
  %v4053 = vunpack.c.l.b16 %v4037
  %v4054 = vunpack.c.l.b16 %v4038
  %v4055 = vunpack.c.l.b16 %v4039
  %v4056 = vunpack.c.l.b16 %v4040
  %v4057 = vunpack.c.l.b16 %v4041
  %v4058 = vunpack.c.l.b16 %v4042
  %v4059 = vunpack.c.l.b16 %v4043
  %v4060 = vunpack.c.l.b16 %v4044
  %v4061 = vpack.c.b16 %v4054, %v4053
  %v4062 = vpack.c.b16 %v4056, %v4055
  %v4063 = vpack.c.b16 %v4058, %v4057
  %v4064 = vpack.c.b16 %v4060, %v4059
  %v4070 = vsel %vm433, %v4036, 0
  %4072 = vmatprep.subr.bf16.mxu0 0
  %4073 = vmatpush1.bf16.msra.mxu0 0
  %4074 = vmatprep.subr.bf16.mxu0 0
  %4075 = vmatpush1.bf16.msra.mxu0 0
  %4076 = vmatprep.subr.bf16.mxu0 0
  %4077 = vmatpush1.bf16.msra.mxu0 0
  %4078 = vmatprep.subr.bf16.mxu0 0
  %4079 = vmatpush1.bf16.msra.mxu0 0
  %4080 = vmatprep.subr.bf16.mxu0 0
  %4081 = vmatpush1.bf16.msra.mxu0 %v4064
  %4082 = vmatprep.subr.bf16.mxu0 0
  %4083 = vmatpush1.bf16.msra.mxu0 %v4063
  %4084 = vmatprep.subr.bf16.mxu0 0
  %4085 = vmatpush1.bf16.msra.mxu0 %v4062
  %4086 = vmatprep.subr.bf16.mxu0 0
  %4087 = vmatpush1.bf16.msra.mxu0 %v4061
  %4088 = vmatprep.subr.bf16.mxu0 0
  %4089 = vmatpush2.bf16.msra.mxu0 0
  %4090 = vmatprep.subr.bf16.mxu0 0
  %4091 = vmatpush2.bf16.msra.mxu0 0
  %4092 = vmatprep.subr.bf16.mxu0 0
  %4093 = vmatpush2.bf16.msra.mxu0 0
  %4094 = vmatprep.subr.bf16.mxu0 0
  %4095 = vmatpush2.bf16.msra.mxu0 0
  %4096 = vmatprep.subr.bf16.mxu0 0
  %4097 = vmatpush2.bf16.msra.mxu0 0
  %4098 = vmatprep.subr.bf16.mxu0 0
  %4099 = vmatpush2.bf16.msra.mxu0 0
  %4100 = vmatprep.subr.bf16.mxu0 0
  %4101 = vmatpush2.bf16.msra.mxu0 0
  %4102 = vmatprep.subr.bf16.mxu0 0
  %4103 = vmatpush2.bf16.msra.mxu0 0
  %4104 = vmatprep.mubr.bf16.mxu0 0
  %4105 = vmatmul.mubr.bf16.gmra.mxu0 %v4070
  %v4106 = vpop.f32.mrf.mxu0
  %v4107 = vadd.f32 0.0, %v4106
  %v4108 = vpop.f32.mrf.mxu0
  %v4109 = vpop.f32.mrf.mxu0
  %v4110 = vpop.f32.mrf.mxu0
  %4111 = vdwg.mxu0
  %v4112 = vmax.f32 %v4107, 0.0
  %vm4113 = vcmask 23552
  %4114 = vst.msk [vmem:[%s14] sm:$0xff] %vm4113, %v4112
  // Predicated region
  $region58: #{model_forward.1} parent=0 // pred_check
    _
  $region59: #{model_forward.1} parent=0 // pred_check_branch
    %4116 = sbr.rel (0) target = $region61
  $region60: #{model_forward.1} parent=0 // pred_region
    _
  $region61: #{model_forward.1} parent=0 // pred_fallthru
    _
  // Predicated region
  $region62: #{model_forward.1} parent=0 // pred_check
    _
  $region63: #{model_forward.1} parent=0 // pred_check_branch
    %4118 = sbr.rel (0) target = $region65
  $region64: #{model_forward.1} parent=0 // pred_region
    _
  $region65: #{model_forward.1} parent=0 // pred_fallthru
    _

</llo_original>
